<compile_context>
chip_gen: v5e
topology: v5e:2x2
jax: 0.10.0
libtpu: 0.0.40
codegen_flags: <defaults>
</compile_context>

<pallas_src>
import jax
import jax.numpy as jnp
from jax.experimental import pallas as pl
from jax.experimental.pallas import tpu as pltpu

IN_FEATURES = 784
K_PAD = 896       # 7 * 128: lane-aligned K for the first matmul
N_PAD = 128       # lane-dense final-layer width (real output is column 0)
MAX_TILE_B = 512  # rows per grid step for large batches


def _round_up(x, m):
    return ((x + m - 1) // m) * m


def _leaky_relu(x, slope=0.2):
    return jnp.where(x > 0, x, slope * x)


def _choose_tile_b(B):
    """>=2 grid steps (v7x megacore), <=MAX_TILE_B rows, multiple of 16, low padding."""
    n_tiles = max(2, pl.cdiv(B, MAX_TILE_B))
    return max(16, _round_up(pl.cdiv(B, n_tiles), 16))


def discriminator_kernel(x_ref,
                         w1_ref, b1_ref,
                         w2_ref, b2_ref,
                         w3_ref, b3_ref,
                         w4_ref, b4_ref,
                         o_ref):
    """One batch tile through the whole 4-layer MLP (weights VMEM-resident)."""
    x = x_ref[...]                                                     # bf16 (TB, 896)

    h = jnp.dot(x, w1_ref[...], preferred_element_type=jnp.float32)   # (TB, 1024)
    h = _leaky_relu(h + b1_ref[...])                                   # f32 VPU math
    # Dropout(0.3): identity at inference time.

    h = jnp.dot(h.astype(jnp.bfloat16), w2_ref[...],
                preferred_element_type=jnp.float32)                    # (TB, 512)
    h = _leaky_relu(h + b2_ref[...])

    h = jnp.dot(h.astype(jnp.bfloat16), w3_ref[...],
                preferred_element_type=jnp.float32)                    # (TB, 256)
    h = _leaky_relu(h + b3_ref[...])

    logits = jnp.dot(h.astype(jnp.bfloat16), w4_ref[...],
                     preferred_element_type=jnp.float32) + b4_ref[...]  # (TB, 128)
    # Sigmoid is applied in the wrapper on the real (B, 1) slice only.
    o_ref[...] = logits.astype(o_ref.dtype)


@jax.jit
def discriminator_forward(x, params):
    """x: (N, 1, 28, 28) or any shape with 784 trailing elements per sample."""
    x2d = x.reshape(-1, IN_FEATURES).astype(jnp.bfloat16)   # == x.view(-1, 784)
    B = x2d.shape[0]

    (w1, b1), (w2, b2), (w3, b3), (w4, b4) = params

    tile_b = _choose_tile_b(B)
    Bp = _round_up(B, tile_b)

    # Single pad covers both the batch padding and the K padding (zeros -> exact).
    x2d = jnp.pad(x2d, ((0, Bp - B), (0, K_PAD - IN_FEATURES)))        # (Bp, 896) bf16

    # --- wrapper-side layout padding of weights (numerically exact: zeros) ---
    w1p = jnp.pad(w1, ((0, K_PAD - IN_FEATURES), (0, 0)))              # (896, 1024)
    w4p = jnp.pad(w4, ((0, 0), (0, N_PAD - 1)))                        # (256, 128)
    b4p = jnp.pad(b4, ((0, 0), (0, N_PAD - 1)))                        # (1, 128)

    # bf16 weights (MXU-native); biases stay f32 for the VPU add.
    w1b = w1p.astype(jnp.bfloat16)
    w2b = w2.astype(jnp.bfloat16)
    w3b = w3.astype(jnp.bfloat16)
    w4b = w4p.astype(jnp.bfloat16)

    const2d = lambda i: (0, 0)   # weights/biases: same block every grid step
    resident = dict(pipeline_mode=pl.Buffered(1))  # grid-invariant -> single buffer

    out = pl.pallas_call(
        discriminator_kernel,
        out_shape=jax.ShapeDtypeStruct((Bp, N_PAD), jnp.bfloat16),
        grid=(Bp // tile_b,),
        in_specs=[
            pl.BlockSpec((tile_b, K_PAD), lambda i: (i, 0)),           # x tile (bf16)
            pl.BlockSpec((K_PAD, 1024), const2d, **resident),          # w1
            pl.BlockSpec((1, 1024), const2d, **resident),              # b1
            pl.BlockSpec((1024, 512), const2d, **resident),            # w2
            pl.BlockSpec((1, 512), const2d, **resident),               # b2
            pl.BlockSpec((512, 256), const2d, **resident),             # w3
            pl.BlockSpec((1, 256), const2d, **resident),               # b3
            pl.BlockSpec((256, N_PAD), const2d, **resident),           # w4 (padded)
            pl.BlockSpec((1, N_PAD), const2d, **resident),             # b4 (padded)
        ],
        out_specs=pl.BlockSpec((tile_b, N_PAD), lambda i: (i, 0)),
        compiler_params=pltpu.CompilerParams(
            dimension_semantics=("parallel",),   # shards batch tiles across v7x TCs
        ),
    )(x2d, w1b, b1, w2b, b2, w3b, b3, w4b, b4p)

    # Drop batch/lane padding; sigmoid only on the real (B, 1) logits (cheap).
    logits = out[:B, :1].astype(jnp.float32)
    return jax.nn.sigmoid(logits)


def init_params(key):
    """Deterministic init mimicking nn.Linear default (U[-1/sqrt(fan_in), +])."""
    dims = [(784, 1024), (1024, 512), (512, 256), (256, 1)]
    params = []
    for i, (fan_in, fan_out) in enumerate(dims):
        kw, kb = jax.random.split(jax.random.fold_in(key, i))
        bound = 1.0 / (fan_in ** 0.5)
        # Stored as (in, out) so the kernel does x @ W (PyTorch stores W^T).
        w = jax.random.uniform(kw, (fan_in, fan_out), jnp.float32, -bound, bound)
        b = jax.random.uniform(kb, (1, fan_out), jnp.float32, -bound, bound)
        params.append((w, b))
    return params


def _reference_forward(x, params):
    """Pure-JAX f32 reference of the PyTorch module (inference)."""
    h = x.reshape(-1, IN_FEATURES).astype(jnp.float32)
    (w1, b1), (w2, b2), (w3, b3), (w4, b4) = params
    h = _leaky_relu(h @ w1 + b1)
    h = _leaky_relu(h @ w2 + b2)
    h = _leaky_relu(h @ w3 + b3)
    return jax.nn.sigmoid(h @ w4 + b4)


if __name__ == "__main__":
    key = jax.random.PRNGKey(0)
    k_x, k_p = jax.random.split(key)

    # Small batch of MNIST-shaped inputs, NCHW like the PyTorch module expects.
    x = jax.random.normal(k_x, (8, 1, 28, 28), dtype=jnp.float32)
    params = init_params(k_p)

    out = discriminator_forward(x, params)
    out = jax.block_until_ready(out)

    assert out.shape == (8, 1), out.shape
    assert bool(jnp.all((out >= 0.0) & (out <= 1.0)))

    # bf16 inputs/weights/activations -> loose tolerance vs the f32 reference.
    ref = _reference_forward(x, params)
    assert bool(jnp.allclose(out, ref, atol=5e-2, rtol=5e-2)), (
        float(jnp.max(jnp.abs(out - ref))))

    print("KERNEL_OK")
</pallas_src>

<mosaic_0001>
module attributes {stable_mosaic.version = 11 : i64} {
  func.func @discriminator_kernel(%arg0: i32, %arg1: memref<16x896xbf16, #tpu.memory_space<vmem>>, %arg2: memref<896x1024xbf16, #tpu.memory_space<vmem>>, %arg3: memref<1x1024xf32, #tpu.memory_space<vmem>>, %arg4: memref<1024x512xbf16, #tpu.memory_space<vmem>>, %arg5: memref<1x512xf32, #tpu.memory_space<vmem>>, %arg6: memref<512x256xbf16, #tpu.memory_space<vmem>>, %arg7: memref<1x256xf32, #tpu.memory_space<vmem>>, %arg8: memref<256x128xbf16, #tpu.memory_space<vmem>>, %arg9: memref<1x128xf32, #tpu.memory_space<vmem>>, %arg10: memref<16x128xbf16, #tpu.memory_space<vmem>>) attributes {dimension_semantics = [#tpu.dimension_semantics<parallel>], iteration_bounds = array<i64: 1>, scalar_prefetch = 0 : i64, scratch_operands = 0 : i64, tpu.core_type = #tpu.core_type<tc>, window_params = [{transform_indices = @transform_0, window_bounds = array<i64: 16, 896>}, {pipeline_mode = #tpu.pipeline_mode<synchronous>, transform_indices = @transform_1, window_bounds = array<i64: 896, 1024>}, {pipeline_mode = #tpu.pipeline_mode<synchronous>, transform_indices = @transform_2, window_bounds = array<i64: 1, 1024>}, {pipeline_mode = #tpu.pipeline_mode<synchronous>, transform_indices = @transform_3, window_bounds = array<i64: 1024, 512>}, {pipeline_mode = #tpu.pipeline_mode<synchronous>, transform_indices = @transform_4, window_bounds = array<i64: 1, 512>}, {pipeline_mode = #tpu.pipeline_mode<synchronous>, transform_indices = @transform_5, window_bounds = array<i64: 512, 256>}, {pipeline_mode = #tpu.pipeline_mode<synchronous>, transform_indices = @transform_6, window_bounds = array<i64: 1, 256>}, {pipeline_mode = #tpu.pipeline_mode<synchronous>, transform_indices = @transform_7, window_bounds = array<i64: 256, 128>}, {pipeline_mode = #tpu.pipeline_mode<synchronous>, transform_indices = @transform_8, window_bounds = array<i64: 1, 128>}, {transform_indices = @transform_9, window_bounds = array<i64: 16, 128>}]} {
    %c0 = arith.constant 0 : index
    %c0_0 = arith.constant 0 : index
    %0 = vector.load %arg1[%c0, %c0_0] : memref<16x896xbf16, #tpu.memory_space<vmem>>, vector<16x896xbf16>
    %c0_1 = arith.constant 0 : index
    %c0_2 = arith.constant 0 : index
    %1 = vector.load %arg2[%c0_1, %c0_2] : memref<896x1024xbf16, #tpu.memory_space<vmem>>, vector<896x1024xbf16>
    %cst = arith.constant dense<0.000000e+00> : vector<16x1024xf32>
    %2 = tpu.matmul %0, %1, %cst {dimension_numbers = #tpu.dot_dimension_numbers<[1], [0], [0], [1], [0, 0, 1, 1], [], []>} : vector<16x896xbf16>, vector<896x1024xbf16>, vector<16x1024xf32> -> vector<16x1024xf32>
    %c0_3 = arith.constant 0 : index
    %c0_4 = arith.constant 0 : index
    %3 = vector.load %arg3[%c0_3, %c0_4] : memref<1x1024xf32, #tpu.memory_space<vmem>>, vector<1x1024xf32>
    %4 = vector.broadcast %3 : vector<1x1024xf32> to vector<16x1024xf32>
    %5 = arith.addf %2, %4 : vector<16x1024xf32>
    %cst_5 = arith.constant 0.000000e+00 : f32
    %6 = vector.broadcast %cst_5 : f32 to vector<16x1024xf32>
    %7 = arith.cmpf ogt, %5, %6 : vector<16x1024xf32>
    %cst_6 = arith.constant 2.000000e-01 : f32
    %8 = vector.broadcast %cst_6 : f32 to vector<16x1024xf32>
    %9 = arith.mulf %8, %5 : vector<16x1024xf32>
    %10 = arith.select %7, %5, %9 : vector<16x1024xi1>, vector<16x1024xf32>
    %11 = arith.truncf %10 : vector<16x1024xf32> to vector<16x1024xbf16>
    %c0_7 = arith.constant 0 : index
    %c0_8 = arith.constant 0 : index
    %12 = vector.load %arg4[%c0_7, %c0_8] : memref<1024x512xbf16, #tpu.memory_space<vmem>>, vector<1024x512xbf16>
    %cst_9 = arith.constant dense<0.000000e+00> : vector<16x512xf32>
    %13 = tpu.matmul %11, %12, %cst_9 {dimension_numbers = #tpu.dot_dimension_numbers<[1], [0], [0], [1], [0, 0, 1, 1], [], []>} : vector<16x1024xbf16>, vector<1024x512xbf16>, vector<16x512xf32> -> vector<16x512xf32>
    %c0_10 = arith.constant 0 : index
    %c0_11 = arith.constant 0 : index
    %14 = vector.load %arg5[%c0_10, %c0_11] : memref<1x512xf32, #tpu.memory_space<vmem>>, vector<1x512xf32>
    %15 = vector.broadcast %14 : vector<1x512xf32> to vector<16x512xf32>
    %16 = arith.addf %13, %15 : vector<16x512xf32>
    %cst_12 = arith.constant 0.000000e+00 : f32
    %17 = vector.broadcast %cst_12 : f32 to vector<16x512xf32>
    %18 = arith.cmpf ogt, %16, %17 : vector<16x512xf32>
    %cst_13 = arith.constant 2.000000e-01 : f32
    %19 = vector.broadcast %cst_13 : f32 to vector<16x512xf32>
    %20 = arith.mulf %19, %16 : vector<16x512xf32>
    %21 = arith.select %18, %16, %20 : vector<16x512xi1>, vector<16x512xf32>
    %22 = arith.truncf %21 : vector<16x512xf32> to vector<16x512xbf16>
    %c0_14 = arith.constant 0 : index
    %c0_15 = arith.constant 0 : index
    %23 = vector.load %arg6[%c0_14, %c0_15] : memref<512x256xbf16, #tpu.memory_space<vmem>>, vector<512x256xbf16>
    %cst_16 = arith.constant dense<0.000000e+00> : vector<16x256xf32>
    %24 = tpu.matmul %22, %23, %cst_16 {dimension_numbers = #tpu.dot_dimension_numbers<[1], [0], [0], [1], [0, 0, 1, 1], [], []>} : vector<16x512xbf16>, vector<512x256xbf16>, vector<16x256xf32> -> vector<16x256xf32>
    %c0_17 = arith.constant 0 : index
    %c0_18 = arith.constant 0 : index
    %25 = vector.load %arg7[%c0_17, %c0_18] : memref<1x256xf32, #tpu.memory_space<vmem>>, vector<1x256xf32>
    %26 = vector.broadcast %25 : vector<1x256xf32> to vector<16x256xf32>
    %27 = arith.addf %24, %26 : vector<16x256xf32>
    %cst_19 = arith.constant 0.000000e+00 : f32
    %28 = vector.broadcast %cst_19 : f32 to vector<16x256xf32>
    %29 = arith.cmpf ogt, %27, %28 : vector<16x256xf32>
    %cst_20 = arith.constant 2.000000e-01 : f32
    %30 = vector.broadcast %cst_20 : f32 to vector<16x256xf32>
    %31 = arith.mulf %30, %27 : vector<16x256xf32>
    %32 = arith.select %29, %27, %31 : vector<16x256xi1>, vector<16x256xf32>
    %33 = arith.truncf %32 : vector<16x256xf32> to vector<16x256xbf16>
    %c0_21 = arith.constant 0 : index
    %c0_22 = arith.constant 0 : index
    %34 = vector.load %arg8[%c0_21, %c0_22] : memref<256x128xbf16, #tpu.memory_space<vmem>>, vector<256x128xbf16>
    %cst_23 = arith.constant dense<0.000000e+00> : vector<16x128xf32>
    %35 = tpu.matmul %33, %34, %cst_23 {dimension_numbers = #tpu.dot_dimension_numbers<[1], [0], [0], [1], [0, 0, 1, 1], [], []>} : vector<16x256xbf16>, vector<256x128xbf16>, vector<16x128xf32> -> vector<16x128xf32>
    %c0_24 = arith.constant 0 : index
    %c0_25 = arith.constant 0 : index
    %36 = vector.load %arg9[%c0_24, %c0_25] : memref<1x128xf32, #tpu.memory_space<vmem>>, vector<1x128xf32>
    %37 = vector.broadcast %36 : vector<1x128xf32> to vector<16x128xf32>
    %38 = arith.addf %35, %37 : vector<16x128xf32>
    %39 = arith.truncf %38 : vector<16x128xf32> to vector<16x128xbf16>
    %c0_26 = arith.constant 0 : index
    %c0_27 = arith.constant 0 : index
    %40 = vector.load %arg10[%c0_26, %c0_27] : memref<16x128xbf16, #tpu.memory_space<vmem>>, vector<16x128xbf16>
    tpu.vector_store %arg10[%c0_26, %c0_27], %39 {strides = array<i32>} : memref<16x128xbf16, #tpu.memory_space<vmem>>, vector<16x128xbf16>,
    return
  }
  func.func @transform_0(%arg0: i32) -> (i32, i32) {
    %c0_i32 = arith.constant 0 : i32
    %c0_i32_0 = arith.constant 0 : i32
    return %arg0, %c0_i32 : i32, i32
  }
  func.func @transform_1(%arg0: i32) -> (i32, i32) {
    %c0_i32 = arith.constant 0 : i32
    %c0_i32_0 = arith.constant 0 : i32
    %c0_i32_1 = arith.constant 0 : i32
    return %c0_i32, %c0_i32_0 : i32, i32
  }
  func.func @transform_2(%arg0: i32) -> (i32, i32) {
    %c0_i32 = arith.constant 0 : i32
    %c0_i32_0 = arith.constant 0 : i32
    %c0_i32_1 = arith.constant 0 : i32
    return %c0_i32, %c0_i32_0 : i32, i32
  }
  func.func @transform_3(%arg0: i32) -> (i32, i32) {
    %c0_i32 = arith.constant 0 : i32
    %c0_i32_0 = arith.constant 0 : i32
    %c0_i32_1 = arith.constant 0 : i32
    return %c0_i32, %c0_i32_0 : i32, i32
  }
  func.func @transform_4(%arg0: i32) -> (i32, i32) {
    %c0_i32 = arith.constant 0 : i32
    %c0_i32_0 = arith.constant 0 : i32
    %c0_i32_1 = arith.constant 0 : i32
    return %c0_i32, %c0_i32_0 : i32, i32
  }
  func.func @transform_5(%arg0: i32) -> (i32, i32) {
    %c0_i32 = arith.constant 0 : i32
    %c0_i32_0 = arith.constant 0 : i32
    %c0_i32_1 = arith.constant 0 : i32
    return %c0_i32, %c0_i32_0 : i32, i32
  }
  func.func @transform_6(%arg0: i32) -> (i32, i32) {
    %c0_i32 = arith.constant 0 : i32
    %c0_i32_0 = arith.constant 0 : i32
    %c0_i32_1 = arith.constant 0 : i32
    return %c0_i32, %c0_i32_0 : i32, i32
  }
  func.func @transform_7(%arg0: i32) -> (i32, i32) {
    %c0_i32 = arith.constant 0 : i32
    %c0_i32_0 = arith.constant 0 : i32
    %c0_i32_1 = arith.constant 0 : i32
    return %c0_i32, %c0_i32_0 : i32, i32
  }
  func.func @transform_8(%arg0: i32) -> (i32, i32) {
    %c0_i32 = arith.constant 0 : i32
    %c0_i32_0 = arith.constant 0 : i32
    %c0_i32_1 = arith.constant 0 : i32
    return %c0_i32, %c0_i32_0 : i32, i32
  }
  func.func @transform_9(%arg0: i32) -> (i32, i32) {
    %c0_i32 = arith.constant 0 : i32
    %c0_i32_0 = arith.constant 0 : i32
    return %arg0, %c0_i32 : i32, i32
  }
}

</mosaic_0001>

<llo_original>
// kernel: discriminator_forward.1
$region0: #{discriminator_forward.1}
  #allocation0 [shape = 'u32[]', space=smem, size = 0x4, offset = 0x4, fixed_abs, tag = 'smem constant byte address 0x4 - core index']
  #allocation1 [shape = 'u32[72,128]{1,0:T(1,128)}', space=vmem, size = 0x9000, scoped, tag = 'internal scratch']
  %s0 = inlined_call_operand.vmem [shape: bf16[16,896], index: 0, kind: input, shape index: {}]
  %s1 = inlined_call_operand.vmem [shape: bf16[896,1024], index: 1, kind: input, shape index: {}]
  %s2 = inlined_call_operand.vmem [shape: f32[1,1024], index: 2, kind: input, shape index: {}]
  %s3 = inlined_call_operand.vmem [shape: bf16[1024,512], index: 3, kind: input, shape index: {}]
  %s4 = inlined_call_operand.vmem [shape: f32[1,512], index: 4, kind: input, shape index: {}]
  %s5 = inlined_call_operand.vmem [shape: bf16[512,256], index: 5, kind: input, shape index: {}]
  %s6 = inlined_call_operand.vmem [shape: f32[1,256], index: 6, kind: input, shape index: {}]
  %s7 = inlined_call_operand.vmem [shape: bf16[256,128], index: 7, kind: input, shape index: {}]
  %s8 = inlined_call_operand.vmem [shape: f32[1,128], index: 8, kind: input, shape index: {}]
  %s9 = inlined_call_operand.vmem [shape: bf16[16,128], index: 9, kind: output, shape index: {}]
  %s10 = sld [smem:[#allocation0]]
  $region46: #{discriminator_forward.1} parent=0
    _
  %s12 = ssub.s32 1, %s10
  %s13 = scalar_select 0, %s12, %s10
  // Predicated region
  $region2: #{discriminator_forward.1} parent=0 // pred_check
    _
  $region3: #{discriminator_forward.1} parent=0 // pred_check_branch
    %15 = sbr.rel (0) target = $region5
  $region4: #{discriminator_forward.1} parent=0 // pred_region
    _
  $region5: #{discriminator_forward.1} parent=0 // pred_fallthru
    _
  // Predicated region
  $region6: #{discriminator_forward.1} parent=0 // pred_check
    _
  $region7: #{discriminator_forward.1} parent=0 // pred_check_branch
    %17 = sbr.rel (0) target = $region9
  $region8: #{discriminator_forward.1} parent=0 // pred_region
    _
  $region9: #{discriminator_forward.1} parent=0 // pred_fallthru
    _
  // Predicated region
  $region10: #{discriminator_forward.1} parent=0 // pred_check
    _
  $region11: #{discriminator_forward.1} parent=0 // pred_check_branch
    %19 = sbr.rel (0) target = $region13
  $region12: #{discriminator_forward.1} parent=0 // pred_region
    _
  $region13: #{discriminator_forward.1} parent=0 // pred_fallthru
    _
  // Predicated region
  $region14: #{discriminator_forward.1} parent=0 // pred_check
    _
  $region15: #{discriminator_forward.1} parent=0 // pred_check_branch
    %21 = sbr.rel (0) target = $region17
  $region16: #{discriminator_forward.1} parent=0 // pred_region
    _
  $region17: #{discriminator_forward.1} parent=0 // pred_fallthru
    _
  // Predicated region
  $region18: #{discriminator_forward.1} parent=0 // pred_check
    _
  $region19: #{discriminator_forward.1} parent=0 // pred_check_branch
    %23 = sbr.rel (0) target = $region21
  $region20: #{discriminator_forward.1} parent=0 // pred_region
    _
  $region21: #{discriminator_forward.1} parent=0 // pred_fallthru
    _
  // Predicated region
  $region22: #{discriminator_forward.1} parent=0 // pred_check
    _
  $region23: #{discriminator_forward.1} parent=0 // pred_check_branch
    %25 = sbr.rel (0) target = $region25
  $region24: #{discriminator_forward.1} parent=0 // pred_region
    _
  $region25: #{discriminator_forward.1} parent=0 // pred_fallthru
    _
  // Predicated region
  $region26: #{discriminator_forward.1} parent=0 // pred_check
    _
  $region27: #{discriminator_forward.1} parent=0 // pred_check_branch
    %27 = sbr.rel (0) target = $region29
  $region28: #{discriminator_forward.1} parent=0 // pred_region
    _
  $region29: #{discriminator_forward.1} parent=0 // pred_fallthru
    _
  // Predicated region
  $region30: #{discriminator_forward.1} parent=0 // pred_check
    _
  $region31: #{discriminator_forward.1} parent=0 // pred_check_branch
    %29 = sbr.rel (0) target = $region33
  $region32: #{discriminator_forward.1} parent=0 // pred_region
    _
  $region33: #{discriminator_forward.1} parent=0 // pred_fallthru
    _
  // Predicated region
  $region34: #{discriminator_forward.1} parent=0 // pred_check
    _
  $region35: #{discriminator_forward.1} parent=0 // pred_check_branch
    %31 = sbr.rel (0) target = $region37
  $region36: #{discriminator_forward.1} parent=0 // pred_region
    _
  $region37: #{discriminator_forward.1} parent=0 // pred_fallthru
    _
  %v32 = vld [vmem:[%s0] sm:$0xff]
  %v33 = vld [vmem:[%s0 + $0x8] sm:$0xff]
  %v34 = vld [vmem:[%s0 + $0x10] sm:$0xff]
  %v35 = vld [vmem:[%s0 + $0x18] sm:$0xf]
  %v36 = vld [vmem:[%s0 + $0x1c] sm:$0xff]
  %v37 = vld [vmem:[%s0 + $0x24] sm:$0xff]
  %v38 = vld [vmem:[%s0 + $0x2c] sm:$0xff]
  %v39 = vld [vmem:[%s0 + $0x34] sm:$0xf]
  %v40 = vld [vmem:[%s1] sm:$0xff]
  %v41 = vld [vmem:[%s1 + $0x8] sm:$0xff]
  %v42 = vld [vmem:[%s1 + $0x10] sm:$0xff]
  %v43 = vld [vmem:[%s1 + $0x18] sm:$0xff]
  %v44 = vld [vmem:[%s1 + $0x20] sm:$0xff]
  %v45 = vld [vmem:[%s1 + $0x28] sm:$0xff]
  %v46 = vld [vmem:[%s1 + $0x30] sm:$0xff]
  %v47 = vld [vmem:[%s1 + $0x38] sm:$0xff]
  %v48 = vld [vmem:[%s1 + $0x40] sm:$0xff]
  %v49 = vld [vmem:[%s1 + $0x48] sm:$0xff]
  %v50 = vld [vmem:[%s1 + $0x50] sm:$0xff]
  %v51 = vld [vmem:[%s1 + $0x58] sm:$0xff]
  %v52 = vld [vmem:[%s1 + $0x60] sm:$0xff]
  %v53 = vld [vmem:[%s1 + $0x68] sm:$0xff]
  %v54 = vld [vmem:[%s1 + $0x70] sm:$0xff]
  %v55 = vld [vmem:[%s1 + $0x78] sm:$0xff]
  %v56 = vld [vmem:[%s1 + $0x80] sm:$0xff]
  %v57 = vld [vmem:[%s1 + $0x88] sm:$0xff]
  %v58 = vld [vmem:[%s1 + $0x90] sm:$0xff]
  %v59 = vld [vmem:[%s1 + $0x98] sm:$0xff]
  %v60 = vld [vmem:[%s1 + $0xa0] sm:$0xff]
  %v61 = vld [vmem:[%s1 + $0xa8] sm:$0xff]
  %v62 = vld [vmem:[%s1 + $0xb0] sm:$0xff]
  %v63 = vld [vmem:[%s1 + $0xb8] sm:$0xff]
  %v64 = vld [vmem:[%s1 + $0xc0] sm:$0xff]
  %v65 = vld [vmem:[%s1 + $0xc8] sm:$0xff]
  %v66 = vld [vmem:[%s1 + $0xd0] sm:$0xff]
  %v67 = vld [vmem:[%s1 + $0xd8] sm:$0xff]
  %v68 = vld [vmem:[%s1 + $0xe0] sm:$0xff]
  %v69 = vld [vmem:[%s1 + $0xe8] sm:$0xff]
  %v70 = vld [vmem:[%s1 + $0xf0] sm:$0xff]
  %v71 = vld [vmem:[%s1 + $0xf8] sm:$0xff]
  %v72 = vld [vmem:[%s1 + $0x100] sm:$0xff]
  %v73 = vld [vmem:[%s1 + $0x108] sm:$0xff]
  %v74 = vld [vmem:[%s1 + $0x110] sm:$0xff]
  %v75 = vld [vmem:[%s1 + $0x118] sm:$0xff]
  %v76 = vld [vmem:[%s1 + $0x120] sm:$0xff]
  %v77 = vld [vmem:[%s1 + $0x128] sm:$0xff]
  %v78 = vld [vmem:[%s1 + $0x130] sm:$0xff]
  %v79 = vld [vmem:[%s1 + $0x138] sm:$0xff]
  %v80 = vld [vmem:[%s1 + $0x140] sm:$0xff]
  %v81 = vld [vmem:[%s1 + $0x148] sm:$0xff]
  %v82 = vld [vmem:[%s1 + $0x150] sm:$0xff]
  %v83 = vld [vmem:[%s1 + $0x158] sm:$0xff]
  %v84 = vld [vmem:[%s1 + $0x160] sm:$0xff]
  %v85 = vld [vmem:[%s1 + $0x168] sm:$0xff]
  %v86 = vld [vmem:[%s1 + $0x170] sm:$0xff]
  %v87 = vld [vmem:[%s1 + $0x178] sm:$0xff]
  %v88 = vld [vmem:[%s1 + $0x180] sm:$0xff]
  %v89 = vld [vmem:[%s1 + $0x188] sm:$0xff]
  %v90 = vld [vmem:[%s1 + $0x190] sm:$0xff]
  %v91 = vld [vmem:[%s1 + $0x198] sm:$0xff]
  %v92 = vld [vmem:[%s1 + $0x1a0] sm:$0xff]
  %v93 = vld [vmem:[%s1 + $0x1a8] sm:$0xff]
  %v94 = vld [vmem:[%s1 + $0x1b0] sm:$0xff]
  %v95 = vld [vmem:[%s1 + $0x1b8] sm:$0xff]
  %v96 = vld [vmem:[%s1 + $0x1c0] sm:$0xff]
  %v97 = vld [vmem:[%s1 + $0x1c8] sm:$0xff]
  %v98 = vld [vmem:[%s1 + $0x1d0] sm:$0xff]
  %v99 = vld [vmem:[%s1 + $0x1d8] sm:$0xff]
  %v100 = vld [vmem:[%s1 + $0x1e0] sm:$0xff]
  %v101 = vld [vmem:[%s1 + $0x1e8] sm:$0xff]
  %v102 = vld [vmem:[%s1 + $0x1f0] sm:$0xff]
  %v103 = vld [vmem:[%s1 + $0x1f8] sm:$0xff]
  %v104 = vld [vmem:[%s1 + $0x200] sm:$0xff]
  %v105 = vld [vmem:[%s1 + $0x208] sm:$0xff]
  %v106 = vld [vmem:[%s1 + $0x210] sm:$0xff]
  %v107 = vld [vmem:[%s1 + $0x218] sm:$0xff]
  %v108 = vld [vmem:[%s1 + $0x220] sm:$0xff]
  %v109 = vld [vmem:[%s1 + $0x228] sm:$0xff]
  %v110 = vld [vmem:[%s1 + $0x230] sm:$0xff]
  %v111 = vld [vmem:[%s1 + $0x238] sm:$0xff]
  %v112 = vld [vmem:[%s1 + $0x240] sm:$0xff]
  %v113 = vld [vmem:[%s1 + $0x248] sm:$0xff]
  %v114 = vld [vmem:[%s1 + $0x250] sm:$0xff]
  %v115 = vld [vmem:[%s1 + $0x258] sm:$0xff]
  %v116 = vld [vmem:[%s1 + $0x260] sm:$0xff]
  %v117 = vld [vmem:[%s1 + $0x268] sm:$0xff]
  %v118 = vld [vmem:[%s1 + $0x270] sm:$0xff]
  %v119 = vld [vmem:[%s1 + $0x278] sm:$0xff]
  %v120 = vld [vmem:[%s1 + $0x280] sm:$0xff]
  %v121 = vld [vmem:[%s1 + $0x288] sm:$0xff]
  %v122 = vld [vmem:[%s1 + $0x290] sm:$0xff]
  %v123 = vld [vmem:[%s1 + $0x298] sm:$0xff]
  %v124 = vld [vmem:[%s1 + $0x2a0] sm:$0xff]
  %v125 = vld [vmem:[%s1 + $0x2a8] sm:$0xff]
  %v126 = vld [vmem:[%s1 + $0x2b0] sm:$0xff]
  %v127 = vld [vmem:[%s1 + $0x2b8] sm:$0xff]
  %v128 = vld [vmem:[%s1 + $0x2c0] sm:$0xff]
  %v129 = vld [vmem:[%s1 + $0x2c8] sm:$0xff]
  %v130 = vld [vmem:[%s1 + $0x2d0] sm:$0xff]
  %v131 = vld [vmem:[%s1 + $0x2d8] sm:$0xff]
  %v132 = vld [vmem:[%s1 + $0x2e0] sm:$0xff]
  %v133 = vld [vmem:[%s1 + $0x2e8] sm:$0xff]
  %v134 = vld [vmem:[%s1 + $0x2f0] sm:$0xff]
  %v135 = vld [vmem:[%s1 + $0x2f8] sm:$0xff]
  %v136 = vld [vmem:[%s1 + $0x300] sm:$0xff]
  %v137 = vld [vmem:[%s1 + $0x308] sm:$0xff]
  %v138 = vld [vmem:[%s1 + $0x310] sm:$0xff]
  %v139 = vld [vmem:[%s1 + $0x318] sm:$0xff]
  %v140 = vld [vmem:[%s1 + $0x320] sm:$0xff]
  %v141 = vld [vmem:[%s1 + $0x328] sm:$0xff]
  %v142 = vld [vmem:[%s1 + $0x330] sm:$0xff]
  %v143 = vld [vmem:[%s1 + $0x338] sm:$0xff]
  %v144 = vld [vmem:[%s1 + $0x340] sm:$0xff]
  %v145 = vld [vmem:[%s1 + $0x348] sm:$0xff]
  %v146 = vld [vmem:[%s1 + $0x350] sm:$0xff]
  %v147 = vld [vmem:[%s1 + $0x358] sm:$0xff]
  %v148 = vld [vmem:[%s1 + $0x360] sm:$0xff]
  %v149 = vld [vmem:[%s1 + $0x368] sm:$0xff]
  %v150 = vld [vmem:[%s1 + $0x370] sm:$0xff]
  %v151 = vld [vmem:[%s1 + $0x378] sm:$0xff]
  %v152 = vld [vmem:[%s1 + $0x380] sm:$0xff]
  %v153 = vld [vmem:[%s1 + $0x388] sm:$0xff]
  %v154 = vld [vmem:[%s1 + $0x390] sm:$0xff]
  %v155 = vld [vmem:[%s1 + $0x398] sm:$0xff]
  %v156 = vld [vmem:[%s1 + $0x3a0] sm:$0xff]
  %v157 = vld [vmem:[%s1 + $0x3a8] sm:$0xff]
  %v158 = vld [vmem:[%s1 + $0x3b0] sm:$0xff]
  %v159 = vld [vmem:[%s1 + $0x3b8] sm:$0xff]
  %v160 = vld [vmem:[%s1 + $0x3c0] sm:$0xff]
  %v161 = vld [vmem:[%s1 + $0x3c8] sm:$0xff]
  %v162 = vld [vmem:[%s1 + $0x3d0] sm:$0xff]
  %v163 = vld [vmem:[%s1 + $0x3d8] sm:$0xff]
  %v164 = vld [vmem:[%s1 + $0x3e0] sm:$0xff]
  %v165 = vld [vmem:[%s1 + $0x3e8] sm:$0xff]
  %v166 = vld [vmem:[%s1 + $0x3f0] sm:$0xff]
  %v167 = vld [vmem:[%s1 + $0x3f8] sm:$0xff]
  %v168 = vld [vmem:[%s1 + $0x400] sm:$0xff]
  %v169 = vld [vmem:[%s1 + $0x408] sm:$0xff]
  %v170 = vld [vmem:[%s1 + $0x410] sm:$0xff]
  %v171 = vld [vmem:[%s1 + $0x418] sm:$0xff]
  %v172 = vld [vmem:[%s1 + $0x420] sm:$0xff]
  %v173 = vld [vmem:[%s1 + $0x428] sm:$0xff]
  %v174 = vld [vmem:[%s1 + $0x430] sm:$0xff]
  %v175 = vld [vmem:[%s1 + $0x438] sm:$0xff]
  %v176 = vld [vmem:[%s1 + $0x440] sm:$0xff]
  %v177 = vld [vmem:[%s1 + $0x448] sm:$0xff]
  %v178 = vld [vmem:[%s1 + $0x450] sm:$0xff]
  %v179 = vld [vmem:[%s1 + $0x458] sm:$0xff]
  %v180 = vld [vmem:[%s1 + $0x460] sm:$0xff]
  %v181 = vld [vmem:[%s1 + $0x468] sm:$0xff]
  %v182 = vld [vmem:[%s1 + $0x470] sm:$0xff]
  %v183 = vld [vmem:[%s1 + $0x478] sm:$0xff]
  %v184 = vld [vmem:[%s1 + $0x480] sm:$0xff]
  %v185 = vld [vmem:[%s1 + $0x488] sm:$0xff]
  %v186 = vld [vmem:[%s1 + $0x490] sm:$0xff]
  %v187 = vld [vmem:[%s1 + $0x498] sm:$0xff]
  %v188 = vld [vmem:[%s1 + $0x4a0] sm:$0xff]
  %v189 = vld [vmem:[%s1 + $0x4a8] sm:$0xff]
  %v190 = vld [vmem:[%s1 + $0x4b0] sm:$0xff]
  %v191 = vld [vmem:[%s1 + $0x4b8] sm:$0xff]
  %v192 = vld [vmem:[%s1 + $0x4c0] sm:$0xff]
  %v193 = vld [vmem:[%s1 + $0x4c8] sm:$0xff]
  %v194 = vld [vmem:[%s1 + $0x4d0] sm:$0xff]
  %v195 = vld [vmem:[%s1 + $0x4d8] sm:$0xff]
  %v196 = vld [vmem:[%s1 + $0x4e0] sm:$0xff]
  %v197 = vld [vmem:[%s1 + $0x4e8] sm:$0xff]
  %v198 = vld [vmem:[%s1 + $0x4f0] sm:$0xff]
  %v199 = vld [vmem:[%s1 + $0x4f8] sm:$0xff]
  %v200 = vld [vmem:[%s1 + $0x500] sm:$0xff]
  %v201 = vld [vmem:[%s1 + $0x508] sm:$0xff]
  %v202 = vld [vmem:[%s1 + $0x510] sm:$0xff]
  %v203 = vld [vmem:[%s1 + $0x518] sm:$0xff]
  %v204 = vld [vmem:[%s1 + $0x520] sm:$0xff]
  %v205 = vld [vmem:[%s1 + $0x528] sm:$0xff]
  %v206 = vld [vmem:[%s1 + $0x530] sm:$0xff]
  %v207 = vld [vmem:[%s1 + $0x538] sm:$0xff]
  %v208 = vld [vmem:[%s1 + $0x540] sm:$0xff]
  %v209 = vld [vmem:[%s1 + $0x548] sm:$0xff]
  %v210 = vld [vmem:[%s1 + $0x550] sm:$0xff]
  %v211 = vld [vmem:[%s1 + $0x558] sm:$0xff]
  %v212 = vld [vmem:[%s1 + $0x560] sm:$0xff]
  %v213 = vld [vmem:[%s1 + $0x568] sm:$0xff]
  %v214 = vld [vmem:[%s1 + $0x570] sm:$0xff]
  %v215 = vld [vmem:[%s1 + $0x578] sm:$0xff]
  %v216 = vld [vmem:[%s1 + $0x580] sm:$0xff]
  %v217 = vld [vmem:[%s1 + $0x588] sm:$0xff]
  %v218 = vld [vmem:[%s1 + $0x590] sm:$0xff]
  %v219 = vld [vmem:[%s1 + $0x598] sm:$0xff]
  %v220 = vld [vmem:[%s1 + $0x5a0] sm:$0xff]
  %v221 = vld [vmem:[%s1 + $0x5a8] sm:$0xff]
  %v222 = vld [vmem:[%s1 + $0x5b0] sm:$0xff]
  %v223 = vld [vmem:[%s1 + $0x5b8] sm:$0xff]
  %v224 = vld [vmem:[%s1 + $0x5c0] sm:$0xff]
  %v225 = vld [vmem:[%s1 + $0x5c8] sm:$0xff]
  %v226 = vld [vmem:[%s1 + $0x5d0] sm:$0xff]
  %v227 = vld [vmem:[%s1 + $0x5d8] sm:$0xff]
  %v228 = vld [vmem:[%s1 + $0x5e0] sm:$0xff]
  %v229 = vld [vmem:[%s1 + $0x5e8] sm:$0xff]
  %v230 = vld [vmem:[%s1 + $0x5f0] sm:$0xff]
  %v231 = vld [vmem:[%s1 + $0x5f8] sm:$0xff]
  %v232 = vld [vmem:[%s1 + $0x600] sm:$0xff]
  %v233 = vld [vmem:[%s1 + $0x608] sm:$0xff]
  %v234 = vld [vmem:[%s1 + $0x610] sm:$0xff]
  %v235 = vld [vmem:[%s1 + $0x618] sm:$0xff]
  %v236 = vld [vmem:[%s1 + $0x620] sm:$0xff]
  %v237 = vld [vmem:[%s1 + $0x628] sm:$0xff]
  %v238 = vld [vmem:[%s1 + $0x630] sm:$0xff]
  %v239 = vld [vmem:[%s1 + $0x638] sm:$0xff]
  %v240 = vld [vmem:[%s1 + $0x640] sm:$0xff]
  %v241 = vld [vmem:[%s1 + $0x648] sm:$0xff]
  %v242 = vld [vmem:[%s1 + $0x650] sm:$0xff]
  %v243 = vld [vmem:[%s1 + $0x658] sm:$0xff]
  %v244 = vld [vmem:[%s1 + $0x660] sm:$0xff]
  %v245 = vld [vmem:[%s1 + $0x668] sm:$0xff]
  %v246 = vld [vmem:[%s1 + $0x670] sm:$0xff]
  %v247 = vld [vmem:[%s1 + $0x678] sm:$0xff]
  %v248 = vld [vmem:[%s1 + $0x680] sm:$0xff]
  %v249 = vld [vmem:[%s1 + $0x688] sm:$0xff]
  %v250 = vld [vmem:[%s1 + $0x690] sm:$0xff]
  %v251 = vld [vmem:[%s1 + $0x698] sm:$0xff]
  %v252 = vld [vmem:[%s1 + $0x6a0] sm:$0xff]
  %v253 = vld [vmem:[%s1 + $0x6a8] sm:$0xff]
  %v254 = vld [vmem:[%s1 + $0x6b0] sm:$0xff]
  %v255 = vld [vmem:[%s1 + $0x6b8] sm:$0xff]
  %v256 = vld [vmem:[%s1 + $0x6c0] sm:$0xff]
  %v257 = vld [vmem:[%s1 + $0x6c8] sm:$0xff]
  %v258 = vld [vmem:[%s1 + $0x6d0] sm:$0xff]
  %v259 = vld [vmem:[%s1 + $0x6d8] sm:$0xff]
  %v260 = vld [vmem:[%s1 + $0x6e0] sm:$0xff]
  %v261 = vld [vmem:[%s1 + $0x6e8] sm:$0xff]
  %v262 = vld [vmem:[%s1 + $0x6f0] sm:$0xff]
  %v263 = vld [vmem:[%s1 + $0x6f8] sm:$0xff]
  %v264 = vld [vmem:[%s1 + $0x700] sm:$0xff]
  %v265 = vld [vmem:[%s1 + $0x708] sm:$0xff]
  %v266 = vld [vmem:[%s1 + $0x710] sm:$0xff]
  %v267 = vld [vmem:[%s1 + $0x718] sm:$0xff]
  %v268 = vld [vmem:[%s1 + $0x720] sm:$0xff]
  %v269 = vld [vmem:[%s1 + $0x728] sm:$0xff]
  %v270 = vld [vmem:[%s1 + $0x730] sm:$0xff]
  %v271 = vld [vmem:[%s1 + $0x738] sm:$0xff]
  %v272 = vld [vmem:[%s1 + $0x740] sm:$0xff]
  %v273 = vld [vmem:[%s1 + $0x748] sm:$0xff]
  %v274 = vld [vmem:[%s1 + $0x750] sm:$0xff]
  %v275 = vld [vmem:[%s1 + $0x758] sm:$0xff]
  %v276 = vld [vmem:[%s1 + $0x760] sm:$0xff]
  %v277 = vld [vmem:[%s1 + $0x768] sm:$0xff]
  %v278 = vld [vmem:[%s1 + $0x770] sm:$0xff]
  %v279 = vld [vmem:[%s1 + $0x778] sm:$0xff]
  %v280 = vld [vmem:[%s1 + $0x780] sm:$0xff]
  %v281 = vld [vmem:[%s1 + $0x788] sm:$0xff]
  %v282 = vld [vmem:[%s1 + $0x790] sm:$0xff]
  %v283 = vld [vmem:[%s1 + $0x798] sm:$0xff]
  %v284 = vld [vmem:[%s1 + $0x7a0] sm:$0xff]
  %v285 = vld [vmem:[%s1 + $0x7a8] sm:$0xff]
  %v286 = vld [vmem:[%s1 + $0x7b0] sm:$0xff]
  %v287 = vld [vmem:[%s1 + $0x7b8] sm:$0xff]
  %v288 = vld [vmem:[%s1 + $0x7c0] sm:$0xff]
  %v289 = vld [vmem:[%s1 + $0x7c8] sm:$0xff]
  %v290 = vld [vmem:[%s1 + $0x7d0] sm:$0xff]
  %v291 = vld [vmem:[%s1 + $0x7d8] sm:$0xff]
  %v292 = vld [vmem:[%s1 + $0x7e0] sm:$0xff]
  %v293 = vld [vmem:[%s1 + $0x7e8] sm:$0xff]
  %v294 = vld [vmem:[%s1 + $0x7f0] sm:$0xff]
  %v295 = vld [vmem:[%s1 + $0x7f8] sm:$0xff]
  %v296 = vld [vmem:[%s1 + $0x800] sm:$0xff]
  %v297 = vld [vmem:[%s1 + $0x808] sm:$0xff]
  %v298 = vld [vmem:[%s1 + $0x810] sm:$0xff]
  %v299 = vld [vmem:[%s1 + $0x818] sm:$0xff]
  %v300 = vld [vmem:[%s1 + $0x820] sm:$0xff]
  %v301 = vld [vmem:[%s1 + $0x828] sm:$0xff]
  %v302 = vld [vmem:[%s1 + $0x830] sm:$0xff]
  %v303 = vld [vmem:[%s1 + $0x838] sm:$0xff]
  %v304 = vld [vmem:[%s1 + $0x840] sm:$0xff]
  %v305 = vld [vmem:[%s1 + $0x848] sm:$0xff]
  %v306 = vld [vmem:[%s1 + $0x850] sm:$0xff]
  %v307 = vld [vmem:[%s1 + $0x858] sm:$0xff]
  %v308 = vld [vmem:[%s1 + $0x860] sm:$0xff]
  %v309 = vld [vmem:[%s1 + $0x868] sm:$0xff]
  %v310 = vld [vmem:[%s1 + $0x870] sm:$0xff]
  %v311 = vld [vmem:[%s1 + $0x878] sm:$0xff]
  %v312 = vld [vmem:[%s1 + $0x880] sm:$0xff]
  %v313 = vld [vmem:[%s1 + $0x888] sm:$0xff]
  %v314 = vld [vmem:[%s1 + $0x890] sm:$0xff]
  %v315 = vld [vmem:[%s1 + $0x898] sm:$0xff]
  %v316 = vld [vmem:[%s1 + $0x8a0] sm:$0xff]
  %v317 = vld [vmem:[%s1 + $0x8a8] sm:$0xff]
  %v318 = vld [vmem:[%s1 + $0x8b0] sm:$0xff]
  %v319 = vld [vmem:[%s1 + $0x8b8] sm:$0xff]
  %v320 = vld [vmem:[%s1 + $0x8c0] sm:$0xff]
  %v321 = vld [vmem:[%s1 + $0x8c8] sm:$0xff]
  %v322 = vld [vmem:[%s1 + $0x8d0] sm:$0xff]
  %v323 = vld [vmem:[%s1 + $0x8d8] sm:$0xff]
  %v324 = vld [vmem:[%s1 + $0x8e0] sm:$0xff]
  %v325 = vld [vmem:[%s1 + $0x8e8] sm:$0xff]
  %v326 = vld [vmem:[%s1 + $0x8f0] sm:$0xff]
  %v327 = vld [vmem:[%s1 + $0x8f8] sm:$0xff]
  %v328 = vld [vmem:[%s1 + $0x900] sm:$0xff]
  %v329 = vld [vmem:[%s1 + $0x908] sm:$0xff]
  %v330 = vld [vmem:[%s1 + $0x910] sm:$0xff]
  %v331 = vld [vmem:[%s1 + $0x918] sm:$0xff]
  %v332 = vld [vmem:[%s1 + $0x920] sm:$0xff]
  %v333 = vld [vmem:[%s1 + $0x928] sm:$0xff]
  %v334 = vld [vmem:[%s1 + $0x930] sm:$0xff]
  %v335 = vld [vmem:[%s1 + $0x938] sm:$0xff]
  %v336 = vld [vmem:[%s1 + $0x940] sm:$0xff]
  %v337 = vld [vmem:[%s1 + $0x948] sm:$0xff]
  %v338 = vld [vmem:[%s1 + $0x950] sm:$0xff]
  %v339 = vld [vmem:[%s1 + $0x958] sm:$0xff]
  %v340 = vld [vmem:[%s1 + $0x960] sm:$0xff]
  %v341 = vld [vmem:[%s1 + $0x968] sm:$0xff]
  %v342 = vld [vmem:[%s1 + $0x970] sm:$0xff]
  %v343 = vld [vmem:[%s1 + $0x978] sm:$0xff]
  %v344 = vld [vmem:[%s1 + $0x980] sm:$0xff]
  %v345 = vld [vmem:[%s1 + $0x988] sm:$0xff]
  %v346 = vld [vmem:[%s1 + $0x990] sm:$0xff]
  %v347 = vld [vmem:[%s1 + $0x998] sm:$0xff]
  %v348 = vld [vmem:[%s1 + $0x9a0] sm:$0xff]
  %v349 = vld [vmem:[%s1 + $0x9a8] sm:$0xff]
  %v350 = vld [vmem:[%s1 + $0x9b0] sm:$0xff]
  %v351 = vld [vmem:[%s1 + $0x9b8] sm:$0xff]
  %v352 = vld [vmem:[%s1 + $0x9c0] sm:$0xff]
  %v353 = vld [vmem:[%s1 + $0x9c8] sm:$0xff]
  %v354 = vld [vmem:[%s1 + $0x9d0] sm:$0xff]
  %v355 = vld [vmem:[%s1 + $0x9d8] sm:$0xff]
  %v356 = vld [vmem:[%s1 + $0x9e0] sm:$0xff]
  %v357 = vld [vmem:[%s1 + $0x9e8] sm:$0xff]
  %v358 = vld [vmem:[%s1 + $0x9f0] sm:$0xff]
  %v359 = vld [vmem:[%s1 + $0x9f8] sm:$0xff]
  %v360 = vld [vmem:[%s1 + $0xa00] sm:$0xff]
  %v361 = vld [vmem:[%s1 + $0xa08] sm:$0xff]
  %v362 = vld [vmem:[%s1 + $0xa10] sm:$0xff]
  %v363 = vld [vmem:[%s1 + $0xa18] sm:$0xff]
  %v364 = vld [vmem:[%s1 + $0xa20] sm:$0xff]
  %v365 = vld [vmem:[%s1 + $0xa28] sm:$0xff]
  %v366 = vld [vmem:[%s1 + $0xa30] sm:$0xff]
  %v367 = vld [vmem:[%s1 + $0xa38] sm:$0xff]
  %v368 = vld [vmem:[%s1 + $0xa40] sm:$0xff]
  %v369 = vld [vmem:[%s1 + $0xa48] sm:$0xff]
  %v370 = vld [vmem:[%s1 + $0xa50] sm:$0xff]
  %v371 = vld [vmem:[%s1 + $0xa58] sm:$0xff]
  %v372 = vld [vmem:[%s1 + $0xa60] sm:$0xff]
  %v373 = vld [vmem:[%s1 + $0xa68] sm:$0xff]
  %v374 = vld [vmem:[%s1 + $0xa70] sm:$0xff]
  %v375 = vld [vmem:[%s1 + $0xa78] sm:$0xff]
  %v376 = vld [vmem:[%s1 + $0xa80] sm:$0xff]
  %v377 = vld [vmem:[%s1 + $0xa88] sm:$0xff]
  %v378 = vld [vmem:[%s1 + $0xa90] sm:$0xff]
  %v379 = vld [vmem:[%s1 + $0xa98] sm:$0xff]
  %v380 = vld [vmem:[%s1 + $0xaa0] sm:$0xff]
  %v381 = vld [vmem:[%s1 + $0xaa8] sm:$0xff]
  %v382 = vld [vmem:[%s1 + $0xab0] sm:$0xff]
  %v383 = vld [vmem:[%s1 + $0xab8] sm:$0xff]
  %v384 = vld [vmem:[%s1 + $0xac0] sm:$0xff]
  %v385 = vld [vmem:[%s1 + $0xac8] sm:$0xff]
  %v386 = vld [vmem:[%s1 + $0xad0] sm:$0xff]
  %v387 = vld [vmem:[%s1 + $0xad8] sm:$0xff]
  %v388 = vld [vmem:[%s1 + $0xae0] sm:$0xff]
  %v389 = vld [vmem:[%s1 + $0xae8] sm:$0xff]
  %v390 = vld [vmem:[%s1 + $0xaf0] sm:$0xff]
  %v391 = vld [vmem:[%s1 + $0xaf8] sm:$0xff]
  %v392 = vld [vmem:[%s1 + $0xb00] sm:$0xff]
  %v393 = vld [vmem:[%s1 + $0xb08] sm:$0xff]
  %v394 = vld [vmem:[%s1 + $0xb10] sm:$0xff]
  %v395 = vld [vmem:[%s1 + $0xb18] sm:$0xff]
  %v396 = vld [vmem:[%s1 + $0xb20] sm:$0xff]
  %v397 = vld [vmem:[%s1 + $0xb28] sm:$0xff]
  %v398 = vld [vmem:[%s1 + $0xb30] sm:$0xff]
  %v399 = vld [vmem:[%s1 + $0xb38] sm:$0xff]
  %v400 = vld [vmem:[%s1 + $0xb40] sm:$0xff]
  %v401 = vld [vmem:[%s1 + $0xb48] sm:$0xff]
  %v402 = vld [vmem:[%s1 + $0xb50] sm:$0xff]
  %v403 = vld [vmem:[%s1 + $0xb58] sm:$0xff]
  %v404 = vld [vmem:[%s1 + $0xb60] sm:$0xff]
  %v405 = vld [vmem:[%s1 + $0xb68] sm:$0xff]
  %v406 = vld [vmem:[%s1 + $0xb70] sm:$0xff]
  %v407 = vld [vmem:[%s1 + $0xb78] sm:$0xff]
  %v408 = vld [vmem:[%s1 + $0xb80] sm:$0xff]
  %v409 = vld [vmem:[%s1 + $0xb88] sm:$0xff]
  %v410 = vld [vmem:[%s1 + $0xb90] sm:$0xff]
  %v411 = vld [vmem:[%s1 + $0xb98] sm:$0xff]
  %v412 = vld [vmem:[%s1 + $0xba0] sm:$0xff]
  %v413 = vld [vmem:[%s1 + $0xba8] sm:$0xff]
  %v414 = vld [vmem:[%s1 + $0xbb0] sm:$0xff]
  %v415 = vld [vmem:[%s1 + $0xbb8] sm:$0xff]
  %v416 = vld [vmem:[%s1 + $0xbc0] sm:$0xff]
  %v417 = vld [vmem:[%s1 + $0xbc8] sm:$0xff]
  %v418 = vld [vmem:[%s1 + $0xbd0] sm:$0xff]
  %v419 = vld [vmem:[%s1 + $0xbd8] sm:$0xff]
  %v420 = vld [vmem:[%s1 + $0xbe0] sm:$0xff]
  %v421 = vld [vmem:[%s1 + $0xbe8] sm:$0xff]
  %v422 = vld [vmem:[%s1 + $0xbf0] sm:$0xff]
  %v423 = vld [vmem:[%s1 + $0xbf8] sm:$0xff]
  %v424 = vld [vmem:[%s1 + $0xc00] sm:$0xff]
  %v425 = vld [vmem:[%s1 + $0xc08] sm:$0xff]
  %v426 = vld [vmem:[%s1 + $0xc10] sm:$0xff]
  %v427 = vld [vmem:[%s1 + $0xc18] sm:$0xff]
  %v428 = vld [vmem:[%s1 + $0xc20] sm:$0xff]
  %v429 = vld [vmem:[%s1 + $0xc28] sm:$0xff]
  %v430 = vld [vmem:[%s1 + $0xc30] sm:$0xff]
  %v431 = vld [vmem:[%s1 + $0xc38] sm:$0xff]
  %v432 = vld [vmem:[%s1 + $0xc40] sm:$0xff]
  %v433 = vld [vmem:[%s1 + $0xc48] sm:$0xff]
  %v434 = vld [vmem:[%s1 + $0xc50] sm:$0xff]
  %v435 = vld [vmem:[%s1 + $0xc58] sm:$0xff]
  %v436 = vld [vmem:[%s1 + $0xc60] sm:$0xff]
  %v437 = vld [vmem:[%s1 + $0xc68] sm:$0xff]
  %v438 = vld [vmem:[%s1 + $0xc70] sm:$0xff]
  %v439 = vld [vmem:[%s1 + $0xc78] sm:$0xff]
  %v440 = vld [vmem:[%s1 + $0xc80] sm:$0xff]
  %v441 = vld [vmem:[%s1 + $0xc88] sm:$0xff]
  %v442 = vld [vmem:[%s1 + $0xc90] sm:$0xff]
  %v443 = vld [vmem:[%s1 + $0xc98] sm:$0xff]
  %v444 = vld [vmem:[%s1 + $0xca0] sm:$0xff]
  %v445 = vld [vmem:[%s1 + $0xca8] sm:$0xff]
  %v446 = vld [vmem:[%s1 + $0xcb0] sm:$0xff]
  %v447 = vld [vmem:[%s1 + $0xcb8] sm:$0xff]
  %v448 = vld [vmem:[%s1 + $0xcc0] sm:$0xff]
  %v449 = vld [vmem:[%s1 + $0xcc8] sm:$0xff]
  %v450 = vld [vmem:[%s1 + $0xcd0] sm:$0xff]
  %v451 = vld [vmem:[%s1 + $0xcd8] sm:$0xff]
  %v452 = vld [vmem:[%s1 + $0xce0] sm:$0xff]
  %v453 = vld [vmem:[%s1 + $0xce8] sm:$0xff]
  %v454 = vld [vmem:[%s1 + $0xcf0] sm:$0xff]
  %v455 = vld [vmem:[%s1 + $0xcf8] sm:$0xff]
  %v456 = vld [vmem:[%s1 + $0xd00] sm:$0xff]
  %v457 = vld [vmem:[%s1 + $0xd08] sm:$0xff]
  %v458 = vld [vmem:[%s1 + $0xd10] sm:$0xff]
  %v459 = vld [vmem:[%s1 + $0xd18] sm:$0xff]
  %v460 = vld [vmem:[%s1 + $0xd20] sm:$0xff]
  %v461 = vld [vmem:[%s1 + $0xd28] sm:$0xff]
  %v462 = vld [vmem:[%s1 + $0xd30] sm:$0xff]
  %v463 = vld [vmem:[%s1 + $0xd38] sm:$0xff]
  %v464 = vld [vmem:[%s1 + $0xd40] sm:$0xff]
  %v465 = vld [vmem:[%s1 + $0xd48] sm:$0xff]
  %v466 = vld [vmem:[%s1 + $0xd50] sm:$0xff]
  %v467 = vld [vmem:[%s1 + $0xd58] sm:$0xff]
  %v468 = vld [vmem:[%s1 + $0xd60] sm:$0xff]
  %v469 = vld [vmem:[%s1 + $0xd68] sm:$0xff]
  %v470 = vld [vmem:[%s1 + $0xd70] sm:$0xff]
  %v471 = vld [vmem:[%s1 + $0xd78] sm:$0xff]
  %v472 = vld [vmem:[%s1 + $0xd80] sm:$0xff]
  %v473 = vld [vmem:[%s1 + $0xd88] sm:$0xff]
  %v474 = vld [vmem:[%s1 + $0xd90] sm:$0xff]
  %v475 = vld [vmem:[%s1 + $0xd98] sm:$0xff]
  %v476 = vld [vmem:[%s1 + $0xda0] sm:$0xff]
  %v477 = vld [vmem:[%s1 + $0xda8] sm:$0xff]
  %v478 = vld [vmem:[%s1 + $0xdb0] sm:$0xff]
  %v479 = vld [vmem:[%s1 + $0xdb8] sm:$0xff]
  %v480 = vld [vmem:[%s1 + $0xdc0] sm:$0xff]
  %v481 = vld [vmem:[%s1 + $0xdc8] sm:$0xff]
  %v482 = vld [vmem:[%s1 + $0xdd0] sm:$0xff]
  %v483 = vld [vmem:[%s1 + $0xdd8] sm:$0xff]
  %v484 = vld [vmem:[%s1 + $0xde0] sm:$0xff]
  %v485 = vld [vmem:[%s1 + $0xde8] sm:$0xff]
  %v486 = vld [vmem:[%s1 + $0xdf0] sm:$0xff]
  %v487 = vld [vmem:[%s1 + $0xdf8] sm:$0xff]
  %v488 = vld [vmem:[%s2] sm:$0xff]
  %v490 = vperm.slane %v488, 0
  %v491 = vperm.slane %v488, 1
  %v492 = vperm.slane %v488, 2
  %v493 = vperm.slane %v488, 3
  %v494 = vperm.slane %v488, 4
  %v495 = vperm.slane %v488, 5
  %v496 = vperm.slane %v488, 6
  %v497 = vperm.slane %v488, 7
  %v514 = vunpack.c.l.b16 %v32
  %v515 = vunpack.c.h.b16 %v32
  %v516 = vunpack.c.l.b16 %v33
  %v517 = vunpack.c.h.b16 %v33
  %v518 = vunpack.c.l.b16 %v34
  %v519 = vunpack.c.h.b16 %v34
  %v520 = vunpack.c.l.b16 %v35
  %v521 = vunpack.c.l.b16 %v36
  %v522 = vunpack.c.h.b16 %v36
  %v523 = vunpack.c.l.b16 %v37
  %v524 = vunpack.c.h.b16 %v37
  %v525 = vunpack.c.l.b16 %v38
  %v526 = vunpack.c.h.b16 %v38
  %v527 = vunpack.c.l.b16 %v39
  %v528 = vpack.c.b16 %v521, %v514
  %v529 = vpack.c.b16 %v522, %v515
  %v530 = vpack.c.b16 %v523, %v516
  %v531 = vpack.c.b16 %v524, %v517
  %v532 = vpack.c.b16 %v525, %v518
  %v533 = vpack.c.b16 %v526, %v519
  %v534 = vpack.c.b16 %v527, %v520
  %v990 = vunpack.c.l.b16 %v40
  %v991 = vunpack.c.h.b16 %v40
  %v992 = vunpack.c.l.b16 %v41
  %v993 = vunpack.c.h.b16 %v41
  %v994 = vunpack.c.l.b16 %v42
  %v995 = vunpack.c.h.b16 %v42
  %v996 = vunpack.c.l.b16 %v43
  %v997 = vunpack.c.h.b16 %v43
  %v998 = vunpack.c.l.b16 %v44
  %v999 = vunpack.c.h.b16 %v44
  %v1000 = vunpack.c.l.b16 %v45
  %v1001 = vunpack.c.h.b16 %v45
  %v1002 = vunpack.c.l.b16 %v46
  %v1003 = vunpack.c.h.b16 %v46
  %v1004 = vunpack.c.l.b16 %v47
  %v1005 = vunpack.c.h.b16 %v47
  %v1006 = vunpack.c.l.b16 %v48
  %v1007 = vunpack.c.h.b16 %v48
  %v1008 = vunpack.c.l.b16 %v49
  %v1009 = vunpack.c.h.b16 %v49
  %v1010 = vunpack.c.l.b16 %v50
  %v1011 = vunpack.c.h.b16 %v50
  %v1012 = vunpack.c.l.b16 %v51
  %v1013 = vunpack.c.h.b16 %v51
  %v1014 = vunpack.c.l.b16 %v52
  %v1015 = vunpack.c.h.b16 %v52
  %v1016 = vunpack.c.l.b16 %v53
  %v1017 = vunpack.c.h.b16 %v53
  %v1018 = vunpack.c.l.b16 %v54
  %v1019 = vunpack.c.h.b16 %v54
  %v1020 = vunpack.c.l.b16 %v55
  %v1021 = vunpack.c.h.b16 %v55
  %v1022 = vunpack.c.l.b16 %v56
  %v1023 = vunpack.c.h.b16 %v56
  %v1024 = vunpack.c.l.b16 %v57
  %v1025 = vunpack.c.h.b16 %v57
  %v1026 = vunpack.c.l.b16 %v58
  %v1027 = vunpack.c.h.b16 %v58
  %v1028 = vunpack.c.l.b16 %v59
  %v1029 = vunpack.c.h.b16 %v59
  %v1030 = vunpack.c.l.b16 %v60
  %v1031 = vunpack.c.h.b16 %v60
  %v1032 = vunpack.c.l.b16 %v61
  %v1033 = vunpack.c.h.b16 %v61
  %v1034 = vunpack.c.l.b16 %v62
  %v1035 = vunpack.c.h.b16 %v62
  %v1036 = vunpack.c.l.b16 %v63
  %v1037 = vunpack.c.h.b16 %v63
  %v1038 = vunpack.c.l.b16 %v64
  %v1039 = vunpack.c.h.b16 %v64
  %v1040 = vunpack.c.l.b16 %v65
  %v1041 = vunpack.c.h.b16 %v65
  %v1042 = vunpack.c.l.b16 %v66
  %v1043 = vunpack.c.h.b16 %v66
  %v1044 = vunpack.c.l.b16 %v67
  %v1045 = vunpack.c.h.b16 %v67
  %v1046 = vunpack.c.l.b16 %v68
  %v1047 = vunpack.c.h.b16 %v68
  %v1048 = vunpack.c.l.b16 %v69
  %v1049 = vunpack.c.h.b16 %v69
  %v1050 = vunpack.c.l.b16 %v70
  %v1051 = vunpack.c.h.b16 %v70
  %v1052 = vunpack.c.l.b16 %v71
  %v1053 = vunpack.c.h.b16 %v71
  %v1054 = vunpack.c.l.b16 %v72
  %v1055 = vunpack.c.h.b16 %v72
  %v1056 = vunpack.c.l.b16 %v73
  %v1057 = vunpack.c.h.b16 %v73
  %v1058 = vunpack.c.l.b16 %v74
  %v1059 = vunpack.c.h.b16 %v74
  %v1060 = vunpack.c.l.b16 %v75
  %v1061 = vunpack.c.h.b16 %v75
  %v1062 = vunpack.c.l.b16 %v76
  %v1063 = vunpack.c.h.b16 %v76
  %v1064 = vunpack.c.l.b16 %v77
  %v1065 = vunpack.c.h.b16 %v77
  %v1066 = vunpack.c.l.b16 %v78
  %v1067 = vunpack.c.h.b16 %v78
  %v1068 = vunpack.c.l.b16 %v79
  %v1069 = vunpack.c.h.b16 %v79
  %v1070 = vunpack.c.l.b16 %v80
  %v1071 = vunpack.c.h.b16 %v80
  %v1072 = vunpack.c.l.b16 %v81
  %v1073 = vunpack.c.h.b16 %v81
  %v1074 = vunpack.c.l.b16 %v82
  %v1075 = vunpack.c.h.b16 %v82
  %v1076 = vunpack.c.l.b16 %v83
  %v1077 = vunpack.c.h.b16 %v83
  %v1078 = vunpack.c.l.b16 %v84
  %v1079 = vunpack.c.h.b16 %v84
  %v1080 = vunpack.c.l.b16 %v85
  %v1081 = vunpack.c.h.b16 %v85
  %v1082 = vunpack.c.l.b16 %v86
  %v1083 = vunpack.c.h.b16 %v86
  %v1084 = vunpack.c.l.b16 %v87
  %v1085 = vunpack.c.h.b16 %v87
  %v1086 = vunpack.c.l.b16 %v88
  %v1087 = vunpack.c.h.b16 %v88
  %v1088 = vunpack.c.l.b16 %v89
  %v1089 = vunpack.c.h.b16 %v89
  %v1090 = vunpack.c.l.b16 %v90
  %v1091 = vunpack.c.h.b16 %v90
  %v1092 = vunpack.c.l.b16 %v91
  %v1093 = vunpack.c.h.b16 %v91
  %v1094 = vunpack.c.l.b16 %v92
  %v1095 = vunpack.c.h.b16 %v92
  %v1096 = vunpack.c.l.b16 %v93
  %v1097 = vunpack.c.h.b16 %v93
  %v1098 = vunpack.c.l.b16 %v94
  %v1099 = vunpack.c.h.b16 %v94
  %v1100 = vunpack.c.l.b16 %v95
  %v1101 = vunpack.c.h.b16 %v95
  %v1102 = vunpack.c.l.b16 %v96
  %v1103 = vunpack.c.h.b16 %v96
  %v1104 = vunpack.c.l.b16 %v97
  %v1105 = vunpack.c.h.b16 %v97
  %v1106 = vunpack.c.l.b16 %v98
  %v1107 = vunpack.c.h.b16 %v98
  %v1108 = vunpack.c.l.b16 %v99
  %v1109 = vunpack.c.h.b16 %v99
  %v1110 = vunpack.c.l.b16 %v100
  %v1111 = vunpack.c.h.b16 %v100
  %v1112 = vunpack.c.l.b16 %v101
  %v1113 = vunpack.c.h.b16 %v101
  %v1114 = vunpack.c.l.b16 %v102
  %v1115 = vunpack.c.h.b16 %v102
  %v1116 = vunpack.c.l.b16 %v103
  %v1117 = vunpack.c.h.b16 %v103
  %v1118 = vunpack.c.l.b16 %v104
  %v1119 = vunpack.c.h.b16 %v104
  %v1120 = vunpack.c.l.b16 %v105
  %v1121 = vunpack.c.h.b16 %v105
  %v1122 = vunpack.c.l.b16 %v106
  %v1123 = vunpack.c.h.b16 %v106
  %v1124 = vunpack.c.l.b16 %v107
  %v1125 = vunpack.c.h.b16 %v107
  %v1126 = vunpack.c.l.b16 %v108
  %v1127 = vunpack.c.h.b16 %v108
  %v1128 = vunpack.c.l.b16 %v109
  %v1129 = vunpack.c.h.b16 %v109
  %v1130 = vunpack.c.l.b16 %v110
  %v1131 = vunpack.c.h.b16 %v110
  %v1132 = vunpack.c.l.b16 %v111
  %v1133 = vunpack.c.h.b16 %v111
  %v1134 = vunpack.c.l.b16 %v112
  %v1135 = vunpack.c.h.b16 %v112
  %v1136 = vunpack.c.l.b16 %v113
  %v1137 = vunpack.c.h.b16 %v113
  %v1138 = vunpack.c.l.b16 %v114
  %v1139 = vunpack.c.h.b16 %v114
  %v1140 = vunpack.c.l.b16 %v115
  %v1141 = vunpack.c.h.b16 %v115
  %v1142 = vunpack.c.l.b16 %v116
  %v1143 = vunpack.c.h.b16 %v116
  %v1144 = vunpack.c.l.b16 %v117
  %v1145 = vunpack.c.h.b16 %v117
  %v1146 = vunpack.c.l.b16 %v118
  %v1147 = vunpack.c.h.b16 %v118
  %v1148 = vunpack.c.l.b16 %v119
  %v1149 = vunpack.c.h.b16 %v119
  %v1150 = vunpack.c.l.b16 %v120
  %v1151 = vunpack.c.h.b16 %v120
  %v1152 = vunpack.c.l.b16 %v121
  %v1153 = vunpack.c.h.b16 %v121
  %v1154 = vunpack.c.l.b16 %v122
  %v1155 = vunpack.c.h.b16 %v122
  %v1156 = vunpack.c.l.b16 %v123
  %v1157 = vunpack.c.h.b16 %v123
  %v1158 = vunpack.c.l.b16 %v124
  %v1159 = vunpack.c.h.b16 %v124
  %v1160 = vunpack.c.l.b16 %v125
  %v1161 = vunpack.c.h.b16 %v125
  %v1162 = vunpack.c.l.b16 %v126
  %v1163 = vunpack.c.h.b16 %v126
  %v1164 = vunpack.c.l.b16 %v127
  %v1165 = vunpack.c.h.b16 %v127
  %v1166 = vunpack.c.l.b16 %v128
  %v1167 = vunpack.c.h.b16 %v128
  %v1168 = vunpack.c.l.b16 %v129
  %v1169 = vunpack.c.h.b16 %v129
  %v1170 = vunpack.c.l.b16 %v130
  %v1171 = vunpack.c.h.b16 %v130
  %v1172 = vunpack.c.l.b16 %v131
  %v1173 = vunpack.c.h.b16 %v131
  %v1174 = vunpack.c.l.b16 %v132
  %v1175 = vunpack.c.h.b16 %v132
  %v1176 = vunpack.c.l.b16 %v133
  %v1177 = vunpack.c.h.b16 %v133
  %v1178 = vunpack.c.l.b16 %v134
  %v1179 = vunpack.c.h.b16 %v134
  %v1180 = vunpack.c.l.b16 %v135
  %v1181 = vunpack.c.h.b16 %v135
  %v1182 = vunpack.c.l.b16 %v136
  %v1183 = vunpack.c.h.b16 %v136
  %v1184 = vunpack.c.l.b16 %v137
  %v1185 = vunpack.c.h.b16 %v137
  %v1186 = vunpack.c.l.b16 %v138
  %v1187 = vunpack.c.h.b16 %v138
  %v1188 = vunpack.c.l.b16 %v139
  %v1189 = vunpack.c.h.b16 %v139
  %v1190 = vunpack.c.l.b16 %v140
  %v1191 = vunpack.c.h.b16 %v140
  %v1192 = vunpack.c.l.b16 %v141
  %v1193 = vunpack.c.h.b16 %v141
  %v1194 = vunpack.c.l.b16 %v142
  %v1195 = vunpack.c.h.b16 %v142
  %v1196 = vunpack.c.l.b16 %v143
  %v1197 = vunpack.c.h.b16 %v143
  %v1198 = vunpack.c.l.b16 %v144
  %v1199 = vunpack.c.h.b16 %v144
  %v1200 = vunpack.c.l.b16 %v145
  %v1201 = vunpack.c.h.b16 %v145
  %v1202 = vunpack.c.l.b16 %v146
  %v1203 = vunpack.c.h.b16 %v146
  %v1204 = vunpack.c.l.b16 %v147
  %v1205 = vunpack.c.h.b16 %v147
  %v1206 = vunpack.c.l.b16 %v148
  %v1207 = vunpack.c.h.b16 %v148
  %v1208 = vunpack.c.l.b16 %v149
  %v1209 = vunpack.c.h.b16 %v149
  %v1210 = vunpack.c.l.b16 %v150
  %v1211 = vunpack.c.h.b16 %v150
  %v1212 = vunpack.c.l.b16 %v151
  %v1213 = vunpack.c.h.b16 %v151
  %v1214 = vunpack.c.l.b16 %v152
  %v1215 = vunpack.c.h.b16 %v152
  %v1216 = vunpack.c.l.b16 %v153
  %v1217 = vunpack.c.h.b16 %v153
  %v1218 = vunpack.c.l.b16 %v154
  %v1219 = vunpack.c.h.b16 %v154
  %v1220 = vunpack.c.l.b16 %v155
  %v1221 = vunpack.c.h.b16 %v155
  %v1222 = vunpack.c.l.b16 %v156
  %v1223 = vunpack.c.h.b16 %v156
  %v1224 = vunpack.c.l.b16 %v157
  %v1225 = vunpack.c.h.b16 %v157
  %v1226 = vunpack.c.l.b16 %v158
  %v1227 = vunpack.c.h.b16 %v158
  %v1228 = vunpack.c.l.b16 %v159
  %v1229 = vunpack.c.h.b16 %v159
  %v1230 = vunpack.c.l.b16 %v160
  %v1231 = vunpack.c.h.b16 %v160
  %v1232 = vunpack.c.l.b16 %v161
  %v1233 = vunpack.c.h.b16 %v161
  %v1234 = vunpack.c.l.b16 %v162
  %v1235 = vunpack.c.h.b16 %v162
  %v1236 = vunpack.c.l.b16 %v163
  %v1237 = vunpack.c.h.b16 %v163
  %v1238 = vunpack.c.l.b16 %v164
  %v1239 = vunpack.c.h.b16 %v164
  %v1240 = vunpack.c.l.b16 %v165
  %v1241 = vunpack.c.h.b16 %v165
  %v1242 = vunpack.c.l.b16 %v166
  %v1243 = vunpack.c.h.b16 %v166
  %v1244 = vunpack.c.l.b16 %v167
  %v1245 = vunpack.c.h.b16 %v167
  %v1246 = vunpack.c.l.b16 %v168
  %v1247 = vunpack.c.h.b16 %v168
  %v1248 = vunpack.c.l.b16 %v169
  %v1249 = vunpack.c.h.b16 %v169
  %v1250 = vunpack.c.l.b16 %v170
  %v1251 = vunpack.c.h.b16 %v170
  %v1252 = vunpack.c.l.b16 %v171
  %v1253 = vunpack.c.h.b16 %v171
  %v1254 = vunpack.c.l.b16 %v172
  %v1255 = vunpack.c.h.b16 %v172
  %v1256 = vunpack.c.l.b16 %v173
  %v1257 = vunpack.c.h.b16 %v173
  %v1258 = vunpack.c.l.b16 %v174
  %v1259 = vunpack.c.h.b16 %v174
  %v1260 = vunpack.c.l.b16 %v175
  %v1261 = vunpack.c.h.b16 %v175
  %v1262 = vunpack.c.l.b16 %v176
  %v1263 = vunpack.c.h.b16 %v176
  %v1264 = vunpack.c.l.b16 %v177
  %v1265 = vunpack.c.h.b16 %v177
  %v1266 = vunpack.c.l.b16 %v178
  %v1267 = vunpack.c.h.b16 %v178
  %v1268 = vunpack.c.l.b16 %v179
  %v1269 = vunpack.c.h.b16 %v179
  %v1270 = vunpack.c.l.b16 %v180
  %v1271 = vunpack.c.h.b16 %v180
  %v1272 = vunpack.c.l.b16 %v181
  %v1273 = vunpack.c.h.b16 %v181
  %v1274 = vunpack.c.l.b16 %v182
  %v1275 = vunpack.c.h.b16 %v182
  %v1276 = vunpack.c.l.b16 %v183
  %v1277 = vunpack.c.h.b16 %v183
  %v1278 = vunpack.c.l.b16 %v184
  %v1279 = vunpack.c.h.b16 %v184
  %v1280 = vunpack.c.l.b16 %v185
  %v1281 = vunpack.c.h.b16 %v185
  %v1282 = vunpack.c.l.b16 %v186
  %v1283 = vunpack.c.h.b16 %v186
  %v1284 = vunpack.c.l.b16 %v187
  %v1285 = vunpack.c.h.b16 %v187
  %v1286 = vunpack.c.l.b16 %v188
  %v1287 = vunpack.c.h.b16 %v188
  %v1288 = vunpack.c.l.b16 %v189
  %v1289 = vunpack.c.h.b16 %v189
  %v1290 = vunpack.c.l.b16 %v190
  %v1291 = vunpack.c.h.b16 %v190
  %v1292 = vunpack.c.l.b16 %v191
  %v1293 = vunpack.c.h.b16 %v191
  %v1294 = vunpack.c.l.b16 %v192
  %v1295 = vunpack.c.h.b16 %v192
  %v1296 = vunpack.c.l.b16 %v193
  %v1297 = vunpack.c.h.b16 %v193
  %v1298 = vunpack.c.l.b16 %v194
  %v1299 = vunpack.c.h.b16 %v194
  %v1300 = vunpack.c.l.b16 %v195
  %v1301 = vunpack.c.h.b16 %v195
  %v1302 = vunpack.c.l.b16 %v196
  %v1303 = vunpack.c.h.b16 %v196
  %v1304 = vunpack.c.l.b16 %v197
  %v1305 = vunpack.c.h.b16 %v197
  %v1306 = vunpack.c.l.b16 %v198
  %v1307 = vunpack.c.h.b16 %v198
  %v1308 = vunpack.c.l.b16 %v199
  %v1309 = vunpack.c.h.b16 %v199
  %v1310 = vunpack.c.l.b16 %v200
  %v1311 = vunpack.c.h.b16 %v200
  %v1312 = vunpack.c.l.b16 %v201
  %v1313 = vunpack.c.h.b16 %v201
  %v1314 = vunpack.c.l.b16 %v202
  %v1315 = vunpack.c.h.b16 %v202
  %v1316 = vunpack.c.l.b16 %v203
  %v1317 = vunpack.c.h.b16 %v203
  %v1318 = vunpack.c.l.b16 %v204
  %v1319 = vunpack.c.h.b16 %v204
  %v1320 = vunpack.c.l.b16 %v205
  %v1321 = vunpack.c.h.b16 %v205
  %v1322 = vunpack.c.l.b16 %v206
  %v1323 = vunpack.c.h.b16 %v206
  %v1324 = vunpack.c.l.b16 %v207
  %v1325 = vunpack.c.h.b16 %v207
  %v1326 = vunpack.c.l.b16 %v208
  %v1327 = vunpack.c.h.b16 %v208
  %v1328 = vunpack.c.l.b16 %v209
  %v1329 = vunpack.c.h.b16 %v209
  %v1330 = vunpack.c.l.b16 %v210
  %v1331 = vunpack.c.h.b16 %v210
  %v1332 = vunpack.c.l.b16 %v211
  %v1333 = vunpack.c.h.b16 %v211
  %v1334 = vunpack.c.l.b16 %v212
  %v1335 = vunpack.c.h.b16 %v212
  %v1336 = vunpack.c.l.b16 %v213
  %v1337 = vunpack.c.h.b16 %v213
  %v1338 = vunpack.c.l.b16 %v214
  %v1339 = vunpack.c.h.b16 %v214
  %v1340 = vunpack.c.l.b16 %v215
  %v1341 = vunpack.c.h.b16 %v215
  %v1342 = vunpack.c.l.b16 %v216
  %v1343 = vunpack.c.h.b16 %v216
  %v1344 = vunpack.c.l.b16 %v217
  %v1345 = vunpack.c.h.b16 %v217
  %v1346 = vunpack.c.l.b16 %v218
  %v1347 = vunpack.c.h.b16 %v218
  %v1348 = vunpack.c.l.b16 %v219
  %v1349 = vunpack.c.h.b16 %v219
  %v1350 = vunpack.c.l.b16 %v220
  %v1351 = vunpack.c.h.b16 %v220
  %v1352 = vunpack.c.l.b16 %v221
  %v1353 = vunpack.c.h.b16 %v221
  %v1354 = vunpack.c.l.b16 %v222
  %v1355 = vunpack.c.h.b16 %v222
  %v1356 = vunpack.c.l.b16 %v223
  %v1357 = vunpack.c.h.b16 %v223
  %v1358 = vunpack.c.l.b16 %v224
  %v1359 = vunpack.c.h.b16 %v224
  %v1360 = vunpack.c.l.b16 %v225
  %v1361 = vunpack.c.h.b16 %v225
  %v1362 = vunpack.c.l.b16 %v226
  %v1363 = vunpack.c.h.b16 %v226
  %v1364 = vunpack.c.l.b16 %v227
  %v1365 = vunpack.c.h.b16 %v227
  %v1366 = vunpack.c.l.b16 %v228
  %v1367 = vunpack.c.h.b16 %v228
  %v1368 = vunpack.c.l.b16 %v229
  %v1369 = vunpack.c.h.b16 %v229
  %v1370 = vunpack.c.l.b16 %v230
  %v1371 = vunpack.c.h.b16 %v230
  %v1372 = vunpack.c.l.b16 %v231
  %v1373 = vunpack.c.h.b16 %v231
  %v1374 = vunpack.c.l.b16 %v232
  %v1375 = vunpack.c.h.b16 %v232
  %v1376 = vunpack.c.l.b16 %v233
  %v1377 = vunpack.c.h.b16 %v233
  %v1378 = vunpack.c.l.b16 %v234
  %v1379 = vunpack.c.h.b16 %v234
  %v1380 = vunpack.c.l.b16 %v235
  %v1381 = vunpack.c.h.b16 %v235
  %v1382 = vunpack.c.l.b16 %v236
  %v1383 = vunpack.c.h.b16 %v236
  %v1384 = vunpack.c.l.b16 %v237
  %v1385 = vunpack.c.h.b16 %v237
  %v1386 = vunpack.c.l.b16 %v238
  %v1387 = vunpack.c.h.b16 %v238
  %v1388 = vunpack.c.l.b16 %v239
  %v1389 = vunpack.c.h.b16 %v239
  %v1390 = vunpack.c.l.b16 %v240
  %v1391 = vunpack.c.h.b16 %v240
  %v1392 = vunpack.c.l.b16 %v241
  %v1393 = vunpack.c.h.b16 %v241
  %v1394 = vunpack.c.l.b16 %v242
  %v1395 = vunpack.c.h.b16 %v242
  %v1396 = vunpack.c.l.b16 %v243
  %v1397 = vunpack.c.h.b16 %v243
  %v1398 = vunpack.c.l.b16 %v244
  %v1399 = vunpack.c.h.b16 %v244
  %v1400 = vunpack.c.l.b16 %v245
  %v1401 = vunpack.c.h.b16 %v245
  %v1402 = vunpack.c.l.b16 %v246
  %v1403 = vunpack.c.h.b16 %v246
  %v1404 = vunpack.c.l.b16 %v247
  %v1405 = vunpack.c.h.b16 %v247
  %v1406 = vunpack.c.l.b16 %v248
  %v1407 = vunpack.c.h.b16 %v248
  %v1408 = vunpack.c.l.b16 %v249
  %v1409 = vunpack.c.h.b16 %v249
  %v1410 = vunpack.c.l.b16 %v250
  %v1411 = vunpack.c.h.b16 %v250
  %v1412 = vunpack.c.l.b16 %v251
  %v1413 = vunpack.c.h.b16 %v251
  %v1414 = vunpack.c.l.b16 %v252
  %v1415 = vunpack.c.h.b16 %v252
  %v1416 = vunpack.c.l.b16 %v253
  %v1417 = vunpack.c.h.b16 %v253
  %v1418 = vunpack.c.l.b16 %v254
  %v1419 = vunpack.c.h.b16 %v254
  %v1420 = vunpack.c.l.b16 %v255
  %v1421 = vunpack.c.h.b16 %v255
  %v1422 = vunpack.c.l.b16 %v256
  %v1423 = vunpack.c.h.b16 %v256
  %v1424 = vunpack.c.l.b16 %v257
  %v1425 = vunpack.c.h.b16 %v257
  %v1426 = vunpack.c.l.b16 %v258
  %v1427 = vunpack.c.h.b16 %v258
  %v1428 = vunpack.c.l.b16 %v259
  %v1429 = vunpack.c.h.b16 %v259
  %v1430 = vunpack.c.l.b16 %v260
  %v1431 = vunpack.c.h.b16 %v260
  %v1432 = vunpack.c.l.b16 %v261
  %v1433 = vunpack.c.h.b16 %v261
  %v1434 = vunpack.c.l.b16 %v262
  %v1435 = vunpack.c.h.b16 %v262
  %v1436 = vunpack.c.l.b16 %v263
  %v1437 = vunpack.c.h.b16 %v263
  %v1438 = vunpack.c.l.b16 %v264
  %v1439 = vunpack.c.h.b16 %v264
  %v1440 = vunpack.c.l.b16 %v265
  %v1441 = vunpack.c.h.b16 %v265
  %v1442 = vunpack.c.l.b16 %v266
  %v1443 = vunpack.c.h.b16 %v266
  %v1444 = vunpack.c.l.b16 %v267
  %v1445 = vunpack.c.h.b16 %v267
  %v1446 = vunpack.c.l.b16 %v268
  %v1447 = vunpack.c.h.b16 %v268
  %v1448 = vunpack.c.l.b16 %v269
  %v1449 = vunpack.c.h.b16 %v269
  %v1450 = vunpack.c.l.b16 %v270
  %v1451 = vunpack.c.h.b16 %v270
  %v1452 = vunpack.c.l.b16 %v271
  %v1453 = vunpack.c.h.b16 %v271
  %v1454 = vunpack.c.l.b16 %v272
  %v1455 = vunpack.c.h.b16 %v272
  %v1456 = vunpack.c.l.b16 %v273
  %v1457 = vunpack.c.h.b16 %v273
  %v1458 = vunpack.c.l.b16 %v274
  %v1459 = vunpack.c.h.b16 %v274
  %v1460 = vunpack.c.l.b16 %v275
  %v1461 = vunpack.c.h.b16 %v275
  %v1462 = vunpack.c.l.b16 %v276
  %v1463 = vunpack.c.h.b16 %v276
  %v1464 = vunpack.c.l.b16 %v277
  %v1465 = vunpack.c.h.b16 %v277
  %v1466 = vunpack.c.l.b16 %v278
  %v1467 = vunpack.c.h.b16 %v278
  %v1468 = vunpack.c.l.b16 %v279
  %v1469 = vunpack.c.h.b16 %v279
  %v1470 = vunpack.c.l.b16 %v280
  %v1471 = vunpack.c.h.b16 %v280
  %v1472 = vunpack.c.l.b16 %v281
  %v1473 = vunpack.c.h.b16 %v281
  %v1474 = vunpack.c.l.b16 %v282
  %v1475 = vunpack.c.h.b16 %v282
  %v1476 = vunpack.c.l.b16 %v283
  %v1477 = vunpack.c.h.b16 %v283
  %v1478 = vunpack.c.l.b16 %v284
  %v1479 = vunpack.c.h.b16 %v284
  %v1480 = vunpack.c.l.b16 %v285
  %v1481 = vunpack.c.h.b16 %v285
  %v1482 = vunpack.c.l.b16 %v286
  %v1483 = vunpack.c.h.b16 %v286
  %v1484 = vunpack.c.l.b16 %v287
  %v1485 = vunpack.c.h.b16 %v287
  %v1486 = vunpack.c.l.b16 %v288
  %v1487 = vunpack.c.h.b16 %v288
  %v1488 = vunpack.c.l.b16 %v289
  %v1489 = vunpack.c.h.b16 %v289
  %v1490 = vunpack.c.l.b16 %v290
  %v1491 = vunpack.c.h.b16 %v290
  %v1492 = vunpack.c.l.b16 %v291
  %v1493 = vunpack.c.h.b16 %v291
  %v1494 = vunpack.c.l.b16 %v292
  %v1495 = vunpack.c.h.b16 %v292
  %v1496 = vunpack.c.l.b16 %v293
  %v1497 = vunpack.c.h.b16 %v293
  %v1498 = vunpack.c.l.b16 %v294
  %v1499 = vunpack.c.h.b16 %v294
  %v1500 = vunpack.c.l.b16 %v295
  %v1501 = vunpack.c.h.b16 %v295
  %v1502 = vunpack.c.l.b16 %v296
  %v1503 = vunpack.c.h.b16 %v296
  %v1504 = vunpack.c.l.b16 %v297
  %v1505 = vunpack.c.h.b16 %v297
  %v1506 = vunpack.c.l.b16 %v298
  %v1507 = vunpack.c.h.b16 %v298
  %v1508 = vunpack.c.l.b16 %v299
  %v1509 = vunpack.c.h.b16 %v299
  %v1510 = vunpack.c.l.b16 %v300
  %v1511 = vunpack.c.h.b16 %v300
  %v1512 = vunpack.c.l.b16 %v301
  %v1513 = vunpack.c.h.b16 %v301
  %v1514 = vunpack.c.l.b16 %v302
  %v1515 = vunpack.c.h.b16 %v302
  %v1516 = vunpack.c.l.b16 %v303
  %v1517 = vunpack.c.h.b16 %v303
  %v1518 = vunpack.c.l.b16 %v304
  %v1519 = vunpack.c.h.b16 %v304
  %v1520 = vunpack.c.l.b16 %v305
  %v1521 = vunpack.c.h.b16 %v305
  %v1522 = vunpack.c.l.b16 %v306
  %v1523 = vunpack.c.h.b16 %v306
  %v1524 = vunpack.c.l.b16 %v307
  %v1525 = vunpack.c.h.b16 %v307
  %v1526 = vunpack.c.l.b16 %v308
  %v1527 = vunpack.c.h.b16 %v308
  %v1528 = vunpack.c.l.b16 %v309
  %v1529 = vunpack.c.h.b16 %v309
  %v1530 = vunpack.c.l.b16 %v310
  %v1531 = vunpack.c.h.b16 %v310
  %v1532 = vunpack.c.l.b16 %v311
  %v1533 = vunpack.c.h.b16 %v311
  %v1534 = vunpack.c.l.b16 %v312
  %v1535 = vunpack.c.h.b16 %v312
  %v1536 = vunpack.c.l.b16 %v313
  %v1537 = vunpack.c.h.b16 %v313
  %v1538 = vunpack.c.l.b16 %v314
  %v1539 = vunpack.c.h.b16 %v314
  %v1540 = vunpack.c.l.b16 %v315
  %v1541 = vunpack.c.h.b16 %v315
  %v1542 = vunpack.c.l.b16 %v316
  %v1543 = vunpack.c.h.b16 %v316
  %v1544 = vunpack.c.l.b16 %v317
  %v1545 = vunpack.c.h.b16 %v317
  %v1546 = vunpack.c.l.b16 %v318
  %v1547 = vunpack.c.h.b16 %v318
  %v1548 = vunpack.c.l.b16 %v319
  %v1549 = vunpack.c.h.b16 %v319
  %v1550 = vunpack.c.l.b16 %v320
  %v1551 = vunpack.c.h.b16 %v320
  %v1552 = vunpack.c.l.b16 %v321
  %v1553 = vunpack.c.h.b16 %v321
  %v1554 = vunpack.c.l.b16 %v322
  %v1555 = vunpack.c.h.b16 %v322
  %v1556 = vunpack.c.l.b16 %v323
  %v1557 = vunpack.c.h.b16 %v323
  %v1558 = vunpack.c.l.b16 %v324
  %v1559 = vunpack.c.h.b16 %v324
  %v1560 = vunpack.c.l.b16 %v325
  %v1561 = vunpack.c.h.b16 %v325
  %v1562 = vunpack.c.l.b16 %v326
  %v1563 = vunpack.c.h.b16 %v326
  %v1564 = vunpack.c.l.b16 %v327
  %v1565 = vunpack.c.h.b16 %v327
  %v1566 = vunpack.c.l.b16 %v328
  %v1567 = vunpack.c.h.b16 %v328
  %v1568 = vunpack.c.l.b16 %v329
  %v1569 = vunpack.c.h.b16 %v329
  %v1570 = vunpack.c.l.b16 %v330
  %v1571 = vunpack.c.h.b16 %v330
  %v1572 = vunpack.c.l.b16 %v331
  %v1573 = vunpack.c.h.b16 %v331
  %v1574 = vunpack.c.l.b16 %v332
  %v1575 = vunpack.c.h.b16 %v332
  %v1576 = vunpack.c.l.b16 %v333
  %v1577 = vunpack.c.h.b16 %v333
  %v1578 = vunpack.c.l.b16 %v334
  %v1579 = vunpack.c.h.b16 %v334
  %v1580 = vunpack.c.l.b16 %v335
  %v1581 = vunpack.c.h.b16 %v335
  %v1582 = vunpack.c.l.b16 %v336
  %v1583 = vunpack.c.h.b16 %v336
  %v1584 = vunpack.c.l.b16 %v337
  %v1585 = vunpack.c.h.b16 %v337
  %v1586 = vunpack.c.l.b16 %v338
  %v1587 = vunpack.c.h.b16 %v338
  %v1588 = vunpack.c.l.b16 %v339
  %v1589 = vunpack.c.h.b16 %v339
  %v1590 = vunpack.c.l.b16 %v340
  %v1591 = vunpack.c.h.b16 %v340
  %v1592 = vunpack.c.l.b16 %v341
  %v1593 = vunpack.c.h.b16 %v341
  %v1594 = vunpack.c.l.b16 %v342
  %v1595 = vunpack.c.h.b16 %v342
  %v1596 = vunpack.c.l.b16 %v343
  %v1597 = vunpack.c.h.b16 %v343
  %v1598 = vunpack.c.l.b16 %v344
  %v1599 = vunpack.c.h.b16 %v344
  %v1600 = vunpack.c.l.b16 %v345
  %v1601 = vunpack.c.h.b16 %v345
  %v1602 = vunpack.c.l.b16 %v346
  %v1603 = vunpack.c.h.b16 %v346
  %v1604 = vunpack.c.l.b16 %v347
  %v1605 = vunpack.c.h.b16 %v347
  %v1606 = vunpack.c.l.b16 %v348
  %v1607 = vunpack.c.h.b16 %v348
  %v1608 = vunpack.c.l.b16 %v349
  %v1609 = vunpack.c.h.b16 %v349
  %v1610 = vunpack.c.l.b16 %v350
  %v1611 = vunpack.c.h.b16 %v350
  %v1612 = vunpack.c.l.b16 %v351
  %v1613 = vunpack.c.h.b16 %v351
  %v1614 = vunpack.c.l.b16 %v352
  %v1615 = vunpack.c.h.b16 %v352
  %v1616 = vunpack.c.l.b16 %v353
  %v1617 = vunpack.c.h.b16 %v353
  %v1618 = vunpack.c.l.b16 %v354
  %v1619 = vunpack.c.h.b16 %v354
  %v1620 = vunpack.c.l.b16 %v355
  %v1621 = vunpack.c.h.b16 %v355
  %v1622 = vunpack.c.l.b16 %v356
  %v1623 = vunpack.c.h.b16 %v356
  %v1624 = vunpack.c.l.b16 %v357
  %v1625 = vunpack.c.h.b16 %v357
  %v1626 = vunpack.c.l.b16 %v358
  %v1627 = vunpack.c.h.b16 %v358
  %v1628 = vunpack.c.l.b16 %v359
  %v1629 = vunpack.c.h.b16 %v359
  %v1630 = vunpack.c.l.b16 %v360
  %v1631 = vunpack.c.h.b16 %v360
  %v1632 = vunpack.c.l.b16 %v361
  %v1633 = vunpack.c.h.b16 %v361
  %v1634 = vunpack.c.l.b16 %v362
  %v1635 = vunpack.c.h.b16 %v362
  %v1636 = vunpack.c.l.b16 %v363
  %v1637 = vunpack.c.h.b16 %v363
  %v1638 = vunpack.c.l.b16 %v364
  %v1639 = vunpack.c.h.b16 %v364
  %v1640 = vunpack.c.l.b16 %v365
  %v1641 = vunpack.c.h.b16 %v365
  %v1642 = vunpack.c.l.b16 %v366
  %v1643 = vunpack.c.h.b16 %v366
  %v1644 = vunpack.c.l.b16 %v367
  %v1645 = vunpack.c.h.b16 %v367
  %v1646 = vunpack.c.l.b16 %v368
  %v1647 = vunpack.c.h.b16 %v368
  %v1648 = vunpack.c.l.b16 %v369
  %v1649 = vunpack.c.h.b16 %v369
  %v1650 = vunpack.c.l.b16 %v370
  %v1651 = vunpack.c.h.b16 %v370
  %v1652 = vunpack.c.l.b16 %v371
  %v1653 = vunpack.c.h.b16 %v371
  %v1654 = vunpack.c.l.b16 %v372
  %v1655 = vunpack.c.h.b16 %v372
  %v1656 = vunpack.c.l.b16 %v373
  %v1657 = vunpack.c.h.b16 %v373
  %v1658 = vunpack.c.l.b16 %v374
  %v1659 = vunpack.c.h.b16 %v374
  %v1660 = vunpack.c.l.b16 %v375
  %v1661 = vunpack.c.h.b16 %v375
  %v1662 = vunpack.c.l.b16 %v376
  %v1663 = vunpack.c.h.b16 %v376
  %v1664 = vunpack.c.l.b16 %v377
  %v1665 = vunpack.c.h.b16 %v377
  %v1666 = vunpack.c.l.b16 %v378
  %v1667 = vunpack.c.h.b16 %v378
  %v1668 = vunpack.c.l.b16 %v379
  %v1669 = vunpack.c.h.b16 %v379
  %v1670 = vunpack.c.l.b16 %v380
  %v1671 = vunpack.c.h.b16 %v380
  %v1672 = vunpack.c.l.b16 %v381
  %v1673 = vunpack.c.h.b16 %v381
  %v1674 = vunpack.c.l.b16 %v382
  %v1675 = vunpack.c.h.b16 %v382
  %v1676 = vunpack.c.l.b16 %v383
  %v1677 = vunpack.c.h.b16 %v383
  %v1678 = vunpack.c.l.b16 %v384
  %v1679 = vunpack.c.h.b16 %v384
  %v1680 = vunpack.c.l.b16 %v385
  %v1681 = vunpack.c.h.b16 %v385
  %v1682 = vunpack.c.l.b16 %v386
  %v1683 = vunpack.c.h.b16 %v386
  %v1684 = vunpack.c.l.b16 %v387
  %v1685 = vunpack.c.h.b16 %v387
  %v1686 = vunpack.c.l.b16 %v388
  %v1687 = vunpack.c.h.b16 %v388
  %v1688 = vunpack.c.l.b16 %v389
  %v1689 = vunpack.c.h.b16 %v389
  %v1690 = vunpack.c.l.b16 %v390
  %v1691 = vunpack.c.h.b16 %v390
  %v1692 = vunpack.c.l.b16 %v391
  %v1693 = vunpack.c.h.b16 %v391
  %v1694 = vunpack.c.l.b16 %v392
  %v1695 = vunpack.c.h.b16 %v392
  %v1696 = vunpack.c.l.b16 %v393
  %v1697 = vunpack.c.h.b16 %v393
  %v1698 = vunpack.c.l.b16 %v394
  %v1699 = vunpack.c.h.b16 %v394
  %v1700 = vunpack.c.l.b16 %v395
  %v1701 = vunpack.c.h.b16 %v395
  %v1702 = vunpack.c.l.b16 %v396
  %v1703 = vunpack.c.h.b16 %v396
  %v1704 = vunpack.c.l.b16 %v397
  %v1705 = vunpack.c.h.b16 %v397
  %v1706 = vunpack.c.l.b16 %v398
  %v1707 = vunpack.c.h.b16 %v398
  %v1708 = vunpack.c.l.b16 %v399
  %v1709 = vunpack.c.h.b16 %v399
  %v1710 = vunpack.c.l.b16 %v400
  %v1711 = vunpack.c.h.b16 %v400
  %v1712 = vunpack.c.l.b16 %v401
  %v1713 = vunpack.c.h.b16 %v401
  %v1714 = vunpack.c.l.b16 %v402
  %v1715 = vunpack.c.h.b16 %v402
  %v1716 = vunpack.c.l.b16 %v403
  %v1717 = vunpack.c.h.b16 %v403
  %v1718 = vunpack.c.l.b16 %v404
  %v1719 = vunpack.c.h.b16 %v404
  %v1720 = vunpack.c.l.b16 %v405
  %v1721 = vunpack.c.h.b16 %v405
  %v1722 = vunpack.c.l.b16 %v406
  %v1723 = vunpack.c.h.b16 %v406
  %v1724 = vunpack.c.l.b16 %v407
  %v1725 = vunpack.c.h.b16 %v407
  %v1726 = vunpack.c.l.b16 %v408
  %v1727 = vunpack.c.h.b16 %v408
  %v1728 = vunpack.c.l.b16 %v409
  %v1729 = vunpack.c.h.b16 %v409
  %v1730 = vunpack.c.l.b16 %v410
  %v1731 = vunpack.c.h.b16 %v410
  %v1732 = vunpack.c.l.b16 %v411
  %v1733 = vunpack.c.h.b16 %v411
  %v1734 = vunpack.c.l.b16 %v412
  %v1735 = vunpack.c.h.b16 %v412
  %v1736 = vunpack.c.l.b16 %v413
  %v1737 = vunpack.c.h.b16 %v413
  %v1738 = vunpack.c.l.b16 %v414
  %v1739 = vunpack.c.h.b16 %v414
  %v1740 = vunpack.c.l.b16 %v415
  %v1741 = vunpack.c.h.b16 %v415
  %v1742 = vunpack.c.l.b16 %v416
  %v1743 = vunpack.c.h.b16 %v416
  %v1744 = vunpack.c.l.b16 %v417
  %v1745 = vunpack.c.h.b16 %v417
  %v1746 = vunpack.c.l.b16 %v418
  %v1747 = vunpack.c.h.b16 %v418
  %v1748 = vunpack.c.l.b16 %v419
  %v1749 = vunpack.c.h.b16 %v419
  %v1750 = vunpack.c.l.b16 %v420
  %v1751 = vunpack.c.h.b16 %v420
  %v1752 = vunpack.c.l.b16 %v421
  %v1753 = vunpack.c.h.b16 %v421
  %v1754 = vunpack.c.l.b16 %v422
  %v1755 = vunpack.c.h.b16 %v422
  %v1756 = vunpack.c.l.b16 %v423
  %v1757 = vunpack.c.h.b16 %v423
  %v1758 = vunpack.c.l.b16 %v424
  %v1759 = vunpack.c.h.b16 %v424
  %v1760 = vunpack.c.l.b16 %v425
  %v1761 = vunpack.c.h.b16 %v425
  %v1762 = vunpack.c.l.b16 %v426
  %v1763 = vunpack.c.h.b16 %v426
  %v1764 = vunpack.c.l.b16 %v427
  %v1765 = vunpack.c.h.b16 %v427
  %v1766 = vunpack.c.l.b16 %v428
  %v1767 = vunpack.c.h.b16 %v428
  %v1768 = vunpack.c.l.b16 %v429
  %v1769 = vunpack.c.h.b16 %v429
  %v1770 = vunpack.c.l.b16 %v430
  %v1771 = vunpack.c.h.b16 %v430
  %v1772 = vunpack.c.l.b16 %v431
  %v1773 = vunpack.c.h.b16 %v431
  %v1774 = vunpack.c.l.b16 %v432
  %v1775 = vunpack.c.h.b16 %v432
  %v1776 = vunpack.c.l.b16 %v433
  %v1777 = vunpack.c.h.b16 %v433
  %v1778 = vunpack.c.l.b16 %v434
  %v1779 = vunpack.c.h.b16 %v434
  %v1780 = vunpack.c.l.b16 %v435
  %v1781 = vunpack.c.h.b16 %v435
  %v1782 = vunpack.c.l.b16 %v436
  %v1783 = vunpack.c.h.b16 %v436
  %v1784 = vunpack.c.l.b16 %v437
  %v1785 = vunpack.c.h.b16 %v437
  %v1786 = vunpack.c.l.b16 %v438
  %v1787 = vunpack.c.h.b16 %v438
  %v1788 = vunpack.c.l.b16 %v439
  %v1789 = vunpack.c.h.b16 %v439
  %v1790 = vunpack.c.l.b16 %v440
  %v1791 = vunpack.c.h.b16 %v440
  %v1792 = vunpack.c.l.b16 %v441
  %v1793 = vunpack.c.h.b16 %v441
  %v1794 = vunpack.c.l.b16 %v442
  %v1795 = vunpack.c.h.b16 %v442
  %v1796 = vunpack.c.l.b16 %v443
  %v1797 = vunpack.c.h.b16 %v443
  %v1798 = vunpack.c.l.b16 %v444
  %v1799 = vunpack.c.h.b16 %v444
  %v1800 = vunpack.c.l.b16 %v445
  %v1801 = vunpack.c.h.b16 %v445
  %v1802 = vunpack.c.l.b16 %v446
  %v1803 = vunpack.c.h.b16 %v446
  %v1804 = vunpack.c.l.b16 %v447
  %v1805 = vunpack.c.h.b16 %v447
  %v1806 = vunpack.c.l.b16 %v448
  %v1807 = vunpack.c.h.b16 %v448
  %v1808 = vunpack.c.l.b16 %v449
  %v1809 = vunpack.c.h.b16 %v449
  %v1810 = vunpack.c.l.b16 %v450
  %v1811 = vunpack.c.h.b16 %v450
  %v1812 = vunpack.c.l.b16 %v451
  %v1813 = vunpack.c.h.b16 %v451
  %v1814 = vunpack.c.l.b16 %v452
  %v1815 = vunpack.c.h.b16 %v452
  %v1816 = vunpack.c.l.b16 %v453
  %v1817 = vunpack.c.h.b16 %v453
  %v1818 = vunpack.c.l.b16 %v454
  %v1819 = vunpack.c.h.b16 %v454
  %v1820 = vunpack.c.l.b16 %v455
  %v1821 = vunpack.c.h.b16 %v455
  %v1822 = vunpack.c.l.b16 %v456
  %v1823 = vunpack.c.h.b16 %v456
  %v1824 = vunpack.c.l.b16 %v457
  %v1825 = vunpack.c.h.b16 %v457
  %v1826 = vunpack.c.l.b16 %v458
  %v1827 = vunpack.c.h.b16 %v458
  %v1828 = vunpack.c.l.b16 %v459
  %v1829 = vunpack.c.h.b16 %v459
  %v1830 = vunpack.c.l.b16 %v460
  %v1831 = vunpack.c.h.b16 %v460
  %v1832 = vunpack.c.l.b16 %v461
  %v1833 = vunpack.c.h.b16 %v461
  %v1834 = vunpack.c.l.b16 %v462
  %v1835 = vunpack.c.h.b16 %v462
  %v1836 = vunpack.c.l.b16 %v463
  %v1837 = vunpack.c.h.b16 %v463
  %v1838 = vunpack.c.l.b16 %v464
  %v1839 = vunpack.c.h.b16 %v464
  %v1840 = vunpack.c.l.b16 %v465
  %v1841 = vunpack.c.h.b16 %v465
  %v1842 = vunpack.c.l.b16 %v466
  %v1843 = vunpack.c.h.b16 %v466
  %v1844 = vunpack.c.l.b16 %v467
  %v1845 = vunpack.c.h.b16 %v467
  %v1846 = vunpack.c.l.b16 %v468
  %v1847 = vunpack.c.h.b16 %v468
  %v1848 = vunpack.c.l.b16 %v469
  %v1849 = vunpack.c.h.b16 %v469
  %v1850 = vunpack.c.l.b16 %v470
  %v1851 = vunpack.c.h.b16 %v470
  %v1852 = vunpack.c.l.b16 %v471
  %v1853 = vunpack.c.h.b16 %v471
  %v1854 = vunpack.c.l.b16 %v472
  %v1855 = vunpack.c.h.b16 %v472
  %v1856 = vunpack.c.l.b16 %v473
  %v1857 = vunpack.c.h.b16 %v473
  %v1858 = vunpack.c.l.b16 %v474
  %v1859 = vunpack.c.h.b16 %v474
  %v1860 = vunpack.c.l.b16 %v475
  %v1861 = vunpack.c.h.b16 %v475
  %v1862 = vunpack.c.l.b16 %v476
  %v1863 = vunpack.c.h.b16 %v476
  %v1864 = vunpack.c.l.b16 %v477
  %v1865 = vunpack.c.h.b16 %v477
  %v1866 = vunpack.c.l.b16 %v478
  %v1867 = vunpack.c.h.b16 %v478
  %v1868 = vunpack.c.l.b16 %v479
  %v1869 = vunpack.c.h.b16 %v479
  %v1870 = vunpack.c.l.b16 %v480
  %v1871 = vunpack.c.h.b16 %v480
  %v1872 = vunpack.c.l.b16 %v481
  %v1873 = vunpack.c.h.b16 %v481
  %v1874 = vunpack.c.l.b16 %v482
  %v1875 = vunpack.c.h.b16 %v482
  %v1876 = vunpack.c.l.b16 %v483
  %v1877 = vunpack.c.h.b16 %v483
  %v1878 = vunpack.c.l.b16 %v484
  %v1879 = vunpack.c.h.b16 %v484
  %v1880 = vunpack.c.l.b16 %v485
  %v1881 = vunpack.c.h.b16 %v485
  %v1882 = vunpack.c.l.b16 %v486
  %v1883 = vunpack.c.h.b16 %v486
  %v1884 = vunpack.c.l.b16 %v487
  %v1885 = vunpack.c.h.b16 %v487
  %v1886 = vpack.c.b16 %v998, %v990
  %v1887 = vpack.c.b16 %v999, %v991
  %v1888 = vpack.c.b16 %v1000, %v992
  %v1889 = vpack.c.b16 %v1001, %v993
  %v1890 = vpack.c.b16 %v1002, %v994
  %v1891 = vpack.c.b16 %v1003, %v995
  %v1892 = vpack.c.b16 %v1004, %v996
  %v1893 = vpack.c.b16 %v1005, %v997
  %v1894 = vpack.c.b16 %v1014, %v1006
  %v1895 = vpack.c.b16 %v1015, %v1007
  %v1896 = vpack.c.b16 %v1016, %v1008
  %v1897 = vpack.c.b16 %v1017, %v1009
  %v1898 = vpack.c.b16 %v1018, %v1010
  %v1899 = vpack.c.b16 %v1019, %v1011
  %v1900 = vpack.c.b16 %v1020, %v1012
  %v1901 = vpack.c.b16 %v1021, %v1013
  %v1902 = vpack.c.b16 %v1030, %v1022
  %v1903 = vpack.c.b16 %v1031, %v1023
  %v1904 = vpack.c.b16 %v1032, %v1024
  %v1905 = vpack.c.b16 %v1033, %v1025
  %v1906 = vpack.c.b16 %v1034, %v1026
  %v1907 = vpack.c.b16 %v1035, %v1027
  %v1908 = vpack.c.b16 %v1036, %v1028
  %v1909 = vpack.c.b16 %v1037, %v1029
  %v1910 = vpack.c.b16 %v1046, %v1038
  %v1911 = vpack.c.b16 %v1047, %v1039
  %v1912 = vpack.c.b16 %v1048, %v1040
  %v1913 = vpack.c.b16 %v1049, %v1041
  %v1914 = vpack.c.b16 %v1050, %v1042
  %v1915 = vpack.c.b16 %v1051, %v1043
  %v1916 = vpack.c.b16 %v1052, %v1044
  %v1917 = vpack.c.b16 %v1053, %v1045
  %v1918 = vpack.c.b16 %v1062, %v1054
  %v1919 = vpack.c.b16 %v1063, %v1055
  %v1920 = vpack.c.b16 %v1064, %v1056
  %v1921 = vpack.c.b16 %v1065, %v1057
  %v1922 = vpack.c.b16 %v1066, %v1058
  %v1923 = vpack.c.b16 %v1067, %v1059
  %v1924 = vpack.c.b16 %v1068, %v1060
  %v1925 = vpack.c.b16 %v1069, %v1061
  %v1926 = vpack.c.b16 %v1078, %v1070
  %v1927 = vpack.c.b16 %v1079, %v1071
  %v1928 = vpack.c.b16 %v1080, %v1072
  %v1929 = vpack.c.b16 %v1081, %v1073
  %v1930 = vpack.c.b16 %v1082, %v1074
  %v1931 = vpack.c.b16 %v1083, %v1075
  %v1932 = vpack.c.b16 %v1084, %v1076
  %v1933 = vpack.c.b16 %v1085, %v1077
  %v1934 = vpack.c.b16 %v1094, %v1086
  %v1935 = vpack.c.b16 %v1095, %v1087
  %v1936 = vpack.c.b16 %v1096, %v1088
  %v1937 = vpack.c.b16 %v1097, %v1089
  %v1938 = vpack.c.b16 %v1098, %v1090
  %v1939 = vpack.c.b16 %v1099, %v1091
  %v1940 = vpack.c.b16 %v1100, %v1092
  %v1941 = vpack.c.b16 %v1101, %v1093
  %v1942 = vpack.c.b16 %v1110, %v1102
  %v1943 = vpack.c.b16 %v1111, %v1103
  %v1944 = vpack.c.b16 %v1112, %v1104
  %v1945 = vpack.c.b16 %v1113, %v1105
  %v1946 = vpack.c.b16 %v1114, %v1106
  %v1947 = vpack.c.b16 %v1115, %v1107
  %v1948 = vpack.c.b16 %v1116, %v1108
  %v1949 = vpack.c.b16 %v1117, %v1109
  %v1950 = vpack.c.b16 %v1126, %v1118
  %v1951 = vpack.c.b16 %v1127, %v1119
  %v1952 = vpack.c.b16 %v1128, %v1120
  %v1953 = vpack.c.b16 %v1129, %v1121
  %v1954 = vpack.c.b16 %v1130, %v1122
  %v1955 = vpack.c.b16 %v1131, %v1123
  %v1956 = vpack.c.b16 %v1132, %v1124
  %v1957 = vpack.c.b16 %v1133, %v1125
  %v1958 = vpack.c.b16 %v1142, %v1134
  %v1959 = vpack.c.b16 %v1143, %v1135
  %v1960 = vpack.c.b16 %v1144, %v1136
  %v1961 = vpack.c.b16 %v1145, %v1137
  %v1962 = vpack.c.b16 %v1146, %v1138
  %v1963 = vpack.c.b16 %v1147, %v1139
  %v1964 = vpack.c.b16 %v1148, %v1140
  %v1965 = vpack.c.b16 %v1149, %v1141
  %v1966 = vpack.c.b16 %v1158, %v1150
  %v1967 = vpack.c.b16 %v1159, %v1151
  %v1968 = vpack.c.b16 %v1160, %v1152
  %v1969 = vpack.c.b16 %v1161, %v1153
  %v1970 = vpack.c.b16 %v1162, %v1154
  %v1971 = vpack.c.b16 %v1163, %v1155
  %v1972 = vpack.c.b16 %v1164, %v1156
  %v1973 = vpack.c.b16 %v1165, %v1157
  %v1974 = vpack.c.b16 %v1174, %v1166
  %v1975 = vpack.c.b16 %v1175, %v1167
  %v1976 = vpack.c.b16 %v1176, %v1168
  %v1977 = vpack.c.b16 %v1177, %v1169
  %v1978 = vpack.c.b16 %v1178, %v1170
  %v1979 = vpack.c.b16 %v1179, %v1171
  %v1980 = vpack.c.b16 %v1180, %v1172
  %v1981 = vpack.c.b16 %v1181, %v1173
  %v1982 = vpack.c.b16 %v1190, %v1182
  %v1983 = vpack.c.b16 %v1191, %v1183
  %v1984 = vpack.c.b16 %v1192, %v1184
  %v1985 = vpack.c.b16 %v1193, %v1185
  %v1986 = vpack.c.b16 %v1194, %v1186
  %v1987 = vpack.c.b16 %v1195, %v1187
  %v1988 = vpack.c.b16 %v1196, %v1188
  %v1989 = vpack.c.b16 %v1197, %v1189
  %v1990 = vpack.c.b16 %v1206, %v1198
  %v1991 = vpack.c.b16 %v1207, %v1199
  %v1992 = vpack.c.b16 %v1208, %v1200
  %v1993 = vpack.c.b16 %v1209, %v1201
  %v1994 = vpack.c.b16 %v1210, %v1202
  %v1995 = vpack.c.b16 %v1211, %v1203
  %v1996 = vpack.c.b16 %v1212, %v1204
  %v1997 = vpack.c.b16 %v1213, %v1205
  %v1998 = vpack.c.b16 %v1222, %v1214
  %v1999 = vpack.c.b16 %v1223, %v1215
  %v2000 = vpack.c.b16 %v1224, %v1216
  %v2001 = vpack.c.b16 %v1225, %v1217
  %v2002 = vpack.c.b16 %v1226, %v1218
  %v2003 = vpack.c.b16 %v1227, %v1219
  %v2004 = vpack.c.b16 %v1228, %v1220
  %v2005 = vpack.c.b16 %v1229, %v1221
  %v2006 = vpack.c.b16 %v1238, %v1230
  %v2007 = vpack.c.b16 %v1239, %v1231
  %v2008 = vpack.c.b16 %v1240, %v1232
  %v2009 = vpack.c.b16 %v1241, %v1233
  %v2010 = vpack.c.b16 %v1242, %v1234
  %v2011 = vpack.c.b16 %v1243, %v1235
  %v2012 = vpack.c.b16 %v1244, %v1236
  %v2013 = vpack.c.b16 %v1245, %v1237
  %v2014 = vpack.c.b16 %v1254, %v1246
  %v2015 = vpack.c.b16 %v1255, %v1247
  %v2016 = vpack.c.b16 %v1256, %v1248
  %v2017 = vpack.c.b16 %v1257, %v1249
  %v2018 = vpack.c.b16 %v1258, %v1250
  %v2019 = vpack.c.b16 %v1259, %v1251
  %v2020 = vpack.c.b16 %v1260, %v1252
  %v2021 = vpack.c.b16 %v1261, %v1253
  %v2022 = vpack.c.b16 %v1270, %v1262
  %v2023 = vpack.c.b16 %v1271, %v1263
  %v2024 = vpack.c.b16 %v1272, %v1264
  %v2025 = vpack.c.b16 %v1273, %v1265
  %v2026 = vpack.c.b16 %v1274, %v1266
  %v2027 = vpack.c.b16 %v1275, %v1267
  %v2028 = vpack.c.b16 %v1276, %v1268
  %v2029 = vpack.c.b16 %v1277, %v1269
  %v2030 = vpack.c.b16 %v1286, %v1278
  %v2031 = vpack.c.b16 %v1287, %v1279
  %v2032 = vpack.c.b16 %v1288, %v1280
  %v2033 = vpack.c.b16 %v1289, %v1281
  %v2034 = vpack.c.b16 %v1290, %v1282
  %v2035 = vpack.c.b16 %v1291, %v1283
  %v2036 = vpack.c.b16 %v1292, %v1284
  %v2037 = vpack.c.b16 %v1293, %v1285
  %v2038 = vpack.c.b16 %v1302, %v1294
  %v2039 = vpack.c.b16 %v1303, %v1295
  %v2040 = vpack.c.b16 %v1304, %v1296
  %v2041 = vpack.c.b16 %v1305, %v1297
  %v2042 = vpack.c.b16 %v1306, %v1298
  %v2043 = vpack.c.b16 %v1307, %v1299
  %v2044 = vpack.c.b16 %v1308, %v1300
  %v2045 = vpack.c.b16 %v1309, %v1301
  %v2046 = vpack.c.b16 %v1318, %v1310
  %v2047 = vpack.c.b16 %v1319, %v1311
  %v2048 = vpack.c.b16 %v1320, %v1312
  %v2049 = vpack.c.b16 %v1321, %v1313
  %v2050 = vpack.c.b16 %v1322, %v1314
  %v2051 = vpack.c.b16 %v1323, %v1315
  %v2052 = vpack.c.b16 %v1324, %v1316
  %v2053 = vpack.c.b16 %v1325, %v1317
  %v2054 = vpack.c.b16 %v1334, %v1326
  %v2055 = vpack.c.b16 %v1335, %v1327
  %v2056 = vpack.c.b16 %v1336, %v1328
  %v2057 = vpack.c.b16 %v1337, %v1329
  %v2058 = vpack.c.b16 %v1338, %v1330
  %v2059 = vpack.c.b16 %v1339, %v1331
  %v2060 = vpack.c.b16 %v1340, %v1332
  %v2061 = vpack.c.b16 %v1341, %v1333
  %v2062 = vpack.c.b16 %v1350, %v1342
  %v2063 = vpack.c.b16 %v1351, %v1343
  %v2064 = vpack.c.b16 %v1352, %v1344
  %v2065 = vpack.c.b16 %v1353, %v1345
  %v2066 = vpack.c.b16 %v1354, %v1346
  %v2067 = vpack.c.b16 %v1355, %v1347
  %v2068 = vpack.c.b16 %v1356, %v1348
  %v2069 = vpack.c.b16 %v1357, %v1349
  %v2070 = vpack.c.b16 %v1366, %v1358
  %v2071 = vpack.c.b16 %v1367, %v1359
  %v2072 = vpack.c.b16 %v1368, %v1360
  %v2073 = vpack.c.b16 %v1369, %v1361
  %v2074 = vpack.c.b16 %v1370, %v1362
  %v2075 = vpack.c.b16 %v1371, %v1363
  %v2076 = vpack.c.b16 %v1372, %v1364
  %v2077 = vpack.c.b16 %v1373, %v1365
  %v2078 = vpack.c.b16 %v1382, %v1374
  %v2079 = vpack.c.b16 %v1383, %v1375
  %v2080 = vpack.c.b16 %v1384, %v1376
  %v2081 = vpack.c.b16 %v1385, %v1377
  %v2082 = vpack.c.b16 %v1386, %v1378
  %v2083 = vpack.c.b16 %v1387, %v1379
  %v2084 = vpack.c.b16 %v1388, %v1380
  %v2085 = vpack.c.b16 %v1389, %v1381
  %v2086 = vpack.c.b16 %v1398, %v1390
  %v2087 = vpack.c.b16 %v1399, %v1391
  %v2088 = vpack.c.b16 %v1400, %v1392
  %v2089 = vpack.c.b16 %v1401, %v1393
  %v2090 = vpack.c.b16 %v1402, %v1394
  %v2091 = vpack.c.b16 %v1403, %v1395
  %v2092 = vpack.c.b16 %v1404, %v1396
  %v2093 = vpack.c.b16 %v1405, %v1397
  %v2094 = vpack.c.b16 %v1414, %v1406
  %v2095 = vpack.c.b16 %v1415, %v1407
  %v2096 = vpack.c.b16 %v1416, %v1408
  %v2097 = vpack.c.b16 %v1417, %v1409
  %v2098 = vpack.c.b16 %v1418, %v1410
  %v2099 = vpack.c.b16 %v1419, %v1411
  %v2100 = vpack.c.b16 %v1420, %v1412
  %v2101 = vpack.c.b16 %v1421, %v1413
  %v2102 = vpack.c.b16 %v1430, %v1422
  %v2103 = vpack.c.b16 %v1431, %v1423
  %v2104 = vpack.c.b16 %v1432, %v1424
  %v2105 = vpack.c.b16 %v1433, %v1425
  %v2106 = vpack.c.b16 %v1434, %v1426
  %v2107 = vpack.c.b16 %v1435, %v1427
  %v2108 = vpack.c.b16 %v1436, %v1428
  %v2109 = vpack.c.b16 %v1437, %v1429
  %v2110 = vpack.c.b16 %v1446, %v1438
  %v2111 = vpack.c.b16 %v1447, %v1439
  %v2112 = vpack.c.b16 %v1448, %v1440
  %v2113 = vpack.c.b16 %v1449, %v1441
  %v2114 = vpack.c.b16 %v1450, %v1442
  %v2115 = vpack.c.b16 %v1451, %v1443
  %v2116 = vpack.c.b16 %v1452, %v1444
  %v2117 = vpack.c.b16 %v1453, %v1445
  %v2118 = vpack.c.b16 %v1462, %v1454
  %v2119 = vpack.c.b16 %v1463, %v1455
  %v2120 = vpack.c.b16 %v1464, %v1456
  %v2121 = vpack.c.b16 %v1465, %v1457
  %v2122 = vpack.c.b16 %v1466, %v1458
  %v2123 = vpack.c.b16 %v1467, %v1459
  %v2124 = vpack.c.b16 %v1468, %v1460
  %v2125 = vpack.c.b16 %v1469, %v1461
  %v2126 = vpack.c.b16 %v1478, %v1470
  %v2127 = vpack.c.b16 %v1479, %v1471
  %v2128 = vpack.c.b16 %v1480, %v1472
  %v2129 = vpack.c.b16 %v1481, %v1473
  %v2130 = vpack.c.b16 %v1482, %v1474
  %v2131 = vpack.c.b16 %v1483, %v1475
  %v2132 = vpack.c.b16 %v1484, %v1476
  %v2133 = vpack.c.b16 %v1485, %v1477
  %v2134 = vpack.c.b16 %v1494, %v1486
  %v2135 = vpack.c.b16 %v1495, %v1487
  %v2136 = vpack.c.b16 %v1496, %v1488
  %v2137 = vpack.c.b16 %v1497, %v1489
  %v2138 = vpack.c.b16 %v1498, %v1490
  %v2139 = vpack.c.b16 %v1499, %v1491
  %v2140 = vpack.c.b16 %v1500, %v1492
  %v2141 = vpack.c.b16 %v1501, %v1493
  %v2142 = vpack.c.b16 %v1510, %v1502
  %v2143 = vpack.c.b16 %v1511, %v1503
  %v2144 = vpack.c.b16 %v1512, %v1504
  %v2145 = vpack.c.b16 %v1513, %v1505
  %v2146 = vpack.c.b16 %v1514, %v1506
  %v2147 = vpack.c.b16 %v1515, %v1507
  %v2148 = vpack.c.b16 %v1516, %v1508
  %v2149 = vpack.c.b16 %v1517, %v1509
  %v2150 = vpack.c.b16 %v1526, %v1518
  %v2151 = vpack.c.b16 %v1527, %v1519
  %v2152 = vpack.c.b16 %v1528, %v1520
  %v2153 = vpack.c.b16 %v1529, %v1521
  %v2154 = vpack.c.b16 %v1530, %v1522
  %v2155 = vpack.c.b16 %v1531, %v1523
  %v2156 = vpack.c.b16 %v1532, %v1524
  %v2157 = vpack.c.b16 %v1533, %v1525
  %v2158 = vpack.c.b16 %v1542, %v1534
  %v2159 = vpack.c.b16 %v1543, %v1535
  %v2160 = vpack.c.b16 %v1544, %v1536
  %v2161 = vpack.c.b16 %v1545, %v1537
  %v2162 = vpack.c.b16 %v1546, %v1538
  %v2163 = vpack.c.b16 %v1547, %v1539
  %v2164 = vpack.c.b16 %v1548, %v1540
  %v2165 = vpack.c.b16 %v1549, %v1541
  %v2166 = vpack.c.b16 %v1558, %v1550
  %v2167 = vpack.c.b16 %v1559, %v1551
  %v2168 = vpack.c.b16 %v1560, %v1552
  %v2169 = vpack.c.b16 %v1561, %v1553
  %v2170 = vpack.c.b16 %v1562, %v1554
  %v2171 = vpack.c.b16 %v1563, %v1555
  %v2172 = vpack.c.b16 %v1564, %v1556
  %v2173 = vpack.c.b16 %v1565, %v1557
  %v2174 = vpack.c.b16 %v1574, %v1566
  %v2175 = vpack.c.b16 %v1575, %v1567
  %v2176 = vpack.c.b16 %v1576, %v1568
  %v2177 = vpack.c.b16 %v1577, %v1569
  %v2178 = vpack.c.b16 %v1578, %v1570
  %v2179 = vpack.c.b16 %v1579, %v1571
  %v2180 = vpack.c.b16 %v1580, %v1572
  %v2181 = vpack.c.b16 %v1581, %v1573
  %v2182 = vpack.c.b16 %v1590, %v1582
  %v2183 = vpack.c.b16 %v1591, %v1583
  %v2184 = vpack.c.b16 %v1592, %v1584
  %v2185 = vpack.c.b16 %v1593, %v1585
  %v2186 = vpack.c.b16 %v1594, %v1586
  %v2187 = vpack.c.b16 %v1595, %v1587
  %v2188 = vpack.c.b16 %v1596, %v1588
  %v2189 = vpack.c.b16 %v1597, %v1589
  %v2190 = vpack.c.b16 %v1606, %v1598
  %v2191 = vpack.c.b16 %v1607, %v1599
  %v2192 = vpack.c.b16 %v1608, %v1600
  %v2193 = vpack.c.b16 %v1609, %v1601
  %v2194 = vpack.c.b16 %v1610, %v1602
  %v2195 = vpack.c.b16 %v1611, %v1603
  %v2196 = vpack.c.b16 %v1612, %v1604
  %v2197 = vpack.c.b16 %v1613, %v1605
  %v2198 = vpack.c.b16 %v1622, %v1614
  %v2199 = vpack.c.b16 %v1623, %v1615
  %v2200 = vpack.c.b16 %v1624, %v1616
  %v2201 = vpack.c.b16 %v1625, %v1617
  %v2202 = vpack.c.b16 %v1626, %v1618
  %v2203 = vpack.c.b16 %v1627, %v1619
  %v2204 = vpack.c.b16 %v1628, %v1620
  %v2205 = vpack.c.b16 %v1629, %v1621
  %v2206 = vpack.c.b16 %v1638, %v1630
  %v2207 = vpack.c.b16 %v1639, %v1631
  %v2208 = vpack.c.b16 %v1640, %v1632
  %v2209 = vpack.c.b16 %v1641, %v1633
  %v2210 = vpack.c.b16 %v1642, %v1634
  %v2211 = vpack.c.b16 %v1643, %v1635
  %v2212 = vpack.c.b16 %v1644, %v1636
  %v2213 = vpack.c.b16 %v1645, %v1637
  %v2214 = vpack.c.b16 %v1654, %v1646
  %v2215 = vpack.c.b16 %v1655, %v1647
  %v2216 = vpack.c.b16 %v1656, %v1648
  %v2217 = vpack.c.b16 %v1657, %v1649
  %v2218 = vpack.c.b16 %v1658, %v1650
  %v2219 = vpack.c.b16 %v1659, %v1651
  %v2220 = vpack.c.b16 %v1660, %v1652
  %v2221 = vpack.c.b16 %v1661, %v1653
  %v2222 = vpack.c.b16 %v1670, %v1662
  %v2223 = vpack.c.b16 %v1671, %v1663
  %v2224 = vpack.c.b16 %v1672, %v1664
  %v2225 = vpack.c.b16 %v1673, %v1665
  %v2226 = vpack.c.b16 %v1674, %v1666
  %v2227 = vpack.c.b16 %v1675, %v1667
  %v2228 = vpack.c.b16 %v1676, %v1668
  %v2229 = vpack.c.b16 %v1677, %v1669
  %v2230 = vpack.c.b16 %v1686, %v1678
  %v2231 = vpack.c.b16 %v1687, %v1679
  %v2232 = vpack.c.b16 %v1688, %v1680
  %v2233 = vpack.c.b16 %v1689, %v1681
  %v2234 = vpack.c.b16 %v1690, %v1682
  %v2235 = vpack.c.b16 %v1691, %v1683
  %v2236 = vpack.c.b16 %v1692, %v1684
  %v2237 = vpack.c.b16 %v1693, %v1685
  %v2238 = vpack.c.b16 %v1702, %v1694
  %v2239 = vpack.c.b16 %v1703, %v1695
  %v2240 = vpack.c.b16 %v1704, %v1696
  %v2241 = vpack.c.b16 %v1705, %v1697
  %v2242 = vpack.c.b16 %v1706, %v1698
  %v2243 = vpack.c.b16 %v1707, %v1699
  %v2244 = vpack.c.b16 %v1708, %v1700
  %v2245 = vpack.c.b16 %v1709, %v1701
  %v2246 = vpack.c.b16 %v1718, %v1710
  %v2247 = vpack.c.b16 %v1719, %v1711
  %v2248 = vpack.c.b16 %v1720, %v1712
  %v2249 = vpack.c.b16 %v1721, %v1713
  %v2250 = vpack.c.b16 %v1722, %v1714
  %v2251 = vpack.c.b16 %v1723, %v1715
  %v2252 = vpack.c.b16 %v1724, %v1716
  %v2253 = vpack.c.b16 %v1725, %v1717
  %v2254 = vpack.c.b16 %v1734, %v1726
  %v2255 = vpack.c.b16 %v1735, %v1727
  %v2256 = vpack.c.b16 %v1736, %v1728
  %v2257 = vpack.c.b16 %v1737, %v1729
  %v2258 = vpack.c.b16 %v1738, %v1730
  %v2259 = vpack.c.b16 %v1739, %v1731
  %v2260 = vpack.c.b16 %v1740, %v1732
  %v2261 = vpack.c.b16 %v1741, %v1733
  %v2262 = vpack.c.b16 %v1750, %v1742
  %v2263 = vpack.c.b16 %v1751, %v1743
  %v2264 = vpack.c.b16 %v1752, %v1744
  %v2265 = vpack.c.b16 %v1753, %v1745
  %v2266 = vpack.c.b16 %v1754, %v1746
  %v2267 = vpack.c.b16 %v1755, %v1747
  %v2268 = vpack.c.b16 %v1756, %v1748
  %v2269 = vpack.c.b16 %v1757, %v1749
  %v2270 = vpack.c.b16 %v1766, %v1758
  %v2271 = vpack.c.b16 %v1767, %v1759
  %v2272 = vpack.c.b16 %v1768, %v1760
  %v2273 = vpack.c.b16 %v1769, %v1761
  %v2274 = vpack.c.b16 %v1770, %v1762
  %v2275 = vpack.c.b16 %v1771, %v1763
  %v2276 = vpack.c.b16 %v1772, %v1764
  %v2277 = vpack.c.b16 %v1773, %v1765
  %v2278 = vpack.c.b16 %v1782, %v1774
  %v2279 = vpack.c.b16 %v1783, %v1775
  %v2280 = vpack.c.b16 %v1784, %v1776
  %v2281 = vpack.c.b16 %v1785, %v1777
  %v2282 = vpack.c.b16 %v1786, %v1778
  %v2283 = vpack.c.b16 %v1787, %v1779
  %v2284 = vpack.c.b16 %v1788, %v1780
  %v2285 = vpack.c.b16 %v1789, %v1781
  %v2286 = vpack.c.b16 %v1798, %v1790
  %v2287 = vpack.c.b16 %v1799, %v1791
  %v2288 = vpack.c.b16 %v1800, %v1792
  %v2289 = vpack.c.b16 %v1801, %v1793
  %v2290 = vpack.c.b16 %v1802, %v1794
  %v2291 = vpack.c.b16 %v1803, %v1795
  %v2292 = vpack.c.b16 %v1804, %v1796
  %v2293 = vpack.c.b16 %v1805, %v1797
  %v2294 = vpack.c.b16 %v1814, %v1806
  %v2295 = vpack.c.b16 %v1815, %v1807
  %v2296 = vpack.c.b16 %v1816, %v1808
  %v2297 = vpack.c.b16 %v1817, %v1809
  %v2298 = vpack.c.b16 %v1818, %v1810
  %v2299 = vpack.c.b16 %v1819, %v1811
  %v2300 = vpack.c.b16 %v1820, %v1812
  %v2301 = vpack.c.b16 %v1821, %v1813
  %v2302 = vpack.c.b16 %v1830, %v1822
  %v2303 = vpack.c.b16 %v1831, %v1823
  %v2304 = vpack.c.b16 %v1832, %v1824
  %v2305 = vpack.c.b16 %v1833, %v1825
  %v2306 = vpack.c.b16 %v1834, %v1826
  %v2307 = vpack.c.b16 %v1835, %v1827
  %v2308 = vpack.c.b16 %v1836, %v1828
  %v2309 = vpack.c.b16 %v1837, %v1829
  %v2310 = vpack.c.b16 %v1846, %v1838
  %v2311 = vpack.c.b16 %v1847, %v1839
  %v2312 = vpack.c.b16 %v1848, %v1840
  %v2313 = vpack.c.b16 %v1849, %v1841
  %v2314 = vpack.c.b16 %v1850, %v1842
  %v2315 = vpack.c.b16 %v1851, %v1843
  %v2316 = vpack.c.b16 %v1852, %v1844
  %v2317 = vpack.c.b16 %v1853, %v1845
  %v2318 = vpack.c.b16 %v1862, %v1854
  %v2319 = vpack.c.b16 %v1863, %v1855
  %v2320 = vpack.c.b16 %v1864, %v1856
  %v2321 = vpack.c.b16 %v1865, %v1857
  %v2322 = vpack.c.b16 %v1866, %v1858
  %v2323 = vpack.c.b16 %v1867, %v1859
  %v2324 = vpack.c.b16 %v1868, %v1860
  %v2325 = vpack.c.b16 %v1869, %v1861
  %v2326 = vpack.c.b16 %v1878, %v1870
  %v2327 = vpack.c.b16 %v1879, %v1871
  %v2328 = vpack.c.b16 %v1880, %v1872
  %v2329 = vpack.c.b16 %v1881, %v1873
  %v2330 = vpack.c.b16 %v1882, %v1874
  %v2331 = vpack.c.b16 %v1883, %v1875
  %v2332 = vpack.c.b16 %v1884, %v1876
  %v2333 = vpack.c.b16 %v1885, %v1877
  %2782 = vmatpush.bf16.msra.mxu0 %v1942
  %2783 = vmatpush.bf16.msra.mxu0 %v1934
  %2784 = vmatpush.bf16.msra.mxu0 %v1926
  %2785 = vmatpush.bf16.msra.mxu0 %v1918
  %2786 = vmatpush.bf16.msra.mxu0 %v1910
  %2787 = vmatpush.bf16.msra.mxu0 %v1902
  %2788 = vmatpush.bf16.msra.mxu0 %v1894
  %2789 = vmatpush.bf16.msra.mxu0 %v1886
  %2790 = vmatmul.bf16.gmra.mxu0 %v528
  %v2791 = vpop.f32.mrf.mxu0
  %v2792 = vadd.f32 %v490, %v2791
  %v2793 = vpop.f32.mrf.mxu0
  %v2794 = vadd.f32 %v490, %v2793
  %2795 = vdwg.mxu0
  %2796 = vmatpush.bf16.msra.mxu0 %v2006
  %2797 = vmatpush.bf16.msra.mxu0 %v1998
  %2798 = vmatpush.bf16.msra.mxu0 %v1990
  %2799 = vmatpush.bf16.msra.mxu0 %v1982
  %2800 = vmatpush.bf16.msra.mxu0 %v1974
  %2801 = vmatpush.bf16.msra.mxu0 %v1966
  %2802 = vmatpush.bf16.msra.mxu0 %v1958
  %2803 = vmatpush.bf16.msra.mxu0 %v1950
  %2804 = vmatmul.bf16.gmra.mxu0 %v529
  %v2805 = vpop.f32.mrf.mxu0
  %v2806 = vadd.f32 %v2792, %v2805
  %v2807 = vpop.f32.mrf.mxu0
  %v2808 = vadd.f32 %v2794, %v2807
  %2809 = vdwg.mxu0
  %2810 = vmatpush.bf16.msra.mxu0 %v2070
  %2811 = vmatpush.bf16.msra.mxu0 %v2062
  %2812 = vmatpush.bf16.msra.mxu0 %v2054
  %2813 = vmatpush.bf16.msra.mxu0 %v2046
  %2814 = vmatpush.bf16.msra.mxu0 %v2038
  %2815 = vmatpush.bf16.msra.mxu0 %v2030
  %2816 = vmatpush.bf16.msra.mxu0 %v2022
  %2817 = vmatpush.bf16.msra.mxu0 %v2014
  %2818 = vmatmul.bf16.gmra.mxu0 %v530
  %v2819 = vpop.f32.mrf.mxu0
  %v2820 = vadd.f32 %v2806, %v2819
  %v2821 = vpop.f32.mrf.mxu0
  %v2822 = vadd.f32 %v2808, %v2821
  %2823 = vdwg.mxu0
  %2824 = vmatpush.bf16.msra.mxu0 %v2134
  %2825 = vmatpush.bf16.msra.mxu0 %v2126
  %2826 = vmatpush.bf16.msra.mxu0 %v2118
  %2827 = vmatpush.bf16.msra.mxu0 %v2110
  %2828 = vmatpush.bf16.msra.mxu0 %v2102
  %2829 = vmatpush.bf16.msra.mxu0 %v2094
  %2830 = vmatpush.bf16.msra.mxu0 %v2086
  %2831 = vmatpush.bf16.msra.mxu0 %v2078
  %2832 = vmatmul.bf16.gmra.mxu0 %v531
  %v2833 = vpop.f32.mrf.mxu0
  %v2834 = vadd.f32 %v2820, %v2833
  %v2835 = vpop.f32.mrf.mxu0
  %v2836 = vadd.f32 %v2822, %v2835
  %2837 = vdwg.mxu0
  %2838 = vmatpush.bf16.msra.mxu0 %v2198
  %2839 = vmatpush.bf16.msra.mxu0 %v2190
  %2840 = vmatpush.bf16.msra.mxu0 %v2182
  %2841 = vmatpush.bf16.msra.mxu0 %v2174
  %2842 = vmatpush.bf16.msra.mxu0 %v2166
  %2843 = vmatpush.bf16.msra.mxu0 %v2158
  %2844 = vmatpush.bf16.msra.mxu0 %v2150
  %2845 = vmatpush.bf16.msra.mxu0 %v2142
  %2846 = vmatmul.bf16.gmra.mxu0 %v532
  %v2847 = vpop.f32.mrf.mxu0
  %v2848 = vadd.f32 %v2834, %v2847
  %v2849 = vpop.f32.mrf.mxu0
  %v2850 = vadd.f32 %v2836, %v2849
  %2851 = vdwg.mxu0
  %2852 = vmatpush.bf16.msra.mxu0 %v2262
  %2853 = vmatpush.bf16.msra.mxu0 %v2254
  %2854 = vmatpush.bf16.msra.mxu0 %v2246
  %2855 = vmatpush.bf16.msra.mxu0 %v2238
  %2856 = vmatpush.bf16.msra.mxu0 %v2230
  %2857 = vmatpush.bf16.msra.mxu0 %v2222
  %2858 = vmatpush.bf16.msra.mxu0 %v2214
  %2859 = vmatpush.bf16.msra.mxu0 %v2206
  %2860 = vmatmul.bf16.gmra.mxu0 %v533
  %v2861 = vpop.f32.mrf.mxu0
  %v2862 = vadd.f32 %v2848, %v2861
  %v2863 = vpop.f32.mrf.mxu0
  %v2864 = vadd.f32 %v2850, %v2863
  %2865 = vdwg.mxu0
  %2866 = vmatpush.bf16.msra.mxu0 %v2326
  %2867 = vmatpush.bf16.msra.mxu0 %v2318
  %2868 = vmatpush.bf16.msra.mxu0 %v2310
  %2869 = vmatpush.bf16.msra.mxu0 %v2302
  %2870 = vmatpush.bf16.msra.mxu0 %v2294
  %2871 = vmatpush.bf16.msra.mxu0 %v2286
  %2872 = vmatpush.bf16.msra.mxu0 %v2278
  %2873 = vmatpush.bf16.msra.mxu0 %v2270
  %2874 = vmatmul.bf16.gmra.mxu0 %v534
  %v2875 = vpop.f32.mrf.mxu0
  %v2876 = vadd.f32 %v2862, %v2875
  %v2877 = vpop.f32.mrf.mxu0
  %v2878 = vadd.f32 %v2864, %v2877
  %2879 = vdwg.mxu0
  %2880 = vmatpush.bf16.msra.mxu0 %v1943
  %2881 = vmatpush.bf16.msra.mxu0 %v1935
  %2882 = vmatpush.bf16.msra.mxu0 %v1927
  %2883 = vmatpush.bf16.msra.mxu0 %v1919
  %2884 = vmatpush.bf16.msra.mxu0 %v1911
  %2885 = vmatpush.bf16.msra.mxu0 %v1903
  %2886 = vmatpush.bf16.msra.mxu0 %v1895
  %2887 = vmatpush.bf16.msra.mxu0 %v1887
  %2888 = vmatmul.bf16.gmra.mxu0 %v528
  %v2889 = vpop.f32.mrf.mxu0
  %v2890 = vadd.f32 %v491, %v2889
  %v2891 = vpop.f32.mrf.mxu0
  %v2892 = vadd.f32 %v491, %v2891
  %2893 = vdwg.mxu0
  %2894 = vmatpush.bf16.msra.mxu0 %v2007
  %2895 = vmatpush.bf16.msra.mxu0 %v1999
  %2896 = vmatpush.bf16.msra.mxu0 %v1991
  %2897 = vmatpush.bf16.msra.mxu0 %v1983
  %2898 = vmatpush.bf16.msra.mxu0 %v1975
  %2899 = vmatpush.bf16.msra.mxu0 %v1967
  %2900 = vmatpush.bf16.msra.mxu0 %v1959
  %2901 = vmatpush.bf16.msra.mxu0 %v1951
  %2902 = vmatmul.bf16.gmra.mxu0 %v529
  %v2903 = vpop.f32.mrf.mxu0
  %v2904 = vadd.f32 %v2890, %v2903
  %v2905 = vpop.f32.mrf.mxu0
  %v2906 = vadd.f32 %v2892, %v2905
  %2907 = vdwg.mxu0
  %2908 = vmatpush.bf16.msra.mxu0 %v2071
  %2909 = vmatpush.bf16.msra.mxu0 %v2063
  %2910 = vmatpush.bf16.msra.mxu0 %v2055
  %2911 = vmatpush.bf16.msra.mxu0 %v2047
  %2912 = vmatpush.bf16.msra.mxu0 %v2039
  %2913 = vmatpush.bf16.msra.mxu0 %v2031
  %2914 = vmatpush.bf16.msra.mxu0 %v2023
  %2915 = vmatpush.bf16.msra.mxu0 %v2015
  %2916 = vmatmul.bf16.gmra.mxu0 %v530
  %v2917 = vpop.f32.mrf.mxu0
  %v2918 = vadd.f32 %v2904, %v2917
  %v2919 = vpop.f32.mrf.mxu0
  %v2920 = vadd.f32 %v2906, %v2919
  %2921 = vdwg.mxu0
  %2922 = vmatpush.bf16.msra.mxu0 %v2135
  %2923 = vmatpush.bf16.msra.mxu0 %v2127
  %2924 = vmatpush.bf16.msra.mxu0 %v2119
  %2925 = vmatpush.bf16.msra.mxu0 %v2111
  %2926 = vmatpush.bf16.msra.mxu0 %v2103
  %2927 = vmatpush.bf16.msra.mxu0 %v2095
  %2928 = vmatpush.bf16.msra.mxu0 %v2087
  %2929 = vmatpush.bf16.msra.mxu0 %v2079
  %2930 = vmatmul.bf16.gmra.mxu0 %v531
  %v2931 = vpop.f32.mrf.mxu0
  %v2932 = vadd.f32 %v2918, %v2931
  %v2933 = vpop.f32.mrf.mxu0
  %v2934 = vadd.f32 %v2920, %v2933
  %2935 = vdwg.mxu0
  %2936 = vmatpush.bf16.msra.mxu0 %v2199
  %2937 = vmatpush.bf16.msra.mxu0 %v2191
  %2938 = vmatpush.bf16.msra.mxu0 %v2183
  %2939 = vmatpush.bf16.msra.mxu0 %v2175
  %2940 = vmatpush.bf16.msra.mxu0 %v2167
  %2941 = vmatpush.bf16.msra.mxu0 %v2159
  %2942 = vmatpush.bf16.msra.mxu0 %v2151
  %2943 = vmatpush.bf16.msra.mxu0 %v2143
  %2944 = vmatmul.bf16.gmra.mxu0 %v532
  %v2945 = vpop.f32.mrf.mxu0
  %v2946 = vadd.f32 %v2932, %v2945
  %v2947 = vpop.f32.mrf.mxu0
  %v2948 = vadd.f32 %v2934, %v2947
  %2949 = vdwg.mxu0
  %2950 = vmatpush.bf16.msra.mxu0 %v2263
  %2951 = vmatpush.bf16.msra.mxu0 %v2255
  %2952 = vmatpush.bf16.msra.mxu0 %v2247
  %2953 = vmatpush.bf16.msra.mxu0 %v2239
  %2954 = vmatpush.bf16.msra.mxu0 %v2231
  %2955 = vmatpush.bf16.msra.mxu0 %v2223
  %2956 = vmatpush.bf16.msra.mxu0 %v2215
  %2957 = vmatpush.bf16.msra.mxu0 %v2207
  %2958 = vmatmul.bf16.gmra.mxu0 %v533
  %v2959 = vpop.f32.mrf.mxu0
  %v2960 = vadd.f32 %v2946, %v2959
  %v2961 = vpop.f32.mrf.mxu0
  %v2962 = vadd.f32 %v2948, %v2961
  %2963 = vdwg.mxu0
  %2964 = vmatpush.bf16.msra.mxu0 %v2327
  %2965 = vmatpush.bf16.msra.mxu0 %v2319
  %2966 = vmatpush.bf16.msra.mxu0 %v2311
  %2967 = vmatpush.bf16.msra.mxu0 %v2303
  %2968 = vmatpush.bf16.msra.mxu0 %v2295
  %2969 = vmatpush.bf16.msra.mxu0 %v2287
  %2970 = vmatpush.bf16.msra.mxu0 %v2279
  %2971 = vmatpush.bf16.msra.mxu0 %v2271
  %2972 = vmatmul.bf16.gmra.mxu0 %v534
  %v2973 = vpop.f32.mrf.mxu0
  %v2974 = vadd.f32 %v2960, %v2973
  %v2975 = vpop.f32.mrf.mxu0
  %v2976 = vadd.f32 %v2962, %v2975
  %2977 = vdwg.mxu0
  %2978 = vmatpush.bf16.msra.mxu0 %v1944
  %2979 = vmatpush.bf16.msra.mxu0 %v1936
  %2980 = vmatpush.bf16.msra.mxu0 %v1928
  %2981 = vmatpush.bf16.msra.mxu0 %v1920
  %2982 = vmatpush.bf16.msra.mxu0 %v1912
  %2983 = vmatpush.bf16.msra.mxu0 %v1904
  %2984 = vmatpush.bf16.msra.mxu0 %v1896
  %2985 = vmatpush.bf16.msra.mxu0 %v1888
  %2986 = vmatmul.bf16.gmra.mxu0 %v528
  %v2987 = vpop.f32.mrf.mxu0
  %v2988 = vadd.f32 %v492, %v2987
  %v2989 = vpop.f32.mrf.mxu0
  %v2990 = vadd.f32 %v492, %v2989
  %2991 = vdwg.mxu0
  %2992 = vmatpush.bf16.msra.mxu0 %v2008
  %2993 = vmatpush.bf16.msra.mxu0 %v2000
  %2994 = vmatpush.bf16.msra.mxu0 %v1992
  %2995 = vmatpush.bf16.msra.mxu0 %v1984
  %2996 = vmatpush.bf16.msra.mxu0 %v1976
  %2997 = vmatpush.bf16.msra.mxu0 %v1968
  %2998 = vmatpush.bf16.msra.mxu0 %v1960
  %2999 = vmatpush.bf16.msra.mxu0 %v1952
  %3000 = vmatmul.bf16.gmra.mxu0 %v529
  %v3001 = vpop.f32.mrf.mxu0
  %v3002 = vadd.f32 %v2988, %v3001
  %v3003 = vpop.f32.mrf.mxu0
  %v3004 = vadd.f32 %v2990, %v3003
  %3005 = vdwg.mxu0
  %3006 = vmatpush.bf16.msra.mxu0 %v2072
  %3007 = vmatpush.bf16.msra.mxu0 %v2064
  %3008 = vmatpush.bf16.msra.mxu0 %v2056
  %3009 = vmatpush.bf16.msra.mxu0 %v2048
  %3010 = vmatpush.bf16.msra.mxu0 %v2040
  %3011 = vmatpush.bf16.msra.mxu0 %v2032
  %3012 = vmatpush.bf16.msra.mxu0 %v2024
  %3013 = vmatpush.bf16.msra.mxu0 %v2016
  %3014 = vmatmul.bf16.gmra.mxu0 %v530
  %v3015 = vpop.f32.mrf.mxu0
  %v3016 = vadd.f32 %v3002, %v3015
  %v3017 = vpop.f32.mrf.mxu0
  %v3018 = vadd.f32 %v3004, %v3017
  %3019 = vdwg.mxu0
  %3020 = vmatpush.bf16.msra.mxu0 %v2136
  %3021 = vmatpush.bf16.msra.mxu0 %v2128
  %3022 = vmatpush.bf16.msra.mxu0 %v2120
  %3023 = vmatpush.bf16.msra.mxu0 %v2112
  %3024 = vmatpush.bf16.msra.mxu0 %v2104
  %3025 = vmatpush.bf16.msra.mxu0 %v2096
  %3026 = vmatpush.bf16.msra.mxu0 %v2088
  %3027 = vmatpush.bf16.msra.mxu0 %v2080
  %3028 = vmatmul.bf16.gmra.mxu0 %v531
  %v3029 = vpop.f32.mrf.mxu0
  %v3030 = vadd.f32 %v3016, %v3029
  %v3031 = vpop.f32.mrf.mxu0
  %v3032 = vadd.f32 %v3018, %v3031
  %3033 = vdwg.mxu0
  %3034 = vmatpush.bf16.msra.mxu0 %v2200
  %3035 = vmatpush.bf16.msra.mxu0 %v2192
  %3036 = vmatpush.bf16.msra.mxu0 %v2184
  %3037 = vmatpush.bf16.msra.mxu0 %v2176
  %3038 = vmatpush.bf16.msra.mxu0 %v2168
  %3039 = vmatpush.bf16.msra.mxu0 %v2160
  %3040 = vmatpush.bf16.msra.mxu0 %v2152
  %3041 = vmatpush.bf16.msra.mxu0 %v2144
  %3042 = vmatmul.bf16.gmra.mxu0 %v532
  %v3043 = vpop.f32.mrf.mxu0
  %v3044 = vadd.f32 %v3030, %v3043
  %v3045 = vpop.f32.mrf.mxu0
  %v3046 = vadd.f32 %v3032, %v3045
  %3047 = vdwg.mxu0
  %3048 = vmatpush.bf16.msra.mxu0 %v2264
  %3049 = vmatpush.bf16.msra.mxu0 %v2256
  %3050 = vmatpush.bf16.msra.mxu0 %v2248
  %3051 = vmatpush.bf16.msra.mxu0 %v2240
  %3052 = vmatpush.bf16.msra.mxu0 %v2232
  %3053 = vmatpush.bf16.msra.mxu0 %v2224
  %3054 = vmatpush.bf16.msra.mxu0 %v2216
  %3055 = vmatpush.bf16.msra.mxu0 %v2208
  %3056 = vmatmul.bf16.gmra.mxu0 %v533
  %v3057 = vpop.f32.mrf.mxu0
  %v3058 = vadd.f32 %v3044, %v3057
  %v3059 = vpop.f32.mrf.mxu0
  %v3060 = vadd.f32 %v3046, %v3059
  %3061 = vdwg.mxu0
  %3062 = vmatpush.bf16.msra.mxu0 %v2328
  %3063 = vmatpush.bf16.msra.mxu0 %v2320
  %3064 = vmatpush.bf16.msra.mxu0 %v2312
  %3065 = vmatpush.bf16.msra.mxu0 %v2304
  %3066 = vmatpush.bf16.msra.mxu0 %v2296
  %3067 = vmatpush.bf16.msra.mxu0 %v2288
  %3068 = vmatpush.bf16.msra.mxu0 %v2280
  %3069 = vmatpush.bf16.msra.mxu0 %v2272
  %3070 = vmatmul.bf16.gmra.mxu0 %v534
  %v3071 = vpop.f32.mrf.mxu0
  %v3072 = vadd.f32 %v3058, %v3071
  %v3073 = vpop.f32.mrf.mxu0
  %v3074 = vadd.f32 %v3060, %v3073
  %3075 = vdwg.mxu0
  %3076 = vmatpush.bf16.msra.mxu0 %v1945
  %3077 = vmatpush.bf16.msra.mxu0 %v1937
  %3078 = vmatpush.bf16.msra.mxu0 %v1929
  %3079 = vmatpush.bf16.msra.mxu0 %v1921
  %3080 = vmatpush.bf16.msra.mxu0 %v1913
  %3081 = vmatpush.bf16.msra.mxu0 %v1905
  %3082 = vmatpush.bf16.msra.mxu0 %v1897
  %3083 = vmatpush.bf16.msra.mxu0 %v1889
  %3084 = vmatmul.bf16.gmra.mxu0 %v528
  %v3085 = vpop.f32.mrf.mxu0
  %v3086 = vadd.f32 %v493, %v3085
  %v3087 = vpop.f32.mrf.mxu0
  %v3088 = vadd.f32 %v493, %v3087
  %3089 = vdwg.mxu0
  %3090 = vmatpush.bf16.msra.mxu0 %v2009
  %3091 = vmatpush.bf16.msra.mxu0 %v2001
  %3092 = vmatpush.bf16.msra.mxu0 %v1993
  %3093 = vmatpush.bf16.msra.mxu0 %v1985
  %3094 = vmatpush.bf16.msra.mxu0 %v1977
  %3095 = vmatpush.bf16.msra.mxu0 %v1969
  %3096 = vmatpush.bf16.msra.mxu0 %v1961
  %3097 = vmatpush.bf16.msra.mxu0 %v1953
  %3098 = vmatmul.bf16.gmra.mxu0 %v529
  %v3099 = vpop.f32.mrf.mxu0
  %v3100 = vadd.f32 %v3086, %v3099
  %v3101 = vpop.f32.mrf.mxu0
  %v3102 = vadd.f32 %v3088, %v3101
  %3103 = vdwg.mxu0
  %3104 = vmatpush.bf16.msra.mxu0 %v2073
  %3105 = vmatpush.bf16.msra.mxu0 %v2065
  %3106 = vmatpush.bf16.msra.mxu0 %v2057
  %3107 = vmatpush.bf16.msra.mxu0 %v2049
  %3108 = vmatpush.bf16.msra.mxu0 %v2041
  %3109 = vmatpush.bf16.msra.mxu0 %v2033
  %3110 = vmatpush.bf16.msra.mxu0 %v2025
  %3111 = vmatpush.bf16.msra.mxu0 %v2017
  %3112 = vmatmul.bf16.gmra.mxu0 %v530
  %v3113 = vpop.f32.mrf.mxu0
  %v3114 = vadd.f32 %v3100, %v3113
  %v3115 = vpop.f32.mrf.mxu0
  %v3116 = vadd.f32 %v3102, %v3115
  %3117 = vdwg.mxu0
  %3118 = vmatpush.bf16.msra.mxu0 %v2137
  %3119 = vmatpush.bf16.msra.mxu0 %v2129
  %3120 = vmatpush.bf16.msra.mxu0 %v2121
  %3121 = vmatpush.bf16.msra.mxu0 %v2113
  %3122 = vmatpush.bf16.msra.mxu0 %v2105
  %3123 = vmatpush.bf16.msra.mxu0 %v2097
  %3124 = vmatpush.bf16.msra.mxu0 %v2089
  %3125 = vmatpush.bf16.msra.mxu0 %v2081
  %3126 = vmatmul.bf16.gmra.mxu0 %v531
  %v3127 = vpop.f32.mrf.mxu0
  %v3128 = vadd.f32 %v3114, %v3127
  %v3129 = vpop.f32.mrf.mxu0
  %v3130 = vadd.f32 %v3116, %v3129
  %3131 = vdwg.mxu0
  %3132 = vmatpush.bf16.msra.mxu0 %v2201
  %3133 = vmatpush.bf16.msra.mxu0 %v2193
  %3134 = vmatpush.bf16.msra.mxu0 %v2185
  %3135 = vmatpush.bf16.msra.mxu0 %v2177
  %3136 = vmatpush.bf16.msra.mxu0 %v2169
  %3137 = vmatpush.bf16.msra.mxu0 %v2161
  %3138 = vmatpush.bf16.msra.mxu0 %v2153
  %3139 = vmatpush.bf16.msra.mxu0 %v2145
  %3140 = vmatmul.bf16.gmra.mxu0 %v532
  %v3141 = vpop.f32.mrf.mxu0
  %v3142 = vadd.f32 %v3128, %v3141
  %v3143 = vpop.f32.mrf.mxu0
  %v3144 = vadd.f32 %v3130, %v3143
  %3145 = vdwg.mxu0
  %3146 = vmatpush.bf16.msra.mxu0 %v2265
  %3147 = vmatpush.bf16.msra.mxu0 %v2257
  %3148 = vmatpush.bf16.msra.mxu0 %v2249
  %3149 = vmatpush.bf16.msra.mxu0 %v2241
  %3150 = vmatpush.bf16.msra.mxu0 %v2233
  %3151 = vmatpush.bf16.msra.mxu0 %v2225
  %3152 = vmatpush.bf16.msra.mxu0 %v2217
  %3153 = vmatpush.bf16.msra.mxu0 %v2209
  %3154 = vmatmul.bf16.gmra.mxu0 %v533
  %v3155 = vpop.f32.mrf.mxu0
  %v3156 = vadd.f32 %v3142, %v3155
  %v3157 = vpop.f32.mrf.mxu0
  %v3158 = vadd.f32 %v3144, %v3157
  %3159 = vdwg.mxu0
  %3160 = vmatpush.bf16.msra.mxu0 %v2329
  %3161 = vmatpush.bf16.msra.mxu0 %v2321
  %3162 = vmatpush.bf16.msra.mxu0 %v2313
  %3163 = vmatpush.bf16.msra.mxu0 %v2305
  %3164 = vmatpush.bf16.msra.mxu0 %v2297
  %3165 = vmatpush.bf16.msra.mxu0 %v2289
  %3166 = vmatpush.bf16.msra.mxu0 %v2281
  %3167 = vmatpush.bf16.msra.mxu0 %v2273
  %3168 = vmatmul.bf16.gmra.mxu0 %v534
  %v3169 = vpop.f32.mrf.mxu0
  %v3170 = vadd.f32 %v3156, %v3169
  %v3171 = vpop.f32.mrf.mxu0
  %v3172 = vadd.f32 %v3158, %v3171
  %3173 = vdwg.mxu0
  %3174 = vmatpush.bf16.msra.mxu0 %v1946
  %3175 = vmatpush.bf16.msra.mxu0 %v1938
  %3176 = vmatpush.bf16.msra.mxu0 %v1930
  %3177 = vmatpush.bf16.msra.mxu0 %v1922
  %3178 = vmatpush.bf16.msra.mxu0 %v1914
  %3179 = vmatpush.bf16.msra.mxu0 %v1906
  %3180 = vmatpush.bf16.msra.mxu0 %v1898
  %3181 = vmatpush.bf16.msra.mxu0 %v1890
  %3182 = vmatmul.bf16.gmra.mxu0 %v528
  %v3183 = vpop.f32.mrf.mxu0
  %v3184 = vadd.f32 %v494, %v3183
  %v3185 = vpop.f32.mrf.mxu0
  %v3186 = vadd.f32 %v494, %v3185
  %3187 = vdwg.mxu0
  %3188 = vmatpush.bf16.msra.mxu0 %v2010
  %3189 = vmatpush.bf16.msra.mxu0 %v2002
  %3190 = vmatpush.bf16.msra.mxu0 %v1994
  %3191 = vmatpush.bf16.msra.mxu0 %v1986
  %3192 = vmatpush.bf16.msra.mxu0 %v1978
  %3193 = vmatpush.bf16.msra.mxu0 %v1970
  %3194 = vmatpush.bf16.msra.mxu0 %v1962
  %3195 = vmatpush.bf16.msra.mxu0 %v1954
  %3196 = vmatmul.bf16.gmra.mxu0 %v529
  %v3197 = vpop.f32.mrf.mxu0
  %v3198 = vadd.f32 %v3184, %v3197
  %v3199 = vpop.f32.mrf.mxu0
  %v3200 = vadd.f32 %v3186, %v3199
  %3201 = vdwg.mxu0
  %3202 = vmatpush.bf16.msra.mxu0 %v2074
  %3203 = vmatpush.bf16.msra.mxu0 %v2066
  %3204 = vmatpush.bf16.msra.mxu0 %v2058
  %3205 = vmatpush.bf16.msra.mxu0 %v2050
  %3206 = vmatpush.bf16.msra.mxu0 %v2042
  %3207 = vmatpush.bf16.msra.mxu0 %v2034
  %3208 = vmatpush.bf16.msra.mxu0 %v2026
  %3209 = vmatpush.bf16.msra.mxu0 %v2018
  %3210 = vmatmul.bf16.gmra.mxu0 %v530
  %v3211 = vpop.f32.mrf.mxu0
  %v3212 = vadd.f32 %v3198, %v3211
  %v3213 = vpop.f32.mrf.mxu0
  %v3214 = vadd.f32 %v3200, %v3213
  %3215 = vdwg.mxu0
  %3216 = vmatpush.bf16.msra.mxu0 %v2138
  %3217 = vmatpush.bf16.msra.mxu0 %v2130
  %3218 = vmatpush.bf16.msra.mxu0 %v2122
  %3219 = vmatpush.bf16.msra.mxu0 %v2114
  %3220 = vmatpush.bf16.msra.mxu0 %v2106
  %3221 = vmatpush.bf16.msra.mxu0 %v2098
  %3222 = vmatpush.bf16.msra.mxu0 %v2090
  %3223 = vmatpush.bf16.msra.mxu0 %v2082
  %3224 = vmatmul.bf16.gmra.mxu0 %v531
  %v3225 = vpop.f32.mrf.mxu0
  %v3226 = vadd.f32 %v3212, %v3225
  %v3227 = vpop.f32.mrf.mxu0
  %v3228 = vadd.f32 %v3214, %v3227
  %3229 = vdwg.mxu0
  %3230 = vmatpush.bf16.msra.mxu0 %v2202
  %3231 = vmatpush.bf16.msra.mxu0 %v2194
  %3232 = vmatpush.bf16.msra.mxu0 %v2186
  %3233 = vmatpush.bf16.msra.mxu0 %v2178
  %3234 = vmatpush.bf16.msra.mxu0 %v2170
  %3235 = vmatpush.bf16.msra.mxu0 %v2162
  %3236 = vmatpush.bf16.msra.mxu0 %v2154
  %3237 = vmatpush.bf16.msra.mxu0 %v2146
  %3238 = vmatmul.bf16.gmra.mxu0 %v532
  %v3239 = vpop.f32.mrf.mxu0
  %v3240 = vadd.f32 %v3226, %v3239
  %v3241 = vpop.f32.mrf.mxu0
  %v3242 = vadd.f32 %v3228, %v3241
  %3243 = vdwg.mxu0
  %3244 = vmatpush.bf16.msra.mxu0 %v2266
  %3245 = vmatpush.bf16.msra.mxu0 %v2258
  %3246 = vmatpush.bf16.msra.mxu0 %v2250
  %3247 = vmatpush.bf16.msra.mxu0 %v2242
  %3248 = vmatpush.bf16.msra.mxu0 %v2234
  %3249 = vmatpush.bf16.msra.mxu0 %v2226
  %3250 = vmatpush.bf16.msra.mxu0 %v2218
  %3251 = vmatpush.bf16.msra.mxu0 %v2210
  %3252 = vmatmul.bf16.gmra.mxu0 %v533
  %v3253 = vpop.f32.mrf.mxu0
  %v3254 = vadd.f32 %v3240, %v3253
  %v3255 = vpop.f32.mrf.mxu0
  %v3256 = vadd.f32 %v3242, %v3255
  %3257 = vdwg.mxu0
  %3258 = vmatpush.bf16.msra.mxu0 %v2330
  %3259 = vmatpush.bf16.msra.mxu0 %v2322
  %3260 = vmatpush.bf16.msra.mxu0 %v2314
  %3261 = vmatpush.bf16.msra.mxu0 %v2306
  %3262 = vmatpush.bf16.msra.mxu0 %v2298
  %3263 = vmatpush.bf16.msra.mxu0 %v2290
  %3264 = vmatpush.bf16.msra.mxu0 %v2282
  %3265 = vmatpush.bf16.msra.mxu0 %v2274
  %3266 = vmatmul.bf16.gmra.mxu0 %v534
  %v3267 = vpop.f32.mrf.mxu0
  %v3268 = vadd.f32 %v3254, %v3267
  %v3269 = vpop.f32.mrf.mxu0
  %v3270 = vadd.f32 %v3256, %v3269
  %3271 = vdwg.mxu0
  %3272 = vmatpush.bf16.msra.mxu0 %v1947
  %3273 = vmatpush.bf16.msra.mxu0 %v1939
  %3274 = vmatpush.bf16.msra.mxu0 %v1931
  %3275 = vmatpush.bf16.msra.mxu0 %v1923
  %3276 = vmatpush.bf16.msra.mxu0 %v1915
  %3277 = vmatpush.bf16.msra.mxu0 %v1907
  %3278 = vmatpush.bf16.msra.mxu0 %v1899
  %3279 = vmatpush.bf16.msra.mxu0 %v1891
  %3280 = vmatmul.bf16.gmra.mxu0 %v528
  %v3281 = vpop.f32.mrf.mxu0
  %v3282 = vadd.f32 %v495, %v3281
  %v3283 = vpop.f32.mrf.mxu0
  %v3284 = vadd.f32 %v495, %v3283
  %3285 = vdwg.mxu0
  %3286 = vmatpush.bf16.msra.mxu0 %v2011
  %3287 = vmatpush.bf16.msra.mxu0 %v2003
  %3288 = vmatpush.bf16.msra.mxu0 %v1995
  %3289 = vmatpush.bf16.msra.mxu0 %v1987
  %3290 = vmatpush.bf16.msra.mxu0 %v1979
  %3291 = vmatpush.bf16.msra.mxu0 %v1971
  %3292 = vmatpush.bf16.msra.mxu0 %v1963
  %3293 = vmatpush.bf16.msra.mxu0 %v1955
  %3294 = vmatmul.bf16.gmra.mxu0 %v529
  %v3295 = vpop.f32.mrf.mxu0
  %v3296 = vadd.f32 %v3282, %v3295
  %v3297 = vpop.f32.mrf.mxu0
  %v3298 = vadd.f32 %v3284, %v3297
  %3299 = vdwg.mxu0
  %3300 = vmatpush.bf16.msra.mxu0 %v2075
  %3301 = vmatpush.bf16.msra.mxu0 %v2067
  %3302 = vmatpush.bf16.msra.mxu0 %v2059
  %3303 = vmatpush.bf16.msra.mxu0 %v2051
  %3304 = vmatpush.bf16.msra.mxu0 %v2043
  %3305 = vmatpush.bf16.msra.mxu0 %v2035
  %3306 = vmatpush.bf16.msra.mxu0 %v2027
  %3307 = vmatpush.bf16.msra.mxu0 %v2019
  %3308 = vmatmul.bf16.gmra.mxu0 %v530
  %v3309 = vpop.f32.mrf.mxu0
  %v3310 = vadd.f32 %v3296, %v3309
  %v3311 = vpop.f32.mrf.mxu0
  %v3312 = vadd.f32 %v3298, %v3311
  %3313 = vdwg.mxu0
  %3314 = vmatpush.bf16.msra.mxu0 %v2139
  %3315 = vmatpush.bf16.msra.mxu0 %v2131
  %3316 = vmatpush.bf16.msra.mxu0 %v2123
  %3317 = vmatpush.bf16.msra.mxu0 %v2115
  %3318 = vmatpush.bf16.msra.mxu0 %v2107
  %3319 = vmatpush.bf16.msra.mxu0 %v2099
  %3320 = vmatpush.bf16.msra.mxu0 %v2091
  %3321 = vmatpush.bf16.msra.mxu0 %v2083
  %3322 = vmatmul.bf16.gmra.mxu0 %v531
  %v3323 = vpop.f32.mrf.mxu0
  %v3324 = vadd.f32 %v3310, %v3323
  %v3325 = vpop.f32.mrf.mxu0
  %v3326 = vadd.f32 %v3312, %v3325
  %3327 = vdwg.mxu0
  %3328 = vmatpush.bf16.msra.mxu0 %v2203
  %3329 = vmatpush.bf16.msra.mxu0 %v2195
  %3330 = vmatpush.bf16.msra.mxu0 %v2187
  %3331 = vmatpush.bf16.msra.mxu0 %v2179
  %3332 = vmatpush.bf16.msra.mxu0 %v2171
  %3333 = vmatpush.bf16.msra.mxu0 %v2163
  %3334 = vmatpush.bf16.msra.mxu0 %v2155
  %3335 = vmatpush.bf16.msra.mxu0 %v2147
  %3336 = vmatmul.bf16.gmra.mxu0 %v532
  %v3337 = vpop.f32.mrf.mxu0
  %v3338 = vadd.f32 %v3324, %v3337
  %v3339 = vpop.f32.mrf.mxu0
  %v3340 = vadd.f32 %v3326, %v3339
  %3341 = vdwg.mxu0
  %3342 = vmatpush.bf16.msra.mxu0 %v2267
  %3343 = vmatpush.bf16.msra.mxu0 %v2259
  %3344 = vmatpush.bf16.msra.mxu0 %v2251
  %3345 = vmatpush.bf16.msra.mxu0 %v2243
  %3346 = vmatpush.bf16.msra.mxu0 %v2235
  %3347 = vmatpush.bf16.msra.mxu0 %v2227
  %3348 = vmatpush.bf16.msra.mxu0 %v2219
  %3349 = vmatpush.bf16.msra.mxu0 %v2211
  %3350 = vmatmul.bf16.gmra.mxu0 %v533
  %v3351 = vpop.f32.mrf.mxu0
  %v3352 = vadd.f32 %v3338, %v3351
  %v3353 = vpop.f32.mrf.mxu0
  %v3354 = vadd.f32 %v3340, %v3353
  %3355 = vdwg.mxu0
  %3356 = vmatpush.bf16.msra.mxu0 %v2331
  %3357 = vmatpush.bf16.msra.mxu0 %v2323
  %3358 = vmatpush.bf16.msra.mxu0 %v2315
  %3359 = vmatpush.bf16.msra.mxu0 %v2307
  %3360 = vmatpush.bf16.msra.mxu0 %v2299
  %3361 = vmatpush.bf16.msra.mxu0 %v2291
  %3362 = vmatpush.bf16.msra.mxu0 %v2283
  %3363 = vmatpush.bf16.msra.mxu0 %v2275
  %3364 = vmatmul.bf16.gmra.mxu0 %v534
  %v3365 = vpop.f32.mrf.mxu0
  %v3366 = vadd.f32 %v3352, %v3365
  %v3367 = vpop.f32.mrf.mxu0
  %v3368 = vadd.f32 %v3354, %v3367
  %3369 = vdwg.mxu0
  %3370 = vmatpush.bf16.msra.mxu0 %v1948
  %3371 = vmatpush.bf16.msra.mxu0 %v1940
  %3372 = vmatpush.bf16.msra.mxu0 %v1932
  %3373 = vmatpush.bf16.msra.mxu0 %v1924
  %3374 = vmatpush.bf16.msra.mxu0 %v1916
  %3375 = vmatpush.bf16.msra.mxu0 %v1908
  %3376 = vmatpush.bf16.msra.mxu0 %v1900
  %3377 = vmatpush.bf16.msra.mxu0 %v1892
  %3378 = vmatmul.bf16.gmra.mxu0 %v528
  %v3379 = vpop.f32.mrf.mxu0
  %v3380 = vadd.f32 %v496, %v3379
  %v3381 = vpop.f32.mrf.mxu0
  %v3382 = vadd.f32 %v496, %v3381
  %3383 = vdwg.mxu0
  %3384 = vmatpush.bf16.msra.mxu0 %v2012
  %3385 = vmatpush.bf16.msra.mxu0 %v2004
  %3386 = vmatpush.bf16.msra.mxu0 %v1996
  %3387 = vmatpush.bf16.msra.mxu0 %v1988
  %3388 = vmatpush.bf16.msra.mxu0 %v1980
  %3389 = vmatpush.bf16.msra.mxu0 %v1972
  %3390 = vmatpush.bf16.msra.mxu0 %v1964
  %3391 = vmatpush.bf16.msra.mxu0 %v1956
  %3392 = vmatmul.bf16.gmra.mxu0 %v529
  %v3393 = vpop.f32.mrf.mxu0
  %v3394 = vadd.f32 %v3380, %v3393
  %v3395 = vpop.f32.mrf.mxu0
  %v3396 = vadd.f32 %v3382, %v3395
  %3397 = vdwg.mxu0
  %3398 = vmatpush.bf16.msra.mxu0 %v2076
  %3399 = vmatpush.bf16.msra.mxu0 %v2068
  %3400 = vmatpush.bf16.msra.mxu0 %v2060
  %3401 = vmatpush.bf16.msra.mxu0 %v2052
  %3402 = vmatpush.bf16.msra.mxu0 %v2044
  %3403 = vmatpush.bf16.msra.mxu0 %v2036
  %3404 = vmatpush.bf16.msra.mxu0 %v2028
  %3405 = vmatpush.bf16.msra.mxu0 %v2020
  %3406 = vmatmul.bf16.gmra.mxu0 %v530
  %v3407 = vpop.f32.mrf.mxu0
  %v3408 = vadd.f32 %v3394, %v3407
  %v3409 = vpop.f32.mrf.mxu0
  %v3410 = vadd.f32 %v3396, %v3409
  %3411 = vdwg.mxu0
  %3412 = vmatpush.bf16.msra.mxu0 %v2140
  %3413 = vmatpush.bf16.msra.mxu0 %v2132
  %3414 = vmatpush.bf16.msra.mxu0 %v2124
  %3415 = vmatpush.bf16.msra.mxu0 %v2116
  %3416 = vmatpush.bf16.msra.mxu0 %v2108
  %3417 = vmatpush.bf16.msra.mxu0 %v2100
  %3418 = vmatpush.bf16.msra.mxu0 %v2092
  %3419 = vmatpush.bf16.msra.mxu0 %v2084
  %3420 = vmatmul.bf16.gmra.mxu0 %v531
  %v3421 = vpop.f32.mrf.mxu0
  %v3422 = vadd.f32 %v3408, %v3421
  %v3423 = vpop.f32.mrf.mxu0
  %v3424 = vadd.f32 %v3410, %v3423
  %3425 = vdwg.mxu0
  %3426 = vmatpush.bf16.msra.mxu0 %v2204
  %3427 = vmatpush.bf16.msra.mxu0 %v2196
  %3428 = vmatpush.bf16.msra.mxu0 %v2188
  %3429 = vmatpush.bf16.msra.mxu0 %v2180
  %3430 = vmatpush.bf16.msra.mxu0 %v2172
  %3431 = vmatpush.bf16.msra.mxu0 %v2164
  %3432 = vmatpush.bf16.msra.mxu0 %v2156
  %3433 = vmatpush.bf16.msra.mxu0 %v2148
  %3434 = vmatmul.bf16.gmra.mxu0 %v532
  %v3435 = vpop.f32.mrf.mxu0
  %v3436 = vadd.f32 %v3422, %v3435
  %v3437 = vpop.f32.mrf.mxu0
  %v3438 = vadd.f32 %v3424, %v3437
  %3439 = vdwg.mxu0
  %3440 = vmatpush.bf16.msra.mxu0 %v2268
  %3441 = vmatpush.bf16.msra.mxu0 %v2260
  %3442 = vmatpush.bf16.msra.mxu0 %v2252
  %3443 = vmatpush.bf16.msra.mxu0 %v2244
  %3444 = vmatpush.bf16.msra.mxu0 %v2236
  %3445 = vmatpush.bf16.msra.mxu0 %v2228
  %3446 = vmatpush.bf16.msra.mxu0 %v2220
  %3447 = vmatpush.bf16.msra.mxu0 %v2212
  %3448 = vmatmul.bf16.gmra.mxu0 %v533
  %v3449 = vpop.f32.mrf.mxu0
  %v3450 = vadd.f32 %v3436, %v3449
  %v3451 = vpop.f32.mrf.mxu0
  %v3452 = vadd.f32 %v3438, %v3451
  %3453 = vdwg.mxu0
  %3454 = vmatpush.bf16.msra.mxu0 %v2332
  %3455 = vmatpush.bf16.msra.mxu0 %v2324
  %3456 = vmatpush.bf16.msra.mxu0 %v2316
  %3457 = vmatpush.bf16.msra.mxu0 %v2308
  %3458 = vmatpush.bf16.msra.mxu0 %v2300
  %3459 = vmatpush.bf16.msra.mxu0 %v2292
  %3460 = vmatpush.bf16.msra.mxu0 %v2284
  %3461 = vmatpush.bf16.msra.mxu0 %v2276
  %3462 = vmatmul.bf16.gmra.mxu0 %v534
  %v3463 = vpop.f32.mrf.mxu0
  %v3464 = vadd.f32 %v3450, %v3463
  %v3465 = vpop.f32.mrf.mxu0
  %v3466 = vadd.f32 %v3452, %v3465
  %3467 = vdwg.mxu0
  %3468 = vmatpush.bf16.msra.mxu0 %v1949
  %3469 = vmatpush.bf16.msra.mxu0 %v1941
  %3470 = vmatpush.bf16.msra.mxu0 %v1933
  %3471 = vmatpush.bf16.msra.mxu0 %v1925
  %3472 = vmatpush.bf16.msra.mxu0 %v1917
  %3473 = vmatpush.bf16.msra.mxu0 %v1909
  %3474 = vmatpush.bf16.msra.mxu0 %v1901
  %3475 = vmatpush.bf16.msra.mxu0 %v1893
  %3476 = vmatmul.bf16.gmra.mxu0 %v528
  %v3477 = vpop.f32.mrf.mxu0
  %v3478 = vadd.f32 %v497, %v3477
  %v3479 = vpop.f32.mrf.mxu0
  %v3480 = vadd.f32 %v497, %v3479
  %3481 = vdwg.mxu0
  %3482 = vmatpush.bf16.msra.mxu0 %v2013
  %3483 = vmatpush.bf16.msra.mxu0 %v2005
  %3484 = vmatpush.bf16.msra.mxu0 %v1997
  %3485 = vmatpush.bf16.msra.mxu0 %v1989
  %3486 = vmatpush.bf16.msra.mxu0 %v1981
  %3487 = vmatpush.bf16.msra.mxu0 %v1973
  %3488 = vmatpush.bf16.msra.mxu0 %v1965
  %3489 = vmatpush.bf16.msra.mxu0 %v1957
  %3490 = vmatmul.bf16.gmra.mxu0 %v529
  %v3491 = vpop.f32.mrf.mxu0
  %v3492 = vadd.f32 %v3478, %v3491
  %v3493 = vpop.f32.mrf.mxu0
  %v3494 = vadd.f32 %v3480, %v3493
  %3495 = vdwg.mxu0
  %3496 = vmatpush.bf16.msra.mxu0 %v2077
  %3497 = vmatpush.bf16.msra.mxu0 %v2069
  %3498 = vmatpush.bf16.msra.mxu0 %v2061
  %3499 = vmatpush.bf16.msra.mxu0 %v2053
  %3500 = vmatpush.bf16.msra.mxu0 %v2045
  %3501 = vmatpush.bf16.msra.mxu0 %v2037
  %3502 = vmatpush.bf16.msra.mxu0 %v2029
  %3503 = vmatpush.bf16.msra.mxu0 %v2021
  %3504 = vmatmul.bf16.gmra.mxu0 %v530
  %v3505 = vpop.f32.mrf.mxu0
  %v3506 = vadd.f32 %v3492, %v3505
  %v3507 = vpop.f32.mrf.mxu0
  %v3508 = vadd.f32 %v3494, %v3507
  %3509 = vdwg.mxu0
  %3510 = vmatpush.bf16.msra.mxu0 %v2141
  %3511 = vmatpush.bf16.msra.mxu0 %v2133
  %3512 = vmatpush.bf16.msra.mxu0 %v2125
  %3513 = vmatpush.bf16.msra.mxu0 %v2117
  %3514 = vmatpush.bf16.msra.mxu0 %v2109
  %3515 = vmatpush.bf16.msra.mxu0 %v2101
  %3516 = vmatpush.bf16.msra.mxu0 %v2093
  %3517 = vmatpush.bf16.msra.mxu0 %v2085
  %3518 = vmatmul.bf16.gmra.mxu0 %v531
  %v3519 = vpop.f32.mrf.mxu0
  %v3520 = vadd.f32 %v3506, %v3519
  %v3521 = vpop.f32.mrf.mxu0
  %v3522 = vadd.f32 %v3508, %v3521
  %3523 = vdwg.mxu0
  %3524 = vmatpush.bf16.msra.mxu0 %v2205
  %3525 = vmatpush.bf16.msra.mxu0 %v2197
  %3526 = vmatpush.bf16.msra.mxu0 %v2189
  %3527 = vmatpush.bf16.msra.mxu0 %v2181
  %3528 = vmatpush.bf16.msra.mxu0 %v2173
  %3529 = vmatpush.bf16.msra.mxu0 %v2165
  %3530 = vmatpush.bf16.msra.mxu0 %v2157
  %3531 = vmatpush.bf16.msra.mxu0 %v2149
  %3532 = vmatmul.bf16.gmra.mxu0 %v532
  %v3533 = vpop.f32.mrf.mxu0
  %v3534 = vadd.f32 %v3520, %v3533
  %v3535 = vpop.f32.mrf.mxu0
  %v3536 = vadd.f32 %v3522, %v3535
  %3537 = vdwg.mxu0
  %3538 = vmatpush.bf16.msra.mxu0 %v2269
  %3539 = vmatpush.bf16.msra.mxu0 %v2261
  %3540 = vmatpush.bf16.msra.mxu0 %v2253
  %3541 = vmatpush.bf16.msra.mxu0 %v2245
  %3542 = vmatpush.bf16.msra.mxu0 %v2237
  %3543 = vmatpush.bf16.msra.mxu0 %v2229
  %3544 = vmatpush.bf16.msra.mxu0 %v2221
  %3545 = vmatpush.bf16.msra.mxu0 %v2213
  %3546 = vmatmul.bf16.gmra.mxu0 %v533
  %v3547 = vpop.f32.mrf.mxu0
  %v3548 = vadd.f32 %v3534, %v3547
  %v3549 = vpop.f32.mrf.mxu0
  %v3550 = vadd.f32 %v3536, %v3549
  %3551 = vdwg.mxu0
  %3552 = vmatpush.bf16.msra.mxu0 %v2333
  %3553 = vmatpush.bf16.msra.mxu0 %v2325
  %3554 = vmatpush.bf16.msra.mxu0 %v2317
  %3555 = vmatpush.bf16.msra.mxu0 %v2309
  %3556 = vmatpush.bf16.msra.mxu0 %v2301
  %3557 = vmatpush.bf16.msra.mxu0 %v2293
  %3558 = vmatpush.bf16.msra.mxu0 %v2285
  %3559 = vmatpush.bf16.msra.mxu0 %v2277
  %3560 = vmatmul.bf16.gmra.mxu0 %v534
  %v3561 = vpop.f32.mrf.mxu0
  %v3562 = vadd.f32 %v3548, %v3561
  %v3563 = vpop.f32.mrf.mxu0
  %v3564 = vadd.f32 %v3550, %v3563
  %3565 = vdwg.mxu0
  %vm3566 = vcmp.gt.f32.partialorder %v2876, 0.0
  %vm3567 = vcmp.gt.f32.partialorder %v2974, 0.0
  %vm3568 = vcmp.gt.f32.partialorder %v3072, 0.0
  %vm3569 = vcmp.gt.f32.partialorder %v3170, 0.0
  %vm3570 = vcmp.gt.f32.partialorder %v3268, 0.0
  %vm3571 = vcmp.gt.f32.partialorder %v3366, 0.0
  %vm3572 = vcmp.gt.f32.partialorder %v3464, 0.0
  %vm3573 = vcmp.gt.f32.partialorder %v3562, 0.0
  %vm3574 = vcmp.gt.f32.partialorder %v2878, 0.0
  %vm3575 = vcmp.gt.f32.partialorder %v2976, 0.0
  %vm3576 = vcmp.gt.f32.partialorder %v3074, 0.0
  %vm3577 = vcmp.gt.f32.partialorder %v3172, 0.0
  %vm3578 = vcmp.gt.f32.partialorder %v3270, 0.0
  %vm3579 = vcmp.gt.f32.partialorder %v3368, 0.0
  %vm3580 = vcmp.gt.f32.partialorder %v3466, 0.0
  %vm3581 = vcmp.gt.f32.partialorder %v3564, 0.0
  %v3582 = vmul.f32 %v2876, 0.2
  %v3583 = vmul.f32 %v2974, 0.2
  %v3584 = vmul.f32 %v3072, 0.2
  %v3585 = vmul.f32 %v3170, 0.2
  %v3586 = vmul.f32 %v3268, 0.2
  %v3587 = vmul.f32 %v3366, 0.2
  %v3588 = vmul.f32 %v3464, 0.2
  %v3589 = vmul.f32 %v3562, 0.2
  %v3590 = vmul.f32 %v2878, 0.2
  %v3591 = vmul.f32 %v2976, 0.2
  %v3592 = vmul.f32 %v3074, 0.2
  %v3593 = vmul.f32 %v3172, 0.2
  %v3594 = vmul.f32 %v3270, 0.2
  %v3595 = vmul.f32 %v3368, 0.2
  %v3596 = vmul.f32 %v3466, 0.2
  %v3597 = vmul.f32 %v3564, 0.2
  %v3598 = vsel %vm3566, %v2876, %v3582
  %v3599 = vsel %vm3567, %v2974, %v3583
  %v3600 = vsel %vm3568, %v3072, %v3584
  %v3601 = vsel %vm3569, %v3170, %v3585
  %v3602 = vsel %vm3570, %v3268, %v3586
  %v3603 = vsel %vm3571, %v3366, %v3587
  %v3604 = vsel %vm3572, %v3464, %v3588
  %v3605 = vsel %vm3573, %v3562, %v3589
  %v3606 = vsel %vm3574, %v2878, %v3590
  %v3607 = vsel %vm3575, %v2976, %v3591
  %v3608 = vsel %vm3576, %v3074, %v3592
  %v3609 = vsel %vm3577, %v3172, %v3593
  %v3610 = vsel %vm3578, %v3270, %v3594
  %v3611 = vsel %vm3579, %v3368, %v3595
  %v3612 = vsel %vm3580, %v3466, %v3596
  %v3613 = vsel %vm3581, %v3564, %v3597
  %v3614 = vpack.c.bf16 %v3606, %v3598
  %v3615 = vpack.c.bf16 %v3607, %v3599
  %v3616 = vpack.c.bf16 %v3608, %v3600
  %v3617 = vpack.c.bf16 %v3609, %v3601
  %v3618 = vpack.c.bf16 %v3610, %v3602
  %v3619 = vpack.c.bf16 %v3611, %v3603
  %v3620 = vpack.c.bf16 %v3612, %v3604
  %v3621 = vpack.c.bf16 %v3613, %v3605
  %v3622 = vld [vmem:[%s3] sm:$0xff]
  %v3623 = vld [vmem:[%s3 + $0x8] sm:$0xff]
  %v3624 = vld [vmem:[%s3 + $0x10] sm:$0xff]
  %v3625 = vld [vmem:[%s3 + $0x18] sm:$0xff]
  %v3626 = vld [vmem:[%s3 + $0x20] sm:$0xff]
  %v3627 = vld [vmem:[%s3 + $0x28] sm:$0xff]
  %v3628 = vld [vmem:[%s3 + $0x30] sm:$0xff]
  %v3629 = vld [vmem:[%s3 + $0x38] sm:$0xff]
  %v3630 = vld [vmem:[%s3 + $0x40] sm:$0xff]
  %v3631 = vld [vmem:[%s3 + $0x48] sm:$0xff]
  %v3632 = vld [vmem:[%s3 + $0x50] sm:$0xff]
  %v3633 = vld [vmem:[%s3 + $0x58] sm:$0xff]
  %v3634 = vld [vmem:[%s3 + $0x60] sm:$0xff]
  %v3635 = vld [vmem:[%s3 + $0x68] sm:$0xff]
  %v3636 = vld [vmem:[%s3 + $0x70] sm:$0xff]
  %v3637 = vld [vmem:[%s3 + $0x78] sm:$0xff]
  %v3638 = vld [vmem:[%s3 + $0x80] sm:$0xff]
  %v3639 = vld [vmem:[%s3 + $0x88] sm:$0xff]
  %v3640 = vld [vmem:[%s3 + $0x90] sm:$0xff]
  %v3641 = vld [vmem:[%s3 + $0x98] sm:$0xff]
  %v3642 = vld [vmem:[%s3 + $0xa0] sm:$0xff]
  %v3643 = vld [vmem:[%s3 + $0xa8] sm:$0xff]
  %v3644 = vld [vmem:[%s3 + $0xb0] sm:$0xff]
  %v3645 = vld [vmem:[%s3 + $0xb8] sm:$0xff]
  %v3646 = vld [vmem:[%s3 + $0xc0] sm:$0xff]
  %v3647 = vld [vmem:[%s3 + $0xc8] sm:$0xff]
  %v3648 = vld [vmem:[%s3 + $0xd0] sm:$0xff]
  %v3649 = vld [vmem:[%s3 + $0xd8] sm:$0xff]
  %v3650 = vld [vmem:[%s3 + $0xe0] sm:$0xff]
  %v3651 = vld [vmem:[%s3 + $0xe8] sm:$0xff]
  %v3652 = vld [vmem:[%s3 + $0xf0] sm:$0xff]
  %v3653 = vld [vmem:[%s3 + $0xf8] sm:$0xff]
  %v3654 = vld [vmem:[%s3 + $0x100] sm:$0xff]
  %v3655 = vld [vmem:[%s3 + $0x108] sm:$0xff]
  %v3656 = vld [vmem:[%s3 + $0x110] sm:$0xff]
  %v3657 = vld [vmem:[%s3 + $0x118] sm:$0xff]
  %v3658 = vld [vmem:[%s3 + $0x120] sm:$0xff]
  %v3659 = vld [vmem:[%s3 + $0x128] sm:$0xff]
  %v3660 = vld [vmem:[%s3 + $0x130] sm:$0xff]
  %v3661 = vld [vmem:[%s3 + $0x138] sm:$0xff]
  %v3662 = vld [vmem:[%s3 + $0x140] sm:$0xff]
  %v3663 = vld [vmem:[%s3 + $0x148] sm:$0xff]
  %v3664 = vld [vmem:[%s3 + $0x150] sm:$0xff]
  %v3665 = vld [vmem:[%s3 + $0x158] sm:$0xff]
  %v3666 = vld [vmem:[%s3 + $0x160] sm:$0xff]
  %v3667 = vld [vmem:[%s3 + $0x168] sm:$0xff]
  %v3668 = vld [vmem:[%s3 + $0x170] sm:$0xff]
  %v3669 = vld [vmem:[%s3 + $0x178] sm:$0xff]
  %v3670 = vld [vmem:[%s3 + $0x180] sm:$0xff]
  %v3671 = vld [vmem:[%s3 + $0x188] sm:$0xff]
  %v3672 = vld [vmem:[%s3 + $0x190] sm:$0xff]
  %v3673 = vld [vmem:[%s3 + $0x198] sm:$0xff]
  %v3674 = vld [vmem:[%s3 + $0x1a0] sm:$0xff]
  %v3675 = vld [vmem:[%s3 + $0x1a8] sm:$0xff]
  %v3676 = vld [vmem:[%s3 + $0x1b0] sm:$0xff]
  %v3677 = vld [vmem:[%s3 + $0x1b8] sm:$0xff]
  %v3678 = vld [vmem:[%s3 + $0x1c0] sm:$0xff]
  %v3679 = vld [vmem:[%s3 + $0x1c8] sm:$0xff]
  %v3680 = vld [vmem:[%s3 + $0x1d0] sm:$0xff]
  %v3681 = vld [vmem:[%s3 + $0x1d8] sm:$0xff]
  %v3682 = vld [vmem:[%s3 + $0x1e0] sm:$0xff]
  %v3683 = vld [vmem:[%s3 + $0x1e8] sm:$0xff]
  %v3684 = vld [vmem:[%s3 + $0x1f0] sm:$0xff]
  %v3685 = vld [vmem:[%s3 + $0x1f8] sm:$0xff]
  %v3686 = vld [vmem:[%s3 + $0x200] sm:$0xff]
  %v3687 = vld [vmem:[%s3 + $0x208] sm:$0xff]
  %v3688 = vld [vmem:[%s3 + $0x210] sm:$0xff]
  %v3689 = vld [vmem:[%s3 + $0x218] sm:$0xff]
  %v3690 = vld [vmem:[%s3 + $0x220] sm:$0xff]
  %v3691 = vld [vmem:[%s3 + $0x228] sm:$0xff]
  %v3692 = vld [vmem:[%s3 + $0x230] sm:$0xff]
  %v3693 = vld [vmem:[%s3 + $0x238] sm:$0xff]
  %v3694 = vld [vmem:[%s3 + $0x240] sm:$0xff]
  %v3695 = vld [vmem:[%s3 + $0x248] sm:$0xff]
  %v3696 = vld [vmem:[%s3 + $0x250] sm:$0xff]
  %v3697 = vld [vmem:[%s3 + $0x258] sm:$0xff]
  %v3698 = vld [vmem:[%s3 + $0x260] sm:$0xff]
  %v3699 = vld [vmem:[%s3 + $0x268] sm:$0xff]
  %v3700 = vld [vmem:[%s3 + $0x270] sm:$0xff]
  %v3701 = vld [vmem:[%s3 + $0x278] sm:$0xff]
  %v3702 = vld [vmem:[%s3 + $0x280] sm:$0xff]
  %v3703 = vld [vmem:[%s3 + $0x288] sm:$0xff]
  %v3704 = vld [vmem:[%s3 + $0x290] sm:$0xff]
  %v3705 = vld [vmem:[%s3 + $0x298] sm:$0xff]
  %v3706 = vld [vmem:[%s3 + $0x2a0] sm:$0xff]
  %v3707 = vld [vmem:[%s3 + $0x2a8] sm:$0xff]
  %v3708 = vld [vmem:[%s3 + $0x2b0] sm:$0xff]
  %v3709 = vld [vmem:[%s3 + $0x2b8] sm:$0xff]
  %v3710 = vld [vmem:[%s3 + $0x2c0] sm:$0xff]
  %v3711 = vld [vmem:[%s3 + $0x2c8] sm:$0xff]
  %v3712 = vld [vmem:[%s3 + $0x2d0] sm:$0xff]
  %v3713 = vld [vmem:[%s3 + $0x2d8] sm:$0xff]
  %v3714 = vld [vmem:[%s3 + $0x2e0] sm:$0xff]
  %v3715 = vld [vmem:[%s3 + $0x2e8] sm:$0xff]
  %v3716 = vld [vmem:[%s3 + $0x2f0] sm:$0xff]
  %v3717 = vld [vmem:[%s3 + $0x2f8] sm:$0xff]
  %v3718 = vld [vmem:[%s3 + $0x300] sm:$0xff]
  %v3719 = vld [vmem:[%s3 + $0x308] sm:$0xff]
  %v3720 = vld [vmem:[%s3 + $0x310] sm:$0xff]
  %v3721 = vld [vmem:[%s3 + $0x318] sm:$0xff]
  %v3722 = vld [vmem:[%s3 + $0x320] sm:$0xff]
  %v3723 = vld [vmem:[%s3 + $0x328] sm:$0xff]
  %v3724 = vld [vmem:[%s3 + $0x330] sm:$0xff]
  %v3725 = vld [vmem:[%s3 + $0x338] sm:$0xff]
  %v3726 = vld [vmem:[%s3 + $0x340] sm:$0xff]
  %v3727 = vld [vmem:[%s3 + $0x348] sm:$0xff]
  %v3728 = vld [vmem:[%s3 + $0x350] sm:$0xff]
  %v3729 = vld [vmem:[%s3 + $0x358] sm:$0xff]
  %v3730 = vld [vmem:[%s3 + $0x360] sm:$0xff]
  %v3731 = vld [vmem:[%s3 + $0x368] sm:$0xff]
  %v3732 = vld [vmem:[%s3 + $0x370] sm:$0xff]
  %v3733 = vld [vmem:[%s3 + $0x378] sm:$0xff]
  %v3734 = vld [vmem:[%s3 + $0x380] sm:$0xff]
  %v3735 = vld [vmem:[%s3 + $0x388] sm:$0xff]
  %v3736 = vld [vmem:[%s3 + $0x390] sm:$0xff]
  %v3737 = vld [vmem:[%s3 + $0x398] sm:$0xff]
  %v3738 = vld [vmem:[%s3 + $0x3a0] sm:$0xff]
  %v3739 = vld [vmem:[%s3 + $0x3a8] sm:$0xff]
  %v3740 = vld [vmem:[%s3 + $0x3b0] sm:$0xff]
  %v3741 = vld [vmem:[%s3 + $0x3b8] sm:$0xff]
  %v3742 = vld [vmem:[%s3 + $0x3c0] sm:$0xff]
  %v3743 = vld [vmem:[%s3 + $0x3c8] sm:$0xff]
  %v3744 = vld [vmem:[%s3 + $0x3d0] sm:$0xff]
  %v3745 = vld [vmem:[%s3 + $0x3d8] sm:$0xff]
  %v3746 = vld [vmem:[%s3 + $0x3e0] sm:$0xff]
  %v3747 = vld [vmem:[%s3 + $0x3e8] sm:$0xff]
  %v3748 = vld [vmem:[%s3 + $0x3f0] sm:$0xff]
  %v3749 = vld [vmem:[%s3 + $0x3f8] sm:$0xff]
  %v3750 = vld [vmem:[%s3 + $0x400] sm:$0xff]
  %v3751 = vld [vmem:[%s3 + $0x408] sm:$0xff]
  %v3752 = vld [vmem:[%s3 + $0x410] sm:$0xff]
  %v3753 = vld [vmem:[%s3 + $0x418] sm:$0xff]
  %v3754 = vld [vmem:[%s3 + $0x420] sm:$0xff]
  %v3755 = vld [vmem:[%s3 + $0x428] sm:$0xff]
  %v3756 = vld [vmem:[%s3 + $0x430] sm:$0xff]
  %v3757 = vld [vmem:[%s3 + $0x438] sm:$0xff]
  %v3758 = vld [vmem:[%s3 + $0x440] sm:$0xff]
  %v3759 = vld [vmem:[%s3 + $0x448] sm:$0xff]
  %v3760 = vld [vmem:[%s3 + $0x450] sm:$0xff]
  %v3761 = vld [vmem:[%s3 + $0x458] sm:$0xff]
  %v3762 = vld [vmem:[%s3 + $0x460] sm:$0xff]
  %v3763 = vld [vmem:[%s3 + $0x468] sm:$0xff]
  %v3764 = vld [vmem:[%s3 + $0x470] sm:$0xff]
  %v3765 = vld [vmem:[%s3 + $0x478] sm:$0xff]
  %v3766 = vld [vmem:[%s3 + $0x480] sm:$0xff]
  %v3767 = vld [vmem:[%s3 + $0x488] sm:$0xff]
  %v3768 = vld [vmem:[%s3 + $0x490] sm:$0xff]
  %v3769 = vld [vmem:[%s3 + $0x498] sm:$0xff]
  %v3770 = vld [vmem:[%s3 + $0x4a0] sm:$0xff]
  %v3771 = vld [vmem:[%s3 + $0x4a8] sm:$0xff]
  %v3772 = vld [vmem:[%s3 + $0x4b0] sm:$0xff]
  %v3773 = vld [vmem:[%s3 + $0x4b8] sm:$0xff]
  %v3774 = vld [vmem:[%s3 + $0x4c0] sm:$0xff]
  %v3775 = vld [vmem:[%s3 + $0x4c8] sm:$0xff]
  %v3776 = vld [vmem:[%s3 + $0x4d0] sm:$0xff]
  %v3777 = vld [vmem:[%s3 + $0x4d8] sm:$0xff]
  %v3778 = vld [vmem:[%s3 + $0x4e0] sm:$0xff]
  %v3779 = vld [vmem:[%s3 + $0x4e8] sm:$0xff]
  %v3780 = vld [vmem:[%s3 + $0x4f0] sm:$0xff]
  %v3781 = vld [vmem:[%s3 + $0x4f8] sm:$0xff]
  %v3782 = vld [vmem:[%s3 + $0x500] sm:$0xff]
  %v3783 = vld [vmem:[%s3 + $0x508] sm:$0xff]
  %v3784 = vld [vmem:[%s3 + $0x510] sm:$0xff]
  %v3785 = vld [vmem:[%s3 + $0x518] sm:$0xff]
  %v3786 = vld [vmem:[%s3 + $0x520] sm:$0xff]
  %v3787 = vld [vmem:[%s3 + $0x528] sm:$0xff]
  %v3788 = vld [vmem:[%s3 + $0x530] sm:$0xff]
  %v3789 = vld [vmem:[%s3 + $0x538] sm:$0xff]
  %v3790 = vld [vmem:[%s3 + $0x540] sm:$0xff]
  %v3791 = vld [vmem:[%s3 + $0x548] sm:$0xff]
  %v3792 = vld [vmem:[%s3 + $0x550] sm:$0xff]
  %v3793 = vld [vmem:[%s3 + $0x558] sm:$0xff]
  %v3794 = vld [vmem:[%s3 + $0x560] sm:$0xff]
  %v3795 = vld [vmem:[%s3 + $0x568] sm:$0xff]
  %v3796 = vld [vmem:[%s3 + $0x570] sm:$0xff]
  %v3797 = vld [vmem:[%s3 + $0x578] sm:$0xff]
  %v3798 = vld [vmem:[%s3 + $0x580] sm:$0xff]
  %v3799 = vld [vmem:[%s3 + $0x588] sm:$0xff]
  %v3800 = vld [vmem:[%s3 + $0x590] sm:$0xff]
  %v3801 = vld [vmem:[%s3 + $0x598] sm:$0xff]
  %v3802 = vld [vmem:[%s3 + $0x5a0] sm:$0xff]
  %v3803 = vld [vmem:[%s3 + $0x5a8] sm:$0xff]
  %v3804 = vld [vmem:[%s3 + $0x5b0] sm:$0xff]
  %v3805 = vld [vmem:[%s3 + $0x5b8] sm:$0xff]
  %v3806 = vld [vmem:[%s3 + $0x5c0] sm:$0xff]
  %v3807 = vld [vmem:[%s3 + $0x5c8] sm:$0xff]
  %v3808 = vld [vmem:[%s3 + $0x5d0] sm:$0xff]
  %v3809 = vld [vmem:[%s3 + $0x5d8] sm:$0xff]
  %v3810 = vld [vmem:[%s3 + $0x5e0] sm:$0xff]
  %v3811 = vld [vmem:[%s3 + $0x5e8] sm:$0xff]
  %v3812 = vld [vmem:[%s3 + $0x5f0] sm:$0xff]
  %v3813 = vld [vmem:[%s3 + $0x5f8] sm:$0xff]
  %v3814 = vld [vmem:[%s3 + $0x600] sm:$0xff]
  %v3815 = vld [vmem:[%s3 + $0x608] sm:$0xff]
  %v3816 = vld [vmem:[%s3 + $0x610] sm:$0xff]
  %v3817 = vld [vmem:[%s3 + $0x618] sm:$0xff]
  %v3818 = vld [vmem:[%s3 + $0x620] sm:$0xff]
  %v3819 = vld [vmem:[%s3 + $0x628] sm:$0xff]
  %v3820 = vld [vmem:[%s3 + $0x630] sm:$0xff]
  %v3821 = vld [vmem:[%s3 + $0x638] sm:$0xff]
  %v3822 = vld [vmem:[%s3 + $0x640] sm:$0xff]
  %v3823 = vld [vmem:[%s3 + $0x648] sm:$0xff]
  %v3824 = vld [vmem:[%s3 + $0x650] sm:$0xff]
  %v3825 = vld [vmem:[%s3 + $0x658] sm:$0xff]
  %v3826 = vld [vmem:[%s3 + $0x660] sm:$0xff]
  %v3827 = vld [vmem:[%s3 + $0x668] sm:$0xff]
  %v3828 = vld [vmem:[%s3 + $0x670] sm:$0xff]
  %v3829 = vld [vmem:[%s3 + $0x678] sm:$0xff]
  %v3830 = vld [vmem:[%s3 + $0x680] sm:$0xff]
  %v3831 = vld [vmem:[%s3 + $0x688] sm:$0xff]
  %v3832 = vld [vmem:[%s3 + $0x690] sm:$0xff]
  %v3833 = vld [vmem:[%s3 + $0x698] sm:$0xff]
  %v3834 = vld [vmem:[%s3 + $0x6a0] sm:$0xff]
  %v3835 = vld [vmem:[%s3 + $0x6a8] sm:$0xff]
  %v3836 = vld [vmem:[%s3 + $0x6b0] sm:$0xff]
  %v3837 = vld [vmem:[%s3 + $0x6b8] sm:$0xff]
  %v3838 = vld [vmem:[%s3 + $0x6c0] sm:$0xff]
  %v3839 = vld [vmem:[%s3 + $0x6c8] sm:$0xff]
  %v3840 = vld [vmem:[%s3 + $0x6d0] sm:$0xff]
  %v3841 = vld [vmem:[%s3 + $0x6d8] sm:$0xff]
  %v3842 = vld [vmem:[%s3 + $0x6e0] sm:$0xff]
  %v3843 = vld [vmem:[%s3 + $0x6e8] sm:$0xff]
  %v3844 = vld [vmem:[%s3 + $0x6f0] sm:$0xff]
  %v3845 = vld [vmem:[%s3 + $0x6f8] sm:$0xff]
  %v3846 = vld [vmem:[%s3 + $0x700] sm:$0xff]
  %v3847 = vld [vmem:[%s3 + $0x708] sm:$0xff]
  %v3848 = vld [vmem:[%s3 + $0x710] sm:$0xff]
  %v3849 = vld [vmem:[%s3 + $0x718] sm:$0xff]
  %v3850 = vld [vmem:[%s3 + $0x720] sm:$0xff]
  %v3851 = vld [vmem:[%s3 + $0x728] sm:$0xff]
  %v3852 = vld [vmem:[%s3 + $0x730] sm:$0xff]
  %v3853 = vld [vmem:[%s3 + $0x738] sm:$0xff]
  %v3854 = vld [vmem:[%s3 + $0x740] sm:$0xff]
  %v3855 = vld [vmem:[%s3 + $0x748] sm:$0xff]
  %v3856 = vld [vmem:[%s3 + $0x750] sm:$0xff]
  %v3857 = vld [vmem:[%s3 + $0x758] sm:$0xff]
  %v3858 = vld [vmem:[%s3 + $0x760] sm:$0xff]
  %v3859 = vld [vmem:[%s3 + $0x768] sm:$0xff]
  %v3860 = vld [vmem:[%s3 + $0x770] sm:$0xff]
  %v3861 = vld [vmem:[%s3 + $0x778] sm:$0xff]
  %v3862 = vld [vmem:[%s3 + $0x780] sm:$0xff]
  %v3863 = vld [vmem:[%s3 + $0x788] sm:$0xff]
  %v3864 = vld [vmem:[%s3 + $0x790] sm:$0xff]
  %v3865 = vld [vmem:[%s3 + $0x798] sm:$0xff]
  %v3866 = vld [vmem:[%s3 + $0x7a0] sm:$0xff]
  %v3867 = vld [vmem:[%s3 + $0x7a8] sm:$0xff]
  %v3868 = vld [vmem:[%s3 + $0x7b0] sm:$0xff]
  %v3869 = vld [vmem:[%s3 + $0x7b8] sm:$0xff]
  %v3870 = vld [vmem:[%s3 + $0x7c0] sm:$0xff]
  %v3871 = vld [vmem:[%s3 + $0x7c8] sm:$0xff]
  %v3872 = vld [vmem:[%s3 + $0x7d0] sm:$0xff]
  %v3873 = vld [vmem:[%s3 + $0x7d8] sm:$0xff]
  %v3874 = vld [vmem:[%s3 + $0x7e0] sm:$0xff]
  %v3875 = vld [vmem:[%s3 + $0x7e8] sm:$0xff]
  %v3876 = vld [vmem:[%s3 + $0x7f0] sm:$0xff]
  %v3877 = vld [vmem:[%s3 + $0x7f8] sm:$0xff]
  %v3878 = vld [vmem:[%s4] sm:$0xf]
  %v3880 = vperm.slane %v3878, 0
  %v3881 = vperm.slane %v3878, 1
  %v3882 = vperm.slane %v3878, 2
  %v3883 = vperm.slane %v3878, 3
  %v4144 = vunpack.c.l.b16 %v3622
  %v4145 = vunpack.c.h.b16 %v3622
  %v4146 = vunpack.c.l.b16 %v3623
  %v4147 = vunpack.c.h.b16 %v3623
  %v4148 = vunpack.c.l.b16 %v3624
  %v4149 = vunpack.c.h.b16 %v3624
  %v4150 = vunpack.c.l.b16 %v3625
  %v4151 = vunpack.c.h.b16 %v3625
  %v4152 = vunpack.c.l.b16 %v3626
  %v4153 = vunpack.c.h.b16 %v3626
  %v4154 = vunpack.c.l.b16 %v3627
  %v4155 = vunpack.c.h.b16 %v3627
  %v4156 = vunpack.c.l.b16 %v3628
  %v4157 = vunpack.c.h.b16 %v3628
  %v4158 = vunpack.c.l.b16 %v3629
  %v4159 = vunpack.c.h.b16 %v3629
  %v4160 = vunpack.c.l.b16 %v3630
  %v4161 = vunpack.c.h.b16 %v3630
  %v4162 = vunpack.c.l.b16 %v3631
  %v4163 = vunpack.c.h.b16 %v3631
  %v4164 = vunpack.c.l.b16 %v3632
  %v4165 = vunpack.c.h.b16 %v3632
  %v4166 = vunpack.c.l.b16 %v3633
  %v4167 = vunpack.c.h.b16 %v3633
  %v4168 = vunpack.c.l.b16 %v3634
  %v4169 = vunpack.c.h.b16 %v3634
  %v4170 = vunpack.c.l.b16 %v3635
  %v4171 = vunpack.c.h.b16 %v3635
  %v4172 = vunpack.c.l.b16 %v3636
  %v4173 = vunpack.c.h.b16 %v3636
  %v4174 = vunpack.c.l.b16 %v3637
  %v4175 = vunpack.c.h.b16 %v3637
  %v4176 = vunpack.c.l.b16 %v3638
  %v4177 = vunpack.c.h.b16 %v3638
  %v4178 = vunpack.c.l.b16 %v3639
  %v4179 = vunpack.c.h.b16 %v3639
  %v4180 = vunpack.c.l.b16 %v3640
  %v4181 = vunpack.c.h.b16 %v3640
  %v4182 = vunpack.c.l.b16 %v3641
  %v4183 = vunpack.c.h.b16 %v3641
  %v4184 = vunpack.c.l.b16 %v3642
  %v4185 = vunpack.c.h.b16 %v3642
  %v4186 = vunpack.c.l.b16 %v3643
  %v4187 = vunpack.c.h.b16 %v3643
  %v4188 = vunpack.c.l.b16 %v3644
  %v4189 = vunpack.c.h.b16 %v3644
  %v4190 = vunpack.c.l.b16 %v3645
  %v4191 = vunpack.c.h.b16 %v3645
  %v4192 = vunpack.c.l.b16 %v3646
  %v4193 = vunpack.c.h.b16 %v3646
  %v4194 = vunpack.c.l.b16 %v3647
  %v4195 = vunpack.c.h.b16 %v3647
  %v4196 = vunpack.c.l.b16 %v3648
  %v4197 = vunpack.c.h.b16 %v3648
  %v4198 = vunpack.c.l.b16 %v3649
  %v4199 = vunpack.c.h.b16 %v3649
  %v4200 = vunpack.c.l.b16 %v3650
  %v4201 = vunpack.c.h.b16 %v3650
  %v4202 = vunpack.c.l.b16 %v3651
  %v4203 = vunpack.c.h.b16 %v3651
  %v4204 = vunpack.c.l.b16 %v3652
  %v4205 = vunpack.c.h.b16 %v3652
  %v4206 = vunpack.c.l.b16 %v3653
  %v4207 = vunpack.c.h.b16 %v3653
  %v4208 = vunpack.c.l.b16 %v3654
  %v4209 = vunpack.c.h.b16 %v3654
  %v4210 = vunpack.c.l.b16 %v3655
  %v4211 = vunpack.c.h.b16 %v3655
  %v4212 = vunpack.c.l.b16 %v3656
  %v4213 = vunpack.c.h.b16 %v3656
  %v4214 = vunpack.c.l.b16 %v3657
  %v4215 = vunpack.c.h.b16 %v3657
  %v4216 = vunpack.c.l.b16 %v3658
  %v4217 = vunpack.c.h.b16 %v3658
  %v4218 = vunpack.c.l.b16 %v3659
  %v4219 = vunpack.c.h.b16 %v3659
  %v4220 = vunpack.c.l.b16 %v3660
  %v4221 = vunpack.c.h.b16 %v3660
  %v4222 = vunpack.c.l.b16 %v3661
  %v4223 = vunpack.c.h.b16 %v3661
  %v4224 = vunpack.c.l.b16 %v3662
  %v4225 = vunpack.c.h.b16 %v3662
  %v4226 = vunpack.c.l.b16 %v3663
  %v4227 = vunpack.c.h.b16 %v3663
  %v4228 = vunpack.c.l.b16 %v3664
  %v4229 = vunpack.c.h.b16 %v3664
  %v4230 = vunpack.c.l.b16 %v3665
  %v4231 = vunpack.c.h.b16 %v3665
  %v4232 = vunpack.c.l.b16 %v3666
  %v4233 = vunpack.c.h.b16 %v3666
  %v4234 = vunpack.c.l.b16 %v3667
  %v4235 = vunpack.c.h.b16 %v3667
  %v4236 = vunpack.c.l.b16 %v3668
  %v4237 = vunpack.c.h.b16 %v3668
  %v4238 = vunpack.c.l.b16 %v3669
  %v4239 = vunpack.c.h.b16 %v3669
  %v4240 = vunpack.c.l.b16 %v3670
  %v4241 = vunpack.c.h.b16 %v3670
  %v4242 = vunpack.c.l.b16 %v3671
  %v4243 = vunpack.c.h.b16 %v3671
  %v4244 = vunpack.c.l.b16 %v3672
  %v4245 = vunpack.c.h.b16 %v3672
  %v4246 = vunpack.c.l.b16 %v3673
  %v4247 = vunpack.c.h.b16 %v3673
  %v4248 = vunpack.c.l.b16 %v3674
  %v4249 = vunpack.c.h.b16 %v3674
  %v4250 = vunpack.c.l.b16 %v3675
  %v4251 = vunpack.c.h.b16 %v3675
  %v4252 = vunpack.c.l.b16 %v3676
  %v4253 = vunpack.c.h.b16 %v3676
  %v4254 = vunpack.c.l.b16 %v3677
  %v4255 = vunpack.c.h.b16 %v3677
  %v4256 = vunpack.c.l.b16 %v3678
  %v4257 = vunpack.c.h.b16 %v3678
  %v4258 = vunpack.c.l.b16 %v3679
  %v4259 = vunpack.c.h.b16 %v3679
  %v4260 = vunpack.c.l.b16 %v3680
  %v4261 = vunpack.c.h.b16 %v3680
  %v4262 = vunpack.c.l.b16 %v3681
  %v4263 = vunpack.c.h.b16 %v3681
  %v4264 = vunpack.c.l.b16 %v3682
  %v4265 = vunpack.c.h.b16 %v3682
  %v4266 = vunpack.c.l.b16 %v3683
  %v4267 = vunpack.c.h.b16 %v3683
  %v4268 = vunpack.c.l.b16 %v3684
  %v4269 = vunpack.c.h.b16 %v3684
  %v4270 = vunpack.c.l.b16 %v3685
  %v4271 = vunpack.c.h.b16 %v3685
  %v4272 = vunpack.c.l.b16 %v3686
  %v4273 = vunpack.c.h.b16 %v3686
  %v4274 = vunpack.c.l.b16 %v3687
  %v4275 = vunpack.c.h.b16 %v3687
  %v4276 = vunpack.c.l.b16 %v3688
  %v4277 = vunpack.c.h.b16 %v3688
  %v4278 = vunpack.c.l.b16 %v3689
  %v4279 = vunpack.c.h.b16 %v3689
  %v4280 = vunpack.c.l.b16 %v3690
  %v4281 = vunpack.c.h.b16 %v3690
  %v4282 = vunpack.c.l.b16 %v3691
  %v4283 = vunpack.c.h.b16 %v3691
  %v4284 = vunpack.c.l.b16 %v3692
  %v4285 = vunpack.c.h.b16 %v3692
  %v4286 = vunpack.c.l.b16 %v3693
  %v4287 = vunpack.c.h.b16 %v3693
  %v4288 = vunpack.c.l.b16 %v3694
  %v4289 = vunpack.c.h.b16 %v3694
  %v4290 = vunpack.c.l.b16 %v3695
  %v4291 = vunpack.c.h.b16 %v3695
  %v4292 = vunpack.c.l.b16 %v3696
  %v4293 = vunpack.c.h.b16 %v3696
  %v4294 = vunpack.c.l.b16 %v3697
  %v4295 = vunpack.c.h.b16 %v3697
  %v4296 = vunpack.c.l.b16 %v3698
  %v4297 = vunpack.c.h.b16 %v3698
  %v4298 = vunpack.c.l.b16 %v3699
  %v4299 = vunpack.c.h.b16 %v3699
  %v4300 = vunpack.c.l.b16 %v3700
  %v4301 = vunpack.c.h.b16 %v3700
  %v4302 = vunpack.c.l.b16 %v3701
  %v4303 = vunpack.c.h.b16 %v3701
  %v4304 = vunpack.c.l.b16 %v3702
  %v4305 = vunpack.c.h.b16 %v3702
  %v4306 = vunpack.c.l.b16 %v3703
  %v4307 = vunpack.c.h.b16 %v3703
  %v4308 = vunpack.c.l.b16 %v3704
  %v4309 = vunpack.c.h.b16 %v3704
  %v4310 = vunpack.c.l.b16 %v3705
  %v4311 = vunpack.c.h.b16 %v3705
  %v4312 = vunpack.c.l.b16 %v3706
  %v4313 = vunpack.c.h.b16 %v3706
  %v4314 = vunpack.c.l.b16 %v3707
  %v4315 = vunpack.c.h.b16 %v3707
  %v4316 = vunpack.c.l.b16 %v3708
  %v4317 = vunpack.c.h.b16 %v3708
  %v4318 = vunpack.c.l.b16 %v3709
  %v4319 = vunpack.c.h.b16 %v3709
  %v4320 = vunpack.c.l.b16 %v3710
  %v4321 = vunpack.c.h.b16 %v3710
  %v4322 = vunpack.c.l.b16 %v3711
  %v4323 = vunpack.c.h.b16 %v3711
  %v4324 = vunpack.c.l.b16 %v3712
  %v4325 = vunpack.c.h.b16 %v3712
  %v4326 = vunpack.c.l.b16 %v3713
  %v4327 = vunpack.c.h.b16 %v3713
  %v4328 = vunpack.c.l.b16 %v3714
  %v4329 = vunpack.c.h.b16 %v3714
  %v4330 = vunpack.c.l.b16 %v3715
  %v4331 = vunpack.c.h.b16 %v3715
  %v4332 = vunpack.c.l.b16 %v3716
  %v4333 = vunpack.c.h.b16 %v3716
  %v4334 = vunpack.c.l.b16 %v3717
  %v4335 = vunpack.c.h.b16 %v3717
  %v4336 = vunpack.c.l.b16 %v3718
  %v4337 = vunpack.c.h.b16 %v3718
  %v4338 = vunpack.c.l.b16 %v3719
  %v4339 = vunpack.c.h.b16 %v3719
  %v4340 = vunpack.c.l.b16 %v3720
  %v4341 = vunpack.c.h.b16 %v3720
  %v4342 = vunpack.c.l.b16 %v3721
  %v4343 = vunpack.c.h.b16 %v3721
  %v4344 = vunpack.c.l.b16 %v3722
  %v4345 = vunpack.c.h.b16 %v3722
  %v4346 = vunpack.c.l.b16 %v3723
  %v4347 = vunpack.c.h.b16 %v3723
  %v4348 = vunpack.c.l.b16 %v3724
  %v4349 = vunpack.c.h.b16 %v3724
  %v4350 = vunpack.c.l.b16 %v3725
  %v4351 = vunpack.c.h.b16 %v3725
  %v4352 = vunpack.c.l.b16 %v3726
  %v4353 = vunpack.c.h.b16 %v3726
  %v4354 = vunpack.c.l.b16 %v3727
  %v4355 = vunpack.c.h.b16 %v3727
  %v4356 = vunpack.c.l.b16 %v3728
  %v4357 = vunpack.c.h.b16 %v3728
  %v4358 = vunpack.c.l.b16 %v3729
  %v4359 = vunpack.c.h.b16 %v3729
  %v4360 = vunpack.c.l.b16 %v3730
  %v4361 = vunpack.c.h.b16 %v3730
  %v4362 = vunpack.c.l.b16 %v3731
  %v4363 = vunpack.c.h.b16 %v3731
  %v4364 = vunpack.c.l.b16 %v3732
  %v4365 = vunpack.c.h.b16 %v3732
  %v4366 = vunpack.c.l.b16 %v3733
  %v4367 = vunpack.c.h.b16 %v3733
  %v4368 = vunpack.c.l.b16 %v3734
  %v4369 = vunpack.c.h.b16 %v3734
  %v4370 = vunpack.c.l.b16 %v3735
  %v4371 = vunpack.c.h.b16 %v3735
  %v4372 = vunpack.c.l.b16 %v3736
  %v4373 = vunpack.c.h.b16 %v3736
  %v4374 = vunpack.c.l.b16 %v3737
  %v4375 = vunpack.c.h.b16 %v3737
  %v4376 = vunpack.c.l.b16 %v3738
  %v4377 = vunpack.c.h.b16 %v3738
  %v4378 = vunpack.c.l.b16 %v3739
  %v4379 = vunpack.c.h.b16 %v3739
  %v4380 = vunpack.c.l.b16 %v3740
  %v4381 = vunpack.c.h.b16 %v3740
  %v4382 = vunpack.c.l.b16 %v3741
  %v4383 = vunpack.c.h.b16 %v3741
  %v4384 = vunpack.c.l.b16 %v3742
  %v4385 = vunpack.c.h.b16 %v3742
  %v4386 = vunpack.c.l.b16 %v3743
  %v4387 = vunpack.c.h.b16 %v3743
  %v4388 = vunpack.c.l.b16 %v3744
  %v4389 = vunpack.c.h.b16 %v3744
  %v4390 = vunpack.c.l.b16 %v3745
  %v4391 = vunpack.c.h.b16 %v3745
  %v4392 = vunpack.c.l.b16 %v3746
  %v4393 = vunpack.c.h.b16 %v3746
  %v4394 = vunpack.c.l.b16 %v3747
  %v4395 = vunpack.c.h.b16 %v3747
  %v4396 = vunpack.c.l.b16 %v3748
  %v4397 = vunpack.c.h.b16 %v3748
  %v4398 = vunpack.c.l.b16 %v3749
  %v4399 = vunpack.c.h.b16 %v3749
  %v4400 = vunpack.c.l.b16 %v3750
  %v4401 = vunpack.c.h.b16 %v3750
  %v4402 = vunpack.c.l.b16 %v3751
  %v4403 = vunpack.c.h.b16 %v3751
  %v4404 = vunpack.c.l.b16 %v3752
  %v4405 = vunpack.c.h.b16 %v3752
  %v4406 = vunpack.c.l.b16 %v3753
  %v4407 = vunpack.c.h.b16 %v3753
  %v4408 = vunpack.c.l.b16 %v3754
  %v4409 = vunpack.c.h.b16 %v3754
  %v4410 = vunpack.c.l.b16 %v3755
  %v4411 = vunpack.c.h.b16 %v3755
  %v4412 = vunpack.c.l.b16 %v3756
  %v4413 = vunpack.c.h.b16 %v3756
  %v4414 = vunpack.c.l.b16 %v3757
  %v4415 = vunpack.c.h.b16 %v3757
  %v4416 = vunpack.c.l.b16 %v3758
  %v4417 = vunpack.c.h.b16 %v3758
  %v4418 = vunpack.c.l.b16 %v3759
  %v4419 = vunpack.c.h.b16 %v3759
  %v4420 = vunpack.c.l.b16 %v3760
  %v4421 = vunpack.c.h.b16 %v3760
  %v4422 = vunpack.c.l.b16 %v3761
  %v4423 = vunpack.c.h.b16 %v3761
  %v4424 = vunpack.c.l.b16 %v3762
  %v4425 = vunpack.c.h.b16 %v3762
  %v4426 = vunpack.c.l.b16 %v3763
  %v4427 = vunpack.c.h.b16 %v3763
  %v4428 = vunpack.c.l.b16 %v3764
  %v4429 = vunpack.c.h.b16 %v3764
  %v4430 = vunpack.c.l.b16 %v3765
  %v4431 = vunpack.c.h.b16 %v3765
  %v4432 = vunpack.c.l.b16 %v3766
  %v4433 = vunpack.c.h.b16 %v3766
  %v4434 = vunpack.c.l.b16 %v3767
  %v4435 = vunpack.c.h.b16 %v3767
  %v4436 = vunpack.c.l.b16 %v3768
  %v4437 = vunpack.c.h.b16 %v3768
  %v4438 = vunpack.c.l.b16 %v3769
  %v4439 = vunpack.c.h.b16 %v3769
  %v4440 = vunpack.c.l.b16 %v3770
  %v4441 = vunpack.c.h.b16 %v3770
  %v4442 = vunpack.c.l.b16 %v3771
  %v4443 = vunpack.c.h.b16 %v3771
  %v4444 = vunpack.c.l.b16 %v3772
  %v4445 = vunpack.c.h.b16 %v3772
  %v4446 = vunpack.c.l.b16 %v3773
  %v4447 = vunpack.c.h.b16 %v3773
  %v4448 = vunpack.c.l.b16 %v3774
  %v4449 = vunpack.c.h.b16 %v3774
  %v4450 = vunpack.c.l.b16 %v3775
  %v4451 = vunpack.c.h.b16 %v3775
  %v4452 = vunpack.c.l.b16 %v3776
  %v4453 = vunpack.c.h.b16 %v3776
  %v4454 = vunpack.c.l.b16 %v3777
  %v4455 = vunpack.c.h.b16 %v3777
  %v4456 = vunpack.c.l.b16 %v3778
  %v4457 = vunpack.c.h.b16 %v3778
  %v4458 = vunpack.c.l.b16 %v3779
  %v4459 = vunpack.c.h.b16 %v3779
  %v4460 = vunpack.c.l.b16 %v3780
  %v4461 = vunpack.c.h.b16 %v3780
  %v4462 = vunpack.c.l.b16 %v3781
  %v4463 = vunpack.c.h.b16 %v3781
  %v4464 = vunpack.c.l.b16 %v3782
  %v4465 = vunpack.c.h.b16 %v3782
  %v4466 = vunpack.c.l.b16 %v3783
  %v4467 = vunpack.c.h.b16 %v3783
  %v4468 = vunpack.c.l.b16 %v3784
  %v4469 = vunpack.c.h.b16 %v3784
  %v4470 = vunpack.c.l.b16 %v3785
  %v4471 = vunpack.c.h.b16 %v3785
  %v4472 = vunpack.c.l.b16 %v3786
  %v4473 = vunpack.c.h.b16 %v3786
  %v4474 = vunpack.c.l.b16 %v3787
  %v4475 = vunpack.c.h.b16 %v3787
  %v4476 = vunpack.c.l.b16 %v3788
  %v4477 = vunpack.c.h.b16 %v3788
  %v4478 = vunpack.c.l.b16 %v3789
  %v4479 = vunpack.c.h.b16 %v3789
  %v4480 = vunpack.c.l.b16 %v3790
  %v4481 = vunpack.c.h.b16 %v3790
  %v4482 = vunpack.c.l.b16 %v3791
  %v4483 = vunpack.c.h.b16 %v3791
  %v4484 = vunpack.c.l.b16 %v3792
  %v4485 = vunpack.c.h.b16 %v3792
  %v4486 = vunpack.c.l.b16 %v3793
  %v4487 = vunpack.c.h.b16 %v3793
  %v4488 = vunpack.c.l.b16 %v3794
  %v4489 = vunpack.c.h.b16 %v3794
  %v4490 = vunpack.c.l.b16 %v3795
  %v4491 = vunpack.c.h.b16 %v3795
  %v4492 = vunpack.c.l.b16 %v3796
  %v4493 = vunpack.c.h.b16 %v3796
  %v4494 = vunpack.c.l.b16 %v3797
  %v4495 = vunpack.c.h.b16 %v3797
  %v4496 = vunpack.c.l.b16 %v3798
  %v4497 = vunpack.c.h.b16 %v3798
  %v4498 = vunpack.c.l.b16 %v3799
  %v4499 = vunpack.c.h.b16 %v3799
  %v4500 = vunpack.c.l.b16 %v3800
  %v4501 = vunpack.c.h.b16 %v3800
  %v4502 = vunpack.c.l.b16 %v3801
  %v4503 = vunpack.c.h.b16 %v3801
  %v4504 = vunpack.c.l.b16 %v3802
  %v4505 = vunpack.c.h.b16 %v3802
  %v4506 = vunpack.c.l.b16 %v3803
  %v4507 = vunpack.c.h.b16 %v3803
  %v4508 = vunpack.c.l.b16 %v3804
  %v4509 = vunpack.c.h.b16 %v3804
  %v4510 = vunpack.c.l.b16 %v3805
  %v4511 = vunpack.c.h.b16 %v3805
  %v4512 = vunpack.c.l.b16 %v3806
  %v4513 = vunpack.c.h.b16 %v3806
  %v4514 = vunpack.c.l.b16 %v3807
  %v4515 = vunpack.c.h.b16 %v3807
  %v4516 = vunpack.c.l.b16 %v3808
  %v4517 = vunpack.c.h.b16 %v3808
  %v4518 = vunpack.c.l.b16 %v3809
  %v4519 = vunpack.c.h.b16 %v3809
  %v4520 = vunpack.c.l.b16 %v3810
  %v4521 = vunpack.c.h.b16 %v3810
  %v4522 = vunpack.c.l.b16 %v3811
  %v4523 = vunpack.c.h.b16 %v3811
  %v4524 = vunpack.c.l.b16 %v3812
  %v4525 = vunpack.c.h.b16 %v3812
  %v4526 = vunpack.c.l.b16 %v3813
  %v4527 = vunpack.c.h.b16 %v3813
  %v4528 = vunpack.c.l.b16 %v3814
  %v4529 = vunpack.c.h.b16 %v3814
  %v4530 = vunpack.c.l.b16 %v3815
  %v4531 = vunpack.c.h.b16 %v3815
  %v4532 = vunpack.c.l.b16 %v3816
  %v4533 = vunpack.c.h.b16 %v3816
  %v4534 = vunpack.c.l.b16 %v3817
  %v4535 = vunpack.c.h.b16 %v3817
  %v4536 = vunpack.c.l.b16 %v3818
  %v4537 = vunpack.c.h.b16 %v3818
  %v4538 = vunpack.c.l.b16 %v3819
  %v4539 = vunpack.c.h.b16 %v3819
  %v4540 = vunpack.c.l.b16 %v3820
  %v4541 = vunpack.c.h.b16 %v3820
  %v4542 = vunpack.c.l.b16 %v3821
  %v4543 = vunpack.c.h.b16 %v3821
  %v4544 = vunpack.c.l.b16 %v3822
  %v4545 = vunpack.c.h.b16 %v3822
  %v4546 = vunpack.c.l.b16 %v3823
  %v4547 = vunpack.c.h.b16 %v3823
  %v4548 = vunpack.c.l.b16 %v3824
  %v4549 = vunpack.c.h.b16 %v3824
  %v4550 = vunpack.c.l.b16 %v3825
  %v4551 = vunpack.c.h.b16 %v3825
  %v4552 = vunpack.c.l.b16 %v3826
  %v4553 = vunpack.c.h.b16 %v3826
  %v4554 = vunpack.c.l.b16 %v3827
  %v4555 = vunpack.c.h.b16 %v3827
  %v4556 = vunpack.c.l.b16 %v3828
  %v4557 = vunpack.c.h.b16 %v3828
  %v4558 = vunpack.c.l.b16 %v3829
  %v4559 = vunpack.c.h.b16 %v3829
  %v4560 = vunpack.c.l.b16 %v3830
  %v4561 = vunpack.c.h.b16 %v3830
  %v4562 = vunpack.c.l.b16 %v3831
  %v4563 = vunpack.c.h.b16 %v3831
  %v4564 = vunpack.c.l.b16 %v3832
  %v4565 = vunpack.c.h.b16 %v3832
  %v4566 = vunpack.c.l.b16 %v3833
  %v4567 = vunpack.c.h.b16 %v3833
  %v4568 = vunpack.c.l.b16 %v3834
  %v4569 = vunpack.c.h.b16 %v3834
  %v4570 = vunpack.c.l.b16 %v3835
  %v4571 = vunpack.c.h.b16 %v3835
  %v4572 = vunpack.c.l.b16 %v3836
  %v4573 = vunpack.c.h.b16 %v3836
  %v4574 = vunpack.c.l.b16 %v3837
  %v4575 = vunpack.c.h.b16 %v3837
  %v4576 = vunpack.c.l.b16 %v3838
  %v4577 = vunpack.c.h.b16 %v3838
  %v4578 = vunpack.c.l.b16 %v3839
  %v4579 = vunpack.c.h.b16 %v3839
  %v4580 = vunpack.c.l.b16 %v3840
  %v4581 = vunpack.c.h.b16 %v3840
  %v4582 = vunpack.c.l.b16 %v3841
  %v4583 = vunpack.c.h.b16 %v3841
  %v4584 = vunpack.c.l.b16 %v3842
  %v4585 = vunpack.c.h.b16 %v3842
  %v4586 = vunpack.c.l.b16 %v3843
  %v4587 = vunpack.c.h.b16 %v3843
  %v4588 = vunpack.c.l.b16 %v3844
  %v4589 = vunpack.c.h.b16 %v3844
  %v4590 = vunpack.c.l.b16 %v3845
  %v4591 = vunpack.c.h.b16 %v3845
  %v4592 = vunpack.c.l.b16 %v3846
  %v4593 = vunpack.c.h.b16 %v3846
  %v4594 = vunpack.c.l.b16 %v3847
  %v4595 = vunpack.c.h.b16 %v3847
  %v4596 = vunpack.c.l.b16 %v3848
  %v4597 = vunpack.c.h.b16 %v3848
  %v4598 = vunpack.c.l.b16 %v3849
  %v4599 = vunpack.c.h.b16 %v3849
  %v4600 = vunpack.c.l.b16 %v3850
  %v4601 = vunpack.c.h.b16 %v3850
  %v4602 = vunpack.c.l.b16 %v3851
  %v4603 = vunpack.c.h.b16 %v3851
  %v4604 = vunpack.c.l.b16 %v3852
  %v4605 = vunpack.c.h.b16 %v3852
  %v4606 = vunpack.c.l.b16 %v3853
  %v4607 = vunpack.c.h.b16 %v3853
  %v4608 = vunpack.c.l.b16 %v3854
  %v4609 = vunpack.c.h.b16 %v3854
  %v4610 = vunpack.c.l.b16 %v3855
  %v4611 = vunpack.c.h.b16 %v3855
  %v4612 = vunpack.c.l.b16 %v3856
  %v4613 = vunpack.c.h.b16 %v3856
  %v4614 = vunpack.c.l.b16 %v3857
  %v4615 = vunpack.c.h.b16 %v3857
  %v4616 = vunpack.c.l.b16 %v3858
  %v4617 = vunpack.c.h.b16 %v3858
  %v4618 = vunpack.c.l.b16 %v3859
  %v4619 = vunpack.c.h.b16 %v3859
  %v4620 = vunpack.c.l.b16 %v3860
  %v4621 = vunpack.c.h.b16 %v3860
  %v4622 = vunpack.c.l.b16 %v3861
  %v4623 = vunpack.c.h.b16 %v3861
  %v4624 = vunpack.c.l.b16 %v3862
  %v4625 = vunpack.c.h.b16 %v3862
  %v4626 = vunpack.c.l.b16 %v3863
  %v4627 = vunpack.c.h.b16 %v3863
  %v4628 = vunpack.c.l.b16 %v3864
  %v4629 = vunpack.c.h.b16 %v3864
  %v4630 = vunpack.c.l.b16 %v3865
  %v4631 = vunpack.c.h.b16 %v3865
  %v4632 = vunpack.c.l.b16 %v3866
  %v4633 = vunpack.c.h.b16 %v3866
  %v4634 = vunpack.c.l.b16 %v3867
  %v4635 = vunpack.c.h.b16 %v3867
  %v4636 = vunpack.c.l.b16 %v3868
  %v4637 = vunpack.c.h.b16 %v3868
  %v4638 = vunpack.c.l.b16 %v3869
  %v4639 = vunpack.c.h.b16 %v3869
  %v4640 = vunpack.c.l.b16 %v3870
  %v4641 = vunpack.c.h.b16 %v3870
  %v4642 = vunpack.c.l.b16 %v3871
  %v4643 = vunpack.c.h.b16 %v3871
  %v4644 = vunpack.c.l.b16 %v3872
  %v4645 = vunpack.c.h.b16 %v3872
  %v4646 = vunpack.c.l.b16 %v3873
  %v4647 = vunpack.c.h.b16 %v3873
  %v4648 = vunpack.c.l.b16 %v3874
  %v4649 = vunpack.c.h.b16 %v3874
  %v4650 = vunpack.c.l.b16 %v3875
  %v4651 = vunpack.c.h.b16 %v3875
  %v4652 = vunpack.c.l.b16 %v3876
  %v4653 = vunpack.c.h.b16 %v3876
  %v4654 = vunpack.c.l.b16 %v3877
  %v4655 = vunpack.c.h.b16 %v3877
  %v4656 = vpack.c.b16 %v4148, %v4144
  %v4657 = vpack.c.b16 %v4149, %v4145
  %v4658 = vpack.c.b16 %v4150, %v4146
  %v4659 = vpack.c.b16 %v4151, %v4147
  %v4660 = vpack.c.b16 %v4156, %v4152
  %v4661 = vpack.c.b16 %v4157, %v4153
  %v4662 = vpack.c.b16 %v4158, %v4154
  %v4663 = vpack.c.b16 %v4159, %v4155
  %v4664 = vpack.c.b16 %v4164, %v4160
  %v4665 = vpack.c.b16 %v4165, %v4161
  %v4666 = vpack.c.b16 %v4166, %v4162
  %v4667 = vpack.c.b16 %v4167, %v4163
  %v4668 = vpack.c.b16 %v4172, %v4168
  %v4669 = vpack.c.b16 %v4173, %v4169
  %v4670 = vpack.c.b16 %v4174, %v4170
  %v4671 = vpack.c.b16 %v4175, %v4171
  %v4672 = vpack.c.b16 %v4180, %v4176
  %v4673 = vpack.c.b16 %v4181, %v4177
  %v4674 = vpack.c.b16 %v4182, %v4178
  %v4675 = vpack.c.b16 %v4183, %v4179
  %v4676 = vpack.c.b16 %v4188, %v4184
  %v4677 = vpack.c.b16 %v4189, %v4185
  %v4678 = vpack.c.b16 %v4190, %v4186
  %v4679 = vpack.c.b16 %v4191, %v4187
  %v4680 = vpack.c.b16 %v4196, %v4192
  %v4681 = vpack.c.b16 %v4197, %v4193
  %v4682 = vpack.c.b16 %v4198, %v4194
  %v4683 = vpack.c.b16 %v4199, %v4195
  %v4684 = vpack.c.b16 %v4204, %v4200
  %v4685 = vpack.c.b16 %v4205, %v4201
  %v4686 = vpack.c.b16 %v4206, %v4202
  %v4687 = vpack.c.b16 %v4207, %v4203
  %v4688 = vpack.c.b16 %v4212, %v4208
  %v4689 = vpack.c.b16 %v4213, %v4209
  %v4690 = vpack.c.b16 %v4214, %v4210
  %v4691 = vpack.c.b16 %v4215, %v4211
  %v4692 = vpack.c.b16 %v4220, %v4216
  %v4693 = vpack.c.b16 %v4221, %v4217
  %v4694 = vpack.c.b16 %v4222, %v4218
  %v4695 = vpack.c.b16 %v4223, %v4219
  %v4696 = vpack.c.b16 %v4228, %v4224
  %v4697 = vpack.c.b16 %v4229, %v4225
  %v4698 = vpack.c.b16 %v4230, %v4226
  %v4699 = vpack.c.b16 %v4231, %v4227
  %v4700 = vpack.c.b16 %v4236, %v4232
  %v4701 = vpack.c.b16 %v4237, %v4233
  %v4702 = vpack.c.b16 %v4238, %v4234
  %v4703 = vpack.c.b16 %v4239, %v4235
  %v4704 = vpack.c.b16 %v4244, %v4240
  %v4705 = vpack.c.b16 %v4245, %v4241
  %v4706 = vpack.c.b16 %v4246, %v4242
  %v4707 = vpack.c.b16 %v4247, %v4243
  %v4708 = vpack.c.b16 %v4252, %v4248
  %v4709 = vpack.c.b16 %v4253, %v4249
  %v4710 = vpack.c.b16 %v4254, %v4250
  %v4711 = vpack.c.b16 %v4255, %v4251
  %v4712 = vpack.c.b16 %v4260, %v4256
  %v4713 = vpack.c.b16 %v4261, %v4257
  %v4714 = vpack.c.b16 %v4262, %v4258
  %v4715 = vpack.c.b16 %v4263, %v4259
  %v4716 = vpack.c.b16 %v4268, %v4264
  %v4717 = vpack.c.b16 %v4269, %v4265
  %v4718 = vpack.c.b16 %v4270, %v4266
  %v4719 = vpack.c.b16 %v4271, %v4267
  %v4720 = vpack.c.b16 %v4276, %v4272
  %v4721 = vpack.c.b16 %v4277, %v4273
  %v4722 = vpack.c.b16 %v4278, %v4274
  %v4723 = vpack.c.b16 %v4279, %v4275
  %v4724 = vpack.c.b16 %v4284, %v4280
  %v4725 = vpack.c.b16 %v4285, %v4281
  %v4726 = vpack.c.b16 %v4286, %v4282
  %v4727 = vpack.c.b16 %v4287, %v4283
  %v4728 = vpack.c.b16 %v4292, %v4288
  %v4729 = vpack.c.b16 %v4293, %v4289
  %v4730 = vpack.c.b16 %v4294, %v4290
  %v4731 = vpack.c.b16 %v4295, %v4291
  %v4732 = vpack.c.b16 %v4300, %v4296
  %v4733 = vpack.c.b16 %v4301, %v4297
  %v4734 = vpack.c.b16 %v4302, %v4298
  %v4735 = vpack.c.b16 %v4303, %v4299
  %v4736 = vpack.c.b16 %v4308, %v4304
  %v4737 = vpack.c.b16 %v4309, %v4305
  %v4738 = vpack.c.b16 %v4310, %v4306
  %v4739 = vpack.c.b16 %v4311, %v4307
  %v4740 = vpack.c.b16 %v4316, %v4312
  %v4741 = vpack.c.b16 %v4317, %v4313
  %v4742 = vpack.c.b16 %v4318, %v4314
  %v4743 = vpack.c.b16 %v4319, %v4315
  %v4744 = vpack.c.b16 %v4324, %v4320
  %v4745 = vpack.c.b16 %v4325, %v4321
  %v4746 = vpack.c.b16 %v4326, %v4322
  %v4747 = vpack.c.b16 %v4327, %v4323
  %v4748 = vpack.c.b16 %v4332, %v4328
  %v4749 = vpack.c.b16 %v4333, %v4329
  %v4750 = vpack.c.b16 %v4334, %v4330
  %v4751 = vpack.c.b16 %v4335, %v4331
  %v4752 = vpack.c.b16 %v4340, %v4336
  %v4753 = vpack.c.b16 %v4341, %v4337
  %v4754 = vpack.c.b16 %v4342, %v4338
  %v4755 = vpack.c.b16 %v4343, %v4339
  %v4756 = vpack.c.b16 %v4348, %v4344
  %v4757 = vpack.c.b16 %v4349, %v4345
  %v4758 = vpack.c.b16 %v4350, %v4346
  %v4759 = vpack.c.b16 %v4351, %v4347
  %v4760 = vpack.c.b16 %v4356, %v4352
  %v4761 = vpack.c.b16 %v4357, %v4353
  %v4762 = vpack.c.b16 %v4358, %v4354
  %v4763 = vpack.c.b16 %v4359, %v4355
  %v4764 = vpack.c.b16 %v4364, %v4360
  %v4765 = vpack.c.b16 %v4365, %v4361
  %v4766 = vpack.c.b16 %v4366, %v4362
  %v4767 = vpack.c.b16 %v4367, %v4363
  %v4768 = vpack.c.b16 %v4372, %v4368
  %v4769 = vpack.c.b16 %v4373, %v4369
  %v4770 = vpack.c.b16 %v4374, %v4370
  %v4771 = vpack.c.b16 %v4375, %v4371
  %v4772 = vpack.c.b16 %v4380, %v4376
  %v4773 = vpack.c.b16 %v4381, %v4377
  %v4774 = vpack.c.b16 %v4382, %v4378
  %v4775 = vpack.c.b16 %v4383, %v4379
  %v4776 = vpack.c.b16 %v4388, %v4384
  %v4777 = vpack.c.b16 %v4389, %v4385
  %v4778 = vpack.c.b16 %v4390, %v4386
  %v4779 = vpack.c.b16 %v4391, %v4387
  %v4780 = vpack.c.b16 %v4396, %v4392
  %v4781 = vpack.c.b16 %v4397, %v4393
  %v4782 = vpack.c.b16 %v4398, %v4394
  %v4783 = vpack.c.b16 %v4399, %v4395
  %v4784 = vpack.c.b16 %v4404, %v4400
  %v4785 = vpack.c.b16 %v4405, %v4401
  %v4786 = vpack.c.b16 %v4406, %v4402
  %v4787 = vpack.c.b16 %v4407, %v4403
  %v4788 = vpack.c.b16 %v4412, %v4408
  %v4789 = vpack.c.b16 %v4413, %v4409
  %v4790 = vpack.c.b16 %v4414, %v4410
  %v4791 = vpack.c.b16 %v4415, %v4411
  %v4792 = vpack.c.b16 %v4420, %v4416
  %v4793 = vpack.c.b16 %v4421, %v4417
  %v4794 = vpack.c.b16 %v4422, %v4418
  %v4795 = vpack.c.b16 %v4423, %v4419
  %v4796 = vpack.c.b16 %v4428, %v4424
  %v4797 = vpack.c.b16 %v4429, %v4425
  %v4798 = vpack.c.b16 %v4430, %v4426
  %v4799 = vpack.c.b16 %v4431, %v4427
  %v4800 = vpack.c.b16 %v4436, %v4432
  %v4801 = vpack.c.b16 %v4437, %v4433
  %v4802 = vpack.c.b16 %v4438, %v4434
  %v4803 = vpack.c.b16 %v4439, %v4435
  %v4804 = vpack.c.b16 %v4444, %v4440
  %v4805 = vpack.c.b16 %v4445, %v4441
  %v4806 = vpack.c.b16 %v4446, %v4442
  %v4807 = vpack.c.b16 %v4447, %v4443
  %v4808 = vpack.c.b16 %v4452, %v4448
  %v4809 = vpack.c.b16 %v4453, %v4449
  %v4810 = vpack.c.b16 %v4454, %v4450
  %v4811 = vpack.c.b16 %v4455, %v4451
  %v4812 = vpack.c.b16 %v4460, %v4456
  %v4813 = vpack.c.b16 %v4461, %v4457
  %v4814 = vpack.c.b16 %v4462, %v4458
  %v4815 = vpack.c.b16 %v4463, %v4459
  %v4816 = vpack.c.b16 %v4468, %v4464
  %v4817 = vpack.c.b16 %v4469, %v4465
  %v4818 = vpack.c.b16 %v4470, %v4466
  %v4819 = vpack.c.b16 %v4471, %v4467
  %v4820 = vpack.c.b16 %v4476, %v4472
  %v4821 = vpack.c.b16 %v4477, %v4473
  %v4822 = vpack.c.b16 %v4478, %v4474
  %v4823 = vpack.c.b16 %v4479, %v4475
  %v4824 = vpack.c.b16 %v4484, %v4480
  %v4825 = vpack.c.b16 %v4485, %v4481
  %v4826 = vpack.c.b16 %v4486, %v4482
  %v4827 = vpack.c.b16 %v4487, %v4483
  %v4828 = vpack.c.b16 %v4492, %v4488
  %v4829 = vpack.c.b16 %v4493, %v4489
  %v4830 = vpack.c.b16 %v4494, %v4490
  %v4831 = vpack.c.b16 %v4495, %v4491
  %v4832 = vpack.c.b16 %v4500, %v4496
  %v4833 = vpack.c.b16 %v4501, %v4497
  %v4834 = vpack.c.b16 %v4502, %v4498
  %v4835 = vpack.c.b16 %v4503, %v4499
  %v4836 = vpack.c.b16 %v4508, %v4504
  %v4837 = vpack.c.b16 %v4509, %v4505
  %v4838 = vpack.c.b16 %v4510, %v4506
  %v4839 = vpack.c.b16 %v4511, %v4507
  %v4840 = vpack.c.b16 %v4516, %v4512
  %v4841 = vpack.c.b16 %v4517, %v4513
  %v4842 = vpack.c.b16 %v4518, %v4514
  %v4843 = vpack.c.b16 %v4519, %v4515
  %v4844 = vpack.c.b16 %v4524, %v4520
  %v4845 = vpack.c.b16 %v4525, %v4521
  %v4846 = vpack.c.b16 %v4526, %v4522
  %v4847 = vpack.c.b16 %v4527, %v4523
  %v4848 = vpack.c.b16 %v4532, %v4528
  %v4849 = vpack.c.b16 %v4533, %v4529
  %v4850 = vpack.c.b16 %v4534, %v4530
  %v4851 = vpack.c.b16 %v4535, %v4531
  %v4852 = vpack.c.b16 %v4540, %v4536
  %v4853 = vpack.c.b16 %v4541, %v4537
  %v4854 = vpack.c.b16 %v4542, %v4538
  %v4855 = vpack.c.b16 %v4543, %v4539
  %v4856 = vpack.c.b16 %v4548, %v4544
  %v4857 = vpack.c.b16 %v4549, %v4545
  %v4858 = vpack.c.b16 %v4550, %v4546
  %v4859 = vpack.c.b16 %v4551, %v4547
  %v4860 = vpack.c.b16 %v4556, %v4552
  %v4861 = vpack.c.b16 %v4557, %v4553
  %v4862 = vpack.c.b16 %v4558, %v4554
  %v4863 = vpack.c.b16 %v4559, %v4555
  %v4864 = vpack.c.b16 %v4564, %v4560
  %v4865 = vpack.c.b16 %v4565, %v4561
  %v4866 = vpack.c.b16 %v4566, %v4562
  %v4867 = vpack.c.b16 %v4567, %v4563
  %v4868 = vpack.c.b16 %v4572, %v4568
  %v4869 = vpack.c.b16 %v4573, %v4569
  %v4870 = vpack.c.b16 %v4574, %v4570
  %v4871 = vpack.c.b16 %v4575, %v4571
  %v4872 = vpack.c.b16 %v4580, %v4576
  %v4873 = vpack.c.b16 %v4581, %v4577
  %v4874 = vpack.c.b16 %v4582, %v4578
  %v4875 = vpack.c.b16 %v4583, %v4579
  %v4876 = vpack.c.b16 %v4588, %v4584
  %v4877 = vpack.c.b16 %v4589, %v4585
  %v4878 = vpack.c.b16 %v4590, %v4586
  %v4879 = vpack.c.b16 %v4591, %v4587
  %v4880 = vpack.c.b16 %v4596, %v4592
  %v4881 = vpack.c.b16 %v4597, %v4593
  %v4882 = vpack.c.b16 %v4598, %v4594
  %v4883 = vpack.c.b16 %v4599, %v4595
  %v4884 = vpack.c.b16 %v4604, %v4600
  %v4885 = vpack.c.b16 %v4605, %v4601
  %v4886 = vpack.c.b16 %v4606, %v4602
  %v4887 = vpack.c.b16 %v4607, %v4603
  %v4888 = vpack.c.b16 %v4612, %v4608
  %v4889 = vpack.c.b16 %v4613, %v4609
  %v4890 = vpack.c.b16 %v4614, %v4610
  %v4891 = vpack.c.b16 %v4615, %v4611
  %v4892 = vpack.c.b16 %v4620, %v4616
  %v4893 = vpack.c.b16 %v4621, %v4617
  %v4894 = vpack.c.b16 %v4622, %v4618
  %v4895 = vpack.c.b16 %v4623, %v4619
  %v4896 = vpack.c.b16 %v4628, %v4624
  %v4897 = vpack.c.b16 %v4629, %v4625
  %v4898 = vpack.c.b16 %v4630, %v4626
  %v4899 = vpack.c.b16 %v4631, %v4627
  %v4900 = vpack.c.b16 %v4636, %v4632
  %v4901 = vpack.c.b16 %v4637, %v4633
  %v4902 = vpack.c.b16 %v4638, %v4634
  %v4903 = vpack.c.b16 %v4639, %v4635
  %v4904 = vpack.c.b16 %v4644, %v4640
  %v4905 = vpack.c.b16 %v4645, %v4641
  %v4906 = vpack.c.b16 %v4646, %v4642
  %v4907 = vpack.c.b16 %v4647, %v4643
  %v4908 = vpack.c.b16 %v4652, %v4648
  %v4909 = vpack.c.b16 %v4653, %v4649
  %v4910 = vpack.c.b16 %v4654, %v4650
  %v4911 = vpack.c.b16 %v4655, %v4651
  %5168 = vmatpush.bf16.msra.mxu0 %v4684
  %5169 = vmatpush.bf16.msra.mxu0 %v4680
  %5170 = vmatpush.bf16.msra.mxu0 %v4676
  %5171 = vmatpush.bf16.msra.mxu0 %v4672
  %5172 = vmatpush.bf16.msra.mxu0 %v4668
  %5173 = vmatpush.bf16.msra.mxu0 %v4664
  %5174 = vmatpush.bf16.msra.mxu0 %v4660
  %5175 = vmatpush.bf16.msra.mxu0 %v4656
  %5176 = vmatmul.bf16.gmra.mxu0 %v3614
  %v5177 = vpop.f32.mrf.mxu0
  %v5178 = vadd.f32 %v3880, %v5177
  %v5179 = vpop.f32.mrf.mxu0
  %v5180 = vadd.f32 %v3880, %v5179
  %5181 = vdwg.mxu0
  %5182 = vmatpush.bf16.msra.mxu0 %v4716
  %5183 = vmatpush.bf16.msra.mxu0 %v4712
  %5184 = vmatpush.bf16.msra.mxu0 %v4708
  %5185 = vmatpush.bf16.msra.mxu0 %v4704
  %5186 = vmatpush.bf16.msra.mxu0 %v4700
  %5187 = vmatpush.bf16.msra.mxu0 %v4696
  %5188 = vmatpush.bf16.msra.mxu0 %v4692
  %5189 = vmatpush.bf16.msra.mxu0 %v4688
  %5190 = vmatmul.bf16.gmra.mxu0 %v3615
  %v5191 = vpop.f32.mrf.mxu0
  %v5192 = vadd.f32 %v5178, %v5191
  %v5193 = vpop.f32.mrf.mxu0
  %v5194 = vadd.f32 %v5180, %v5193
  %5195 = vdwg.mxu0
  %5196 = vmatpush.bf16.msra.mxu0 %v4748
  %5197 = vmatpush.bf16.msra.mxu0 %v4744
  %5198 = vmatpush.bf16.msra.mxu0 %v4740
  %5199 = vmatpush.bf16.msra.mxu0 %v4736
  %5200 = vmatpush.bf16.msra.mxu0 %v4732
  %5201 = vmatpush.bf16.msra.mxu0 %v4728
  %5202 = vmatpush.bf16.msra.mxu0 %v4724
  %5203 = vmatpush.bf16.msra.mxu0 %v4720
  %5204 = vmatmul.bf16.gmra.mxu0 %v3616
  %v5205 = vpop.f32.mrf.mxu0
  %v5206 = vadd.f32 %v5192, %v5205
  %v5207 = vpop.f32.mrf.mxu0
  %v5208 = vadd.f32 %v5194, %v5207
  %5209 = vdwg.mxu0
  %5210 = vmatpush.bf16.msra.mxu0 %v4780
  %5211 = vmatpush.bf16.msra.mxu0 %v4776
  %5212 = vmatpush.bf16.msra.mxu0 %v4772
  %5213 = vmatpush.bf16.msra.mxu0 %v4768
  %5214 = vmatpush.bf16.msra.mxu0 %v4764
  %5215 = vmatpush.bf16.msra.mxu0 %v4760
  %5216 = vmatpush.bf16.msra.mxu0 %v4756
  %5217 = vmatpush.bf16.msra.mxu0 %v4752
  %5218 = vmatmul.bf16.gmra.mxu0 %v3617
  %v5219 = vpop.f32.mrf.mxu0
  %v5220 = vadd.f32 %v5206, %v5219
  %v5221 = vpop.f32.mrf.mxu0
  %v5222 = vadd.f32 %v5208, %v5221
  %5223 = vdwg.mxu0
  %5224 = vmatpush.bf16.msra.mxu0 %v4812
  %5225 = vmatpush.bf16.msra.mxu0 %v4808
  %5226 = vmatpush.bf16.msra.mxu0 %v4804
  %5227 = vmatpush.bf16.msra.mxu0 %v4800
  %5228 = vmatpush.bf16.msra.mxu0 %v4796
  %5229 = vmatpush.bf16.msra.mxu0 %v4792
  %5230 = vmatpush.bf16.msra.mxu0 %v4788
  %5231 = vmatpush.bf16.msra.mxu0 %v4784
  %5232 = vmatmul.bf16.gmra.mxu0 %v3618
  %v5233 = vpop.f32.mrf.mxu0
  %v5234 = vadd.f32 %v5220, %v5233
  %v5235 = vpop.f32.mrf.mxu0
  %v5236 = vadd.f32 %v5222, %v5235
  %5237 = vdwg.mxu0
  %5238 = vmatpush.bf16.msra.mxu0 %v4844
  %5239 = vmatpush.bf16.msra.mxu0 %v4840
  %5240 = vmatpush.bf16.msra.mxu0 %v4836
  %5241 = vmatpush.bf16.msra.mxu0 %v4832
  %5242 = vmatpush.bf16.msra.mxu0 %v4828
  %5243 = vmatpush.bf16.msra.mxu0 %v4824
  %5244 = vmatpush.bf16.msra.mxu0 %v4820
  %5245 = vmatpush.bf16.msra.mxu0 %v4816
  %5246 = vmatmul.bf16.gmra.mxu0 %v3619
  %v5247 = vpop.f32.mrf.mxu0
  %v5248 = vadd.f32 %v5234, %v5247
  %v5249 = vpop.f32.mrf.mxu0
  %v5250 = vadd.f32 %v5236, %v5249
  %5251 = vdwg.mxu0
  %5252 = vmatpush.bf16.msra.mxu0 %v4876
  %5253 = vmatpush.bf16.msra.mxu0 %v4872
  %5254 = vmatpush.bf16.msra.mxu0 %v4868
  %5255 = vmatpush.bf16.msra.mxu0 %v4864
  %5256 = vmatpush.bf16.msra.mxu0 %v4860
  %5257 = vmatpush.bf16.msra.mxu0 %v4856
  %5258 = vmatpush.bf16.msra.mxu0 %v4852
  %5259 = vmatpush.bf16.msra.mxu0 %v4848
  %5260 = vmatmul.bf16.gmra.mxu0 %v3620
  %v5261 = vpop.f32.mrf.mxu0
  %v5262 = vadd.f32 %v5248, %v5261
  %v5263 = vpop.f32.mrf.mxu0
  %v5264 = vadd.f32 %v5250, %v5263
  %5265 = vdwg.mxu0
  %5266 = vmatpush.bf16.msra.mxu0 %v4908
  %5267 = vmatpush.bf16.msra.mxu0 %v4904
  %5268 = vmatpush.bf16.msra.mxu0 %v4900
  %5269 = vmatpush.bf16.msra.mxu0 %v4896
  %5270 = vmatpush.bf16.msra.mxu0 %v4892
  %5271 = vmatpush.bf16.msra.mxu0 %v4888
  %5272 = vmatpush.bf16.msra.mxu0 %v4884
  %5273 = vmatpush.bf16.msra.mxu0 %v4880
  %5274 = vmatmul.bf16.gmra.mxu0 %v3621
  %v5275 = vpop.f32.mrf.mxu0
  %v5276 = vadd.f32 %v5262, %v5275
  %v5277 = vpop.f32.mrf.mxu0
  %v5278 = vadd.f32 %v5264, %v5277
  %5279 = vdwg.mxu0
  %5280 = vmatpush.bf16.msra.mxu0 %v4685
  %5281 = vmatpush.bf16.msra.mxu0 %v4681
  %5282 = vmatpush.bf16.msra.mxu0 %v4677
  %5283 = vmatpush.bf16.msra.mxu0 %v4673
  %5284 = vmatpush.bf16.msra.mxu0 %v4669
  %5285 = vmatpush.bf16.msra.mxu0 %v4665
  %5286 = vmatpush.bf16.msra.mxu0 %v4661
  %5287 = vmatpush.bf16.msra.mxu0 %v4657
  %5288 = vmatmul.bf16.gmra.mxu0 %v3614
  %v5289 = vpop.f32.mrf.mxu0
  %v5290 = vadd.f32 %v3881, %v5289
  %v5291 = vpop.f32.mrf.mxu0
  %v5292 = vadd.f32 %v3881, %v5291
  %5293 = vdwg.mxu0
  %5294 = vmatpush.bf16.msra.mxu0 %v4717
  %5295 = vmatpush.bf16.msra.mxu0 %v4713
  %5296 = vmatpush.bf16.msra.mxu0 %v4709
  %5297 = vmatpush.bf16.msra.mxu0 %v4705
  %5298 = vmatpush.bf16.msra.mxu0 %v4701
  %5299 = vmatpush.bf16.msra.mxu0 %v4697
  %5300 = vmatpush.bf16.msra.mxu0 %v4693
  %5301 = vmatpush.bf16.msra.mxu0 %v4689
  %5302 = vmatmul.bf16.gmra.mxu0 %v3615
  %v5303 = vpop.f32.mrf.mxu0
  %v5304 = vadd.f32 %v5290, %v5303
  %v5305 = vpop.f32.mrf.mxu0
  %v5306 = vadd.f32 %v5292, %v5305
  %5307 = vdwg.mxu0
  %5308 = vmatpush.bf16.msra.mxu0 %v4749
  %5309 = vmatpush.bf16.msra.mxu0 %v4745
  %5310 = vmatpush.bf16.msra.mxu0 %v4741
  %5311 = vmatpush.bf16.msra.mxu0 %v4737
  %5312 = vmatpush.bf16.msra.mxu0 %v4733
  %5313 = vmatpush.bf16.msra.mxu0 %v4729
  %5314 = vmatpush.bf16.msra.mxu0 %v4725
  %5315 = vmatpush.bf16.msra.mxu0 %v4721
  %5316 = vmatmul.bf16.gmra.mxu0 %v3616
  %v5317 = vpop.f32.mrf.mxu0
  %v5318 = vadd.f32 %v5304, %v5317
  %v5319 = vpop.f32.mrf.mxu0
  %v5320 = vadd.f32 %v5306, %v5319
  %5321 = vdwg.mxu0
  %5322 = vmatpush.bf16.msra.mxu0 %v4781
  %5323 = vmatpush.bf16.msra.mxu0 %v4777
  %5324 = vmatpush.bf16.msra.mxu0 %v4773
  %5325 = vmatpush.bf16.msra.mxu0 %v4769
  %5326 = vmatpush.bf16.msra.mxu0 %v4765
  %5327 = vmatpush.bf16.msra.mxu0 %v4761
  %5328 = vmatpush.bf16.msra.mxu0 %v4757
  %5329 = vmatpush.bf16.msra.mxu0 %v4753
  %5330 = vmatmul.bf16.gmra.mxu0 %v3617
  %v5331 = vpop.f32.mrf.mxu0
  %v5332 = vadd.f32 %v5318, %v5331
  %v5333 = vpop.f32.mrf.mxu0
  %v5334 = vadd.f32 %v5320, %v5333
  %5335 = vdwg.mxu0
  %5336 = vmatpush.bf16.msra.mxu0 %v4813
  %5337 = vmatpush.bf16.msra.mxu0 %v4809
  %5338 = vmatpush.bf16.msra.mxu0 %v4805
  %5339 = vmatpush.bf16.msra.mxu0 %v4801
  %5340 = vmatpush.bf16.msra.mxu0 %v4797
  %5341 = vmatpush.bf16.msra.mxu0 %v4793
  %5342 = vmatpush.bf16.msra.mxu0 %v4789
  %5343 = vmatpush.bf16.msra.mxu0 %v4785
  %5344 = vmatmul.bf16.gmra.mxu0 %v3618
  %v5345 = vpop.f32.mrf.mxu0
  %v5346 = vadd.f32 %v5332, %v5345
  %v5347 = vpop.f32.mrf.mxu0
  %v5348 = vadd.f32 %v5334, %v5347
  %5349 = vdwg.mxu0
  %5350 = vmatpush.bf16.msra.mxu0 %v4845
  %5351 = vmatpush.bf16.msra.mxu0 %v4841
  %5352 = vmatpush.bf16.msra.mxu0 %v4837
  %5353 = vmatpush.bf16.msra.mxu0 %v4833
  %5354 = vmatpush.bf16.msra.mxu0 %v4829
  %5355 = vmatpush.bf16.msra.mxu0 %v4825
  %5356 = vmatpush.bf16.msra.mxu0 %v4821
  %5357 = vmatpush.bf16.msra.mxu0 %v4817
  %5358 = vmatmul.bf16.gmra.mxu0 %v3619
  %v5359 = vpop.f32.mrf.mxu0
  %v5360 = vadd.f32 %v5346, %v5359
  %v5361 = vpop.f32.mrf.mxu0
  %v5362 = vadd.f32 %v5348, %v5361
  %5363 = vdwg.mxu0
  %5364 = vmatpush.bf16.msra.mxu0 %v4877
  %5365 = vmatpush.bf16.msra.mxu0 %v4873
  %5366 = vmatpush.bf16.msra.mxu0 %v4869
  %5367 = vmatpush.bf16.msra.mxu0 %v4865
  %5368 = vmatpush.bf16.msra.mxu0 %v4861
  %5369 = vmatpush.bf16.msra.mxu0 %v4857
  %5370 = vmatpush.bf16.msra.mxu0 %v4853
  %5371 = vmatpush.bf16.msra.mxu0 %v4849
  %5372 = vmatmul.bf16.gmra.mxu0 %v3620
  %v5373 = vpop.f32.mrf.mxu0
  %v5374 = vadd.f32 %v5360, %v5373
  %v5375 = vpop.f32.mrf.mxu0
  %v5376 = vadd.f32 %v5362, %v5375
  %5377 = vdwg.mxu0
  %5378 = vmatpush.bf16.msra.mxu0 %v4909
  %5379 = vmatpush.bf16.msra.mxu0 %v4905
  %5380 = vmatpush.bf16.msra.mxu0 %v4901
  %5381 = vmatpush.bf16.msra.mxu0 %v4897
  %5382 = vmatpush.bf16.msra.mxu0 %v4893
  %5383 = vmatpush.bf16.msra.mxu0 %v4889
  %5384 = vmatpush.bf16.msra.mxu0 %v4885
  %5385 = vmatpush.bf16.msra.mxu0 %v4881
  %5386 = vmatmul.bf16.gmra.mxu0 %v3621
  %v5387 = vpop.f32.mrf.mxu0
  %v5388 = vadd.f32 %v5374, %v5387
  %v5389 = vpop.f32.mrf.mxu0
  %v5390 = vadd.f32 %v5376, %v5389
  %5391 = vdwg.mxu0
  %5392 = vmatpush.bf16.msra.mxu0 %v4686
  %5393 = vmatpush.bf16.msra.mxu0 %v4682
  %5394 = vmatpush.bf16.msra.mxu0 %v4678
  %5395 = vmatpush.bf16.msra.mxu0 %v4674
  %5396 = vmatpush.bf16.msra.mxu0 %v4670
  %5397 = vmatpush.bf16.msra.mxu0 %v4666
  %5398 = vmatpush.bf16.msra.mxu0 %v4662
  %5399 = vmatpush.bf16.msra.mxu0 %v4658
  %5400 = vmatmul.bf16.gmra.mxu0 %v3614
  %v5401 = vpop.f32.mrf.mxu0
  %v5402 = vadd.f32 %v3882, %v5401
  %v5403 = vpop.f32.mrf.mxu0
  %v5404 = vadd.f32 %v3882, %v5403
  %5405 = vdwg.mxu0
  %5406 = vmatpush.bf16.msra.mxu0 %v4718
  %5407 = vmatpush.bf16.msra.mxu0 %v4714
  %5408 = vmatpush.bf16.msra.mxu0 %v4710
  %5409 = vmatpush.bf16.msra.mxu0 %v4706
  %5410 = vmatpush.bf16.msra.mxu0 %v4702
  %5411 = vmatpush.bf16.msra.mxu0 %v4698
  %5412 = vmatpush.bf16.msra.mxu0 %v4694
  %5413 = vmatpush.bf16.msra.mxu0 %v4690
  %5414 = vmatmul.bf16.gmra.mxu0 %v3615
  %v5415 = vpop.f32.mrf.mxu0
  %v5416 = vadd.f32 %v5402, %v5415
  %v5417 = vpop.f32.mrf.mxu0
  %v5418 = vadd.f32 %v5404, %v5417
  %5419 = vdwg.mxu0
  %5420 = vmatpush.bf16.msra.mxu0 %v4750
  %5421 = vmatpush.bf16.msra.mxu0 %v4746
  %5422 = vmatpush.bf16.msra.mxu0 %v4742
  %5423 = vmatpush.bf16.msra.mxu0 %v4738
  %5424 = vmatpush.bf16.msra.mxu0 %v4734
  %5425 = vmatpush.bf16.msra.mxu0 %v4730
  %5426 = vmatpush.bf16.msra.mxu0 %v4726
  %5427 = vmatpush.bf16.msra.mxu0 %v4722
  %5428 = vmatmul.bf16.gmra.mxu0 %v3616
  %v5429 = vpop.f32.mrf.mxu0
  %v5430 = vadd.f32 %v5416, %v5429
  %v5431 = vpop.f32.mrf.mxu0
  %v5432 = vadd.f32 %v5418, %v5431
  %5433 = vdwg.mxu0
  %5434 = vmatpush.bf16.msra.mxu0 %v4782
  %5435 = vmatpush.bf16.msra.mxu0 %v4778
  %5436 = vmatpush.bf16.msra.mxu0 %v4774
  %5437 = vmatpush.bf16.msra.mxu0 %v4770
  %5438 = vmatpush.bf16.msra.mxu0 %v4766
  %5439 = vmatpush.bf16.msra.mxu0 %v4762
  %5440 = vmatpush.bf16.msra.mxu0 %v4758
  %5441 = vmatpush.bf16.msra.mxu0 %v4754
  %5442 = vmatmul.bf16.gmra.mxu0 %v3617
  %v5443 = vpop.f32.mrf.mxu0
  %v5444 = vadd.f32 %v5430, %v5443
  %v5445 = vpop.f32.mrf.mxu0
  %v5446 = vadd.f32 %v5432, %v5445
  %5447 = vdwg.mxu0
  %5448 = vmatpush.bf16.msra.mxu0 %v4814
  %5449 = vmatpush.bf16.msra.mxu0 %v4810
  %5450 = vmatpush.bf16.msra.mxu0 %v4806
  %5451 = vmatpush.bf16.msra.mxu0 %v4802
  %5452 = vmatpush.bf16.msra.mxu0 %v4798
  %5453 = vmatpush.bf16.msra.mxu0 %v4794
  %5454 = vmatpush.bf16.msra.mxu0 %v4790
  %5455 = vmatpush.bf16.msra.mxu0 %v4786
  %5456 = vmatmul.bf16.gmra.mxu0 %v3618
  %v5457 = vpop.f32.mrf.mxu0
  %v5458 = vadd.f32 %v5444, %v5457
  %v5459 = vpop.f32.mrf.mxu0
  %v5460 = vadd.f32 %v5446, %v5459
  %5461 = vdwg.mxu0
  %5462 = vmatpush.bf16.msra.mxu0 %v4846
  %5463 = vmatpush.bf16.msra.mxu0 %v4842
  %5464 = vmatpush.bf16.msra.mxu0 %v4838
  %5465 = vmatpush.bf16.msra.mxu0 %v4834
  %5466 = vmatpush.bf16.msra.mxu0 %v4830
  %5467 = vmatpush.bf16.msra.mxu0 %v4826
  %5468 = vmatpush.bf16.msra.mxu0 %v4822
  %5469 = vmatpush.bf16.msra.mxu0 %v4818
  %5470 = vmatmul.bf16.gmra.mxu0 %v3619
  %v5471 = vpop.f32.mrf.mxu0
  %v5472 = vadd.f32 %v5458, %v5471
  %v5473 = vpop.f32.mrf.mxu0
  %v5474 = vadd.f32 %v5460, %v5473
  %5475 = vdwg.mxu0
  %5476 = vmatpush.bf16.msra.mxu0 %v4878
  %5477 = vmatpush.bf16.msra.mxu0 %v4874
  %5478 = vmatpush.bf16.msra.mxu0 %v4870
  %5479 = vmatpush.bf16.msra.mxu0 %v4866
  %5480 = vmatpush.bf16.msra.mxu0 %v4862
  %5481 = vmatpush.bf16.msra.mxu0 %v4858
  %5482 = vmatpush.bf16.msra.mxu0 %v4854
  %5483 = vmatpush.bf16.msra.mxu0 %v4850
  %5484 = vmatmul.bf16.gmra.mxu0 %v3620
  %v5485 = vpop.f32.mrf.mxu0
  %v5486 = vadd.f32 %v5472, %v5485
  %v5487 = vpop.f32.mrf.mxu0
  %v5488 = vadd.f32 %v5474, %v5487
  %5489 = vdwg.mxu0
  %5490 = vmatpush.bf16.msra.mxu0 %v4910
  %5491 = vmatpush.bf16.msra.mxu0 %v4906
  %5492 = vmatpush.bf16.msra.mxu0 %v4902
  %5493 = vmatpush.bf16.msra.mxu0 %v4898
  %5494 = vmatpush.bf16.msra.mxu0 %v4894
  %5495 = vmatpush.bf16.msra.mxu0 %v4890
  %5496 = vmatpush.bf16.msra.mxu0 %v4886
  %5497 = vmatpush.bf16.msra.mxu0 %v4882
  %5498 = vmatmul.bf16.gmra.mxu0 %v3621
  %v5499 = vpop.f32.mrf.mxu0
  %v5500 = vadd.f32 %v5486, %v5499
  %v5501 = vpop.f32.mrf.mxu0
  %v5502 = vadd.f32 %v5488, %v5501
  %5503 = vdwg.mxu0
  %5504 = vmatpush.bf16.msra.mxu0 %v4687
  %5505 = vmatpush.bf16.msra.mxu0 %v4683
  %5506 = vmatpush.bf16.msra.mxu0 %v4679
  %5507 = vmatpush.bf16.msra.mxu0 %v4675
  %5508 = vmatpush.bf16.msra.mxu0 %v4671
  %5509 = vmatpush.bf16.msra.mxu0 %v4667
  %5510 = vmatpush.bf16.msra.mxu0 %v4663
  %5511 = vmatpush.bf16.msra.mxu0 %v4659
  %5512 = vmatmul.bf16.gmra.mxu0 %v3614
  %v5513 = vpop.f32.mrf.mxu0
  %v5514 = vadd.f32 %v3883, %v5513
  %v5515 = vpop.f32.mrf.mxu0
  %v5516 = vadd.f32 %v3883, %v5515
  %5517 = vdwg.mxu0
  %5518 = vmatpush.bf16.msra.mxu0 %v4719
  %5519 = vmatpush.bf16.msra.mxu0 %v4715
  %5520 = vmatpush.bf16.msra.mxu0 %v4711
  %5521 = vmatpush.bf16.msra.mxu0 %v4707
  %5522 = vmatpush.bf16.msra.mxu0 %v4703
  %5523 = vmatpush.bf16.msra.mxu0 %v4699
  %5524 = vmatpush.bf16.msra.mxu0 %v4695
  %5525 = vmatpush.bf16.msra.mxu0 %v4691
  %5526 = vmatmul.bf16.gmra.mxu0 %v3615
  %v5527 = vpop.f32.mrf.mxu0
  %v5528 = vadd.f32 %v5514, %v5527
  %v5529 = vpop.f32.mrf.mxu0
  %v5530 = vadd.f32 %v5516, %v5529
  %5531 = vdwg.mxu0
  %5532 = vmatpush.bf16.msra.mxu0 %v4751
  %5533 = vmatpush.bf16.msra.mxu0 %v4747
  %5534 = vmatpush.bf16.msra.mxu0 %v4743
  %5535 = vmatpush.bf16.msra.mxu0 %v4739
  %5536 = vmatpush.bf16.msra.mxu0 %v4735
  %5537 = vmatpush.bf16.msra.mxu0 %v4731
  %5538 = vmatpush.bf16.msra.mxu0 %v4727
  %5539 = vmatpush.bf16.msra.mxu0 %v4723
  %5540 = vmatmul.bf16.gmra.mxu0 %v3616
  %v5541 = vpop.f32.mrf.mxu0
  %v5542 = vadd.f32 %v5528, %v5541
  %v5543 = vpop.f32.mrf.mxu0
  %v5544 = vadd.f32 %v5530, %v5543
  %5545 = vdwg.mxu0
  %5546 = vmatpush.bf16.msra.mxu0 %v4783
  %5547 = vmatpush.bf16.msra.mxu0 %v4779
  %5548 = vmatpush.bf16.msra.mxu0 %v4775
  %5549 = vmatpush.bf16.msra.mxu0 %v4771
  %5550 = vmatpush.bf16.msra.mxu0 %v4767
  %5551 = vmatpush.bf16.msra.mxu0 %v4763
  %5552 = vmatpush.bf16.msra.mxu0 %v4759
  %5553 = vmatpush.bf16.msra.mxu0 %v4755
  %5554 = vmatmul.bf16.gmra.mxu0 %v3617
  %v5555 = vpop.f32.mrf.mxu0
  %v5556 = vadd.f32 %v5542, %v5555
  %v5557 = vpop.f32.mrf.mxu0
  %v5558 = vadd.f32 %v5544, %v5557
  %5559 = vdwg.mxu0
  %5560 = vmatpush.bf16.msra.mxu0 %v4815
  %5561 = vmatpush.bf16.msra.mxu0 %v4811
  %5562 = vmatpush.bf16.msra.mxu0 %v4807
  %5563 = vmatpush.bf16.msra.mxu0 %v4803
  %5564 = vmatpush.bf16.msra.mxu0 %v4799
  %5565 = vmatpush.bf16.msra.mxu0 %v4795
  %5566 = vmatpush.bf16.msra.mxu0 %v4791
  %5567 = vmatpush.bf16.msra.mxu0 %v4787
  %5568 = vmatmul.bf16.gmra.mxu0 %v3618
  %v5569 = vpop.f32.mrf.mxu0
  %v5570 = vadd.f32 %v5556, %v5569
  %v5571 = vpop.f32.mrf.mxu0
  %v5572 = vadd.f32 %v5558, %v5571
  %5573 = vdwg.mxu0
  %5574 = vmatpush.bf16.msra.mxu0 %v4847
  %5575 = vmatpush.bf16.msra.mxu0 %v4843
  %5576 = vmatpush.bf16.msra.mxu0 %v4839
  %5577 = vmatpush.bf16.msra.mxu0 %v4835
  %5578 = vmatpush.bf16.msra.mxu0 %v4831
  %5579 = vmatpush.bf16.msra.mxu0 %v4827
  %5580 = vmatpush.bf16.msra.mxu0 %v4823
  %5581 = vmatpush.bf16.msra.mxu0 %v4819
  %5582 = vmatmul.bf16.gmra.mxu0 %v3619
  %v5583 = vpop.f32.mrf.mxu0
  %v5584 = vadd.f32 %v5570, %v5583
  %v5585 = vpop.f32.mrf.mxu0
  %v5586 = vadd.f32 %v5572, %v5585
  %5587 = vdwg.mxu0
  %5588 = vmatpush.bf16.msra.mxu0 %v4879
  %5589 = vmatpush.bf16.msra.mxu0 %v4875
  %5590 = vmatpush.bf16.msra.mxu0 %v4871
  %5591 = vmatpush.bf16.msra.mxu0 %v4867
  %5592 = vmatpush.bf16.msra.mxu0 %v4863
  %5593 = vmatpush.bf16.msra.mxu0 %v4859
  %5594 = vmatpush.bf16.msra.mxu0 %v4855
  %5595 = vmatpush.bf16.msra.mxu0 %v4851
  %5596 = vmatmul.bf16.gmra.mxu0 %v3620
  %v5597 = vpop.f32.mrf.mxu0
  %v5598 = vadd.f32 %v5584, %v5597
  %v5599 = vpop.f32.mrf.mxu0
  %v5600 = vadd.f32 %v5586, %v5599
  %5601 = vdwg.mxu0
  %5602 = vmatpush.bf16.msra.mxu0 %v4911
  %5603 = vmatpush.bf16.msra.mxu0 %v4907
  %5604 = vmatpush.bf16.msra.mxu0 %v4903
  %5605 = vmatpush.bf16.msra.mxu0 %v4899
  %5606 = vmatpush.bf16.msra.mxu0 %v4895
  %5607 = vmatpush.bf16.msra.mxu0 %v4891
  %5608 = vmatpush.bf16.msra.mxu0 %v4887
  %5609 = vmatpush.bf16.msra.mxu0 %v4883
  %5610 = vmatmul.bf16.gmra.mxu0 %v3621
  %v5611 = vpop.f32.mrf.mxu0
  %v5612 = vadd.f32 %v5598, %v5611
  %v5613 = vpop.f32.mrf.mxu0
  %v5614 = vadd.f32 %v5600, %v5613
  %5615 = vdwg.mxu0
  %vm5616 = vcmp.gt.f32.partialorder %v5276, 0.0
  %vm5617 = vcmp.gt.f32.partialorder %v5388, 0.0
  %vm5618 = vcmp.gt.f32.partialorder %v5500, 0.0
  %vm5619 = vcmp.gt.f32.partialorder %v5612, 0.0
  %vm5620 = vcmp.gt.f32.partialorder %v5278, 0.0
  %vm5621 = vcmp.gt.f32.partialorder %v5390, 0.0
  %vm5622 = vcmp.gt.f32.partialorder %v5502, 0.0
  %vm5623 = vcmp.gt.f32.partialorder %v5614, 0.0
  %v5624 = vmul.f32 %v5276, 0.2
  %v5625 = vmul.f32 %v5388, 0.2
  %v5626 = vmul.f32 %v5500, 0.2
  %v5627 = vmul.f32 %v5612, 0.2
  %v5628 = vmul.f32 %v5278, 0.2
  %v5629 = vmul.f32 %v5390, 0.2
  %v5630 = vmul.f32 %v5502, 0.2
  %v5631 = vmul.f32 %v5614, 0.2
  %v5632 = vsel %vm5616, %v5276, %v5624
  %v5633 = vsel %vm5617, %v5388, %v5625
  %v5634 = vsel %vm5618, %v5500, %v5626
  %v5635 = vsel %vm5619, %v5612, %v5627
  %v5636 = vsel %vm5620, %v5278, %v5628
  %v5637 = vsel %vm5621, %v5390, %v5629
  %v5638 = vsel %vm5622, %v5502, %v5630
  %v5639 = vsel %vm5623, %v5614, %v5631
  %v5640 = vpack.c.bf16 %v5636, %v5632
  %v5641 = vpack.c.bf16 %v5637, %v5633
  %v5642 = vpack.c.bf16 %v5638, %v5634
  %v5643 = vpack.c.bf16 %v5639, %v5635
  %v5644 = vld [vmem:[%s5] sm:$0xff]
  %v5645 = vld [vmem:[%s5 + $0x8] sm:$0xff]
  %v5646 = vld [vmem:[%s5 + $0x10] sm:$0xff]
  %v5647 = vld [vmem:[%s5 + $0x18] sm:$0xff]
  %v5648 = vld [vmem:[%s5 + $0x20] sm:$0xff]
  %v5649 = vld [vmem:[%s5 + $0x28] sm:$0xff]
  %v5650 = vld [vmem:[%s5 + $0x30] sm:$0xff]
  %v5651 = vld [vmem:[%s5 + $0x38] sm:$0xff]
  %v5652 = vld [vmem:[%s5 + $0x40] sm:$0xff]
  %v5653 = vld [vmem:[%s5 + $0x48] sm:$0xff]
  %v5654 = vld [vmem:[%s5 + $0x50] sm:$0xff]
  %v5655 = vld [vmem:[%s5 + $0x58] sm:$0xff]
  %v5656 = vld [vmem:[%s5 + $0x60] sm:$0xff]
  %v5657 = vld [vmem:[%s5 + $0x68] sm:$0xff]
  %v5658 = vld [vmem:[%s5 + $0x70] sm:$0xff]
  %v5659 = vld [vmem:[%s5 + $0x78] sm:$0xff]
  %v5660 = vld [vmem:[%s5 + $0x80] sm:$0xff]
  %v5661 = vld [vmem:[%s5 + $0x88] sm:$0xff]
  %v5662 = vld [vmem:[%s5 + $0x90] sm:$0xff]
  %v5663 = vld [vmem:[%s5 + $0x98] sm:$0xff]
  %v5664 = vld [vmem:[%s5 + $0xa0] sm:$0xff]
  %v5665 = vld [vmem:[%s5 + $0xa8] sm:$0xff]
  %v5666 = vld [vmem:[%s5 + $0xb0] sm:$0xff]
  %v5667 = vld [vmem:[%s5 + $0xb8] sm:$0xff]
  %v5668 = vld [vmem:[%s5 + $0xc0] sm:$0xff]
  %v5669 = vld [vmem:[%s5 + $0xc8] sm:$0xff]
  %v5670 = vld [vmem:[%s5 + $0xd0] sm:$0xff]
  %v5671 = vld [vmem:[%s5 + $0xd8] sm:$0xff]
  %v5672 = vld [vmem:[%s5 + $0xe0] sm:$0xff]
  %v5673 = vld [vmem:[%s5 + $0xe8] sm:$0xff]
  %v5674 = vld [vmem:[%s5 + $0xf0] sm:$0xff]
  %v5675 = vld [vmem:[%s5 + $0xf8] sm:$0xff]
  %v5676 = vld [vmem:[%s5 + $0x100] sm:$0xff]
  %v5677 = vld [vmem:[%s5 + $0x108] sm:$0xff]
  %v5678 = vld [vmem:[%s5 + $0x110] sm:$0xff]
  %v5679 = vld [vmem:[%s5 + $0x118] sm:$0xff]
  %v5680 = vld [vmem:[%s5 + $0x120] sm:$0xff]
  %v5681 = vld [vmem:[%s5 + $0x128] sm:$0xff]
  %v5682 = vld [vmem:[%s5 + $0x130] sm:$0xff]
  %v5683 = vld [vmem:[%s5 + $0x138] sm:$0xff]
  %v5684 = vld [vmem:[%s5 + $0x140] sm:$0xff]
  %v5685 = vld [vmem:[%s5 + $0x148] sm:$0xff]
  %v5686 = vld [vmem:[%s5 + $0x150] sm:$0xff]
  %v5687 = vld [vmem:[%s5 + $0x158] sm:$0xff]
  %v5688 = vld [vmem:[%s5 + $0x160] sm:$0xff]
  %v5689 = vld [vmem:[%s5 + $0x168] sm:$0xff]
  %v5690 = vld [vmem:[%s5 + $0x170] sm:$0xff]
  %v5691 = vld [vmem:[%s5 + $0x178] sm:$0xff]
  %v5692 = vld [vmem:[%s5 + $0x180] sm:$0xff]
  %v5693 = vld [vmem:[%s5 + $0x188] sm:$0xff]
  %v5694 = vld [vmem:[%s5 + $0x190] sm:$0xff]
  %v5695 = vld [vmem:[%s5 + $0x198] sm:$0xff]
  %v5696 = vld [vmem:[%s5 + $0x1a0] sm:$0xff]
  %v5697 = vld [vmem:[%s5 + $0x1a8] sm:$0xff]
  %v5698 = vld [vmem:[%s5 + $0x1b0] sm:$0xff]
  %v5699 = vld [vmem:[%s5 + $0x1b8] sm:$0xff]
  %v5700 = vld [vmem:[%s5 + $0x1c0] sm:$0xff]
  %v5701 = vld [vmem:[%s5 + $0x1c8] sm:$0xff]
  %v5702 = vld [vmem:[%s5 + $0x1d0] sm:$0xff]
  %v5703 = vld [vmem:[%s5 + $0x1d8] sm:$0xff]
  %v5704 = vld [vmem:[%s5 + $0x1e0] sm:$0xff]
  %v5705 = vld [vmem:[%s5 + $0x1e8] sm:$0xff]
  %v5706 = vld [vmem:[%s5 + $0x1f0] sm:$0xff]
  %v5707 = vld [vmem:[%s5 + $0x1f8] sm:$0xff]
  %v5708 = vld [vmem:[%s6] sm:$0x3]
  %v5710 = vperm.slane %v5708, 0
  %v5711 = vperm.slane %v5708, 1
  %v5778 = vunpack.c.l.b16 %v5644
  %v5779 = vunpack.c.h.b16 %v5644
  %v5780 = vunpack.c.l.b16 %v5645
  %v5781 = vunpack.c.h.b16 %v5645
  %v5782 = vunpack.c.l.b16 %v5646
  %v5783 = vunpack.c.h.b16 %v5646
  %v5784 = vunpack.c.l.b16 %v5647
  %v5785 = vunpack.c.h.b16 %v5647
  %v5786 = vunpack.c.l.b16 %v5648
  %v5787 = vunpack.c.h.b16 %v5648
  %v5788 = vunpack.c.l.b16 %v5649
  %v5789 = vunpack.c.h.b16 %v5649
  %v5790 = vunpack.c.l.b16 %v5650
  %v5791 = vunpack.c.h.b16 %v5650
  %v5792 = vunpack.c.l.b16 %v5651
  %v5793 = vunpack.c.h.b16 %v5651
  %v5794 = vunpack.c.l.b16 %v5652
  %v5795 = vunpack.c.h.b16 %v5652
  %v5796 = vunpack.c.l.b16 %v5653
  %v5797 = vunpack.c.h.b16 %v5653
  %v5798 = vunpack.c.l.b16 %v5654
  %v5799 = vunpack.c.h.b16 %v5654
  %v5800 = vunpack.c.l.b16 %v5655
  %v5801 = vunpack.c.h.b16 %v5655
  %v5802 = vunpack.c.l.b16 %v5656
  %v5803 = vunpack.c.h.b16 %v5656
  %v5804 = vunpack.c.l.b16 %v5657
  %v5805 = vunpack.c.h.b16 %v5657
  %v5806 = vunpack.c.l.b16 %v5658
  %v5807 = vunpack.c.h.b16 %v5658
  %v5808 = vunpack.c.l.b16 %v5659
  %v5809 = vunpack.c.h.b16 %v5659
  %v5810 = vunpack.c.l.b16 %v5660
  %v5811 = vunpack.c.h.b16 %v5660
  %v5812 = vunpack.c.l.b16 %v5661
  %v5813 = vunpack.c.h.b16 %v5661
  %v5814 = vunpack.c.l.b16 %v5662
  %v5815 = vunpack.c.h.b16 %v5662
  %v5816 = vunpack.c.l.b16 %v5663
  %v5817 = vunpack.c.h.b16 %v5663
  %v5818 = vunpack.c.l.b16 %v5664
  %v5819 = vunpack.c.h.b16 %v5664
  %v5820 = vunpack.c.l.b16 %v5665
  %v5821 = vunpack.c.h.b16 %v5665
  %v5822 = vunpack.c.l.b16 %v5666
  %v5823 = vunpack.c.h.b16 %v5666
  %v5824 = vunpack.c.l.b16 %v5667
  %v5825 = vunpack.c.h.b16 %v5667
  %v5826 = vunpack.c.l.b16 %v5668
  %v5827 = vunpack.c.h.b16 %v5668
  %v5828 = vunpack.c.l.b16 %v5669
  %v5829 = vunpack.c.h.b16 %v5669
  %v5830 = vunpack.c.l.b16 %v5670
  %v5831 = vunpack.c.h.b16 %v5670
  %v5832 = vunpack.c.l.b16 %v5671
  %v5833 = vunpack.c.h.b16 %v5671
  %v5834 = vunpack.c.l.b16 %v5672
  %v5835 = vunpack.c.h.b16 %v5672
  %v5836 = vunpack.c.l.b16 %v5673
  %v5837 = vunpack.c.h.b16 %v5673
  %v5838 = vunpack.c.l.b16 %v5674
  %v5839 = vunpack.c.h.b16 %v5674
  %v5840 = vunpack.c.l.b16 %v5675
  %v5841 = vunpack.c.h.b16 %v5675
  %v5842 = vunpack.c.l.b16 %v5676
  %v5843 = vunpack.c.h.b16 %v5676
  %v5844 = vunpack.c.l.b16 %v5677
  %v5845 = vunpack.c.h.b16 %v5677
  %v5846 = vunpack.c.l.b16 %v5678
  %v5847 = vunpack.c.h.b16 %v5678
  %v5848 = vunpack.c.l.b16 %v5679
  %v5849 = vunpack.c.h.b16 %v5679
  %v5850 = vunpack.c.l.b16 %v5680
  %v5851 = vunpack.c.h.b16 %v5680
  %v5852 = vunpack.c.l.b16 %v5681
  %v5853 = vunpack.c.h.b16 %v5681
  %v5854 = vunpack.c.l.b16 %v5682
  %v5855 = vunpack.c.h.b16 %v5682
  %v5856 = vunpack.c.l.b16 %v5683
  %v5857 = vunpack.c.h.b16 %v5683
  %v5858 = vunpack.c.l.b16 %v5684
  %v5859 = vunpack.c.h.b16 %v5684
  %v5860 = vunpack.c.l.b16 %v5685
  %v5861 = vunpack.c.h.b16 %v5685
  %v5862 = vunpack.c.l.b16 %v5686
  %v5863 = vunpack.c.h.b16 %v5686
  %v5864 = vunpack.c.l.b16 %v5687
  %v5865 = vunpack.c.h.b16 %v5687
  %v5866 = vunpack.c.l.b16 %v5688
  %v5867 = vunpack.c.h.b16 %v5688
  %v5868 = vunpack.c.l.b16 %v5689
  %v5869 = vunpack.c.h.b16 %v5689
  %v5870 = vunpack.c.l.b16 %v5690
  %v5871 = vunpack.c.h.b16 %v5690
  %v5872 = vunpack.c.l.b16 %v5691
  %v5873 = vunpack.c.h.b16 %v5691
  %v5874 = vunpack.c.l.b16 %v5692
  %v5875 = vunpack.c.h.b16 %v5692
  %v5876 = vunpack.c.l.b16 %v5693
  %v5877 = vunpack.c.h.b16 %v5693
  %v5878 = vunpack.c.l.b16 %v5694
  %v5879 = vunpack.c.h.b16 %v5694
  %v5880 = vunpack.c.l.b16 %v5695
  %v5881 = vunpack.c.h.b16 %v5695
  %v5882 = vunpack.c.l.b16 %v5696
  %v5883 = vunpack.c.h.b16 %v5696
  %v5884 = vunpack.c.l.b16 %v5697
  %v5885 = vunpack.c.h.b16 %v5697
  %v5886 = vunpack.c.l.b16 %v5698
  %v5887 = vunpack.c.h.b16 %v5698
  %v5888 = vunpack.c.l.b16 %v5699
  %v5889 = vunpack.c.h.b16 %v5699
  %v5890 = vunpack.c.l.b16 %v5700
  %v5891 = vunpack.c.h.b16 %v5700
  %v5892 = vunpack.c.l.b16 %v5701
  %v5893 = vunpack.c.h.b16 %v5701
  %v5894 = vunpack.c.l.b16 %v5702
  %v5895 = vunpack.c.h.b16 %v5702
  %v5896 = vunpack.c.l.b16 %v5703
  %v5897 = vunpack.c.h.b16 %v5703
  %v5898 = vunpack.c.l.b16 %v5704
  %v5899 = vunpack.c.h.b16 %v5704
  %v5900 = vunpack.c.l.b16 %v5705
  %v5901 = vunpack.c.h.b16 %v5705
  %v5902 = vunpack.c.l.b16 %v5706
  %v5903 = vunpack.c.h.b16 %v5706
  %v5904 = vunpack.c.l.b16 %v5707
  %v5905 = vunpack.c.h.b16 %v5707
  %v5906 = vpack.c.b16 %v5780, %v5778
  %v5907 = vpack.c.b16 %v5781, %v5779
  %v5908 = vpack.c.b16 %v5784, %v5782
  %v5909 = vpack.c.b16 %v5785, %v5783
  %v5910 = vpack.c.b16 %v5788, %v5786
  %v5911 = vpack.c.b16 %v5789, %v5787
  %v5912 = vpack.c.b16 %v5792, %v5790
  %v5913 = vpack.c.b16 %v5793, %v5791
  %v5914 = vpack.c.b16 %v5796, %v5794
  %v5915 = vpack.c.b16 %v5797, %v5795
  %v5916 = vpack.c.b16 %v5800, %v5798
  %v5917 = vpack.c.b16 %v5801, %v5799
  %v5918 = vpack.c.b16 %v5804, %v5802
  %v5919 = vpack.c.b16 %v5805, %v5803
  %v5920 = vpack.c.b16 %v5808, %v5806
  %v5921 = vpack.c.b16 %v5809, %v5807
  %v5922 = vpack.c.b16 %v5812, %v5810
  %v5923 = vpack.c.b16 %v5813, %v5811
  %v5924 = vpack.c.b16 %v5816, %v5814
  %v5925 = vpack.c.b16 %v5817, %v5815
  %v5926 = vpack.c.b16 %v5820, %v5818
  %v5927 = vpack.c.b16 %v5821, %v5819
  %v5928 = vpack.c.b16 %v5824, %v5822
  %v5929 = vpack.c.b16 %v5825, %v5823
  %v5930 = vpack.c.b16 %v5828, %v5826
  %v5931 = vpack.c.b16 %v5829, %v5827
  %v5932 = vpack.c.b16 %v5832, %v5830
  %v5933 = vpack.c.b16 %v5833, %v5831
  %v5934 = vpack.c.b16 %v5836, %v5834
  %v5935 = vpack.c.b16 %v5837, %v5835
  %v5936 = vpack.c.b16 %v5840, %v5838
  %v5937 = vpack.c.b16 %v5841, %v5839
  %v5938 = vpack.c.b16 %v5844, %v5842
  %v5939 = vpack.c.b16 %v5845, %v5843
  %v5940 = vpack.c.b16 %v5848, %v5846
  %v5941 = vpack.c.b16 %v5849, %v5847
  %v5942 = vpack.c.b16 %v5852, %v5850
  %v5943 = vpack.c.b16 %v5853, %v5851
  %v5944 = vpack.c.b16 %v5856, %v5854
  %v5945 = vpack.c.b16 %v5857, %v5855
  %v5946 = vpack.c.b16 %v5860, %v5858
  %v5947 = vpack.c.b16 %v5861, %v5859
  %v5948 = vpack.c.b16 %v5864, %v5862
  %v5949 = vpack.c.b16 %v5865, %v5863
  %v5950 = vpack.c.b16 %v5868, %v5866
  %v5951 = vpack.c.b16 %v5869, %v5867
  %v5952 = vpack.c.b16 %v5872, %v5870
  %v5953 = vpack.c.b16 %v5873, %v5871
  %v5954 = vpack.c.b16 %v5876, %v5874
  %v5955 = vpack.c.b16 %v5877, %v5875
  %v5956 = vpack.c.b16 %v5880, %v5878
  %v5957 = vpack.c.b16 %v5881, %v5879
  %v5958 = vpack.c.b16 %v5884, %v5882
  %v5959 = vpack.c.b16 %v5885, %v5883
  %v5960 = vpack.c.b16 %v5888, %v5886
  %v5961 = vpack.c.b16 %v5889, %v5887
  %v5962 = vpack.c.b16 %v5892, %v5890
  %v5963 = vpack.c.b16 %v5893, %v5891
  %v5964 = vpack.c.b16 %v5896, %v5894
  %v5965 = vpack.c.b16 %v5897, %v5895
  %v5966 = vpack.c.b16 %v5900, %v5898
  %v5967 = vpack.c.b16 %v5901, %v5899
  %v5968 = vpack.c.b16 %v5904, %v5902
  %v5969 = vpack.c.b16 %v5905, %v5903
  %6034 = vmatpush.bf16.msra.mxu0 %v5920
  %6035 = vmatpush.bf16.msra.mxu0 %v5918
  %6036 = vmatpush.bf16.msra.mxu0 %v5916
  %6037 = vmatpush.bf16.msra.mxu0 %v5914
  %6038 = vmatpush.bf16.msra.mxu0 %v5912
  %6039 = vmatpush.bf16.msra.mxu0 %v5910
  %6040 = vmatpush.bf16.msra.mxu0 %v5908
  %6041 = vmatpush.bf16.msra.mxu0 %v5906
  %6042 = vmatmul.bf16.gmra.mxu0 %v5640
  %v6043 = vpop.f32.mrf.mxu0
  %v6044 = vadd.f32 %v5710, %v6043
  %v6045 = vpop.f32.mrf.mxu0
  %v6046 = vadd.f32 %v5710, %v6045
  %6047 = vdwg.mxu0
  %6048 = vmatpush.bf16.msra.mxu0 %v5936
  %6049 = vmatpush.bf16.msra.mxu0 %v5934
  %6050 = vmatpush.bf16.msra.mxu0 %v5932
  %6051 = vmatpush.bf16.msra.mxu0 %v5930
  %6052 = vmatpush.bf16.msra.mxu0 %v5928
  %6053 = vmatpush.bf16.msra.mxu0 %v5926
  %6054 = vmatpush.bf16.msra.mxu0 %v5924
  %6055 = vmatpush.bf16.msra.mxu0 %v5922
  %6056 = vmatmul.bf16.gmra.mxu0 %v5641
  %v6057 = vpop.f32.mrf.mxu0
  %v6058 = vadd.f32 %v6044, %v6057
  %v6059 = vpop.f32.mrf.mxu0
  %v6060 = vadd.f32 %v6046, %v6059
  %6061 = vdwg.mxu0
  %6062 = vmatpush.bf16.msra.mxu0 %v5952
  %6063 = vmatpush.bf16.msra.mxu0 %v5950
  %6064 = vmatpush.bf16.msra.mxu0 %v5948
  %6065 = vmatpush.bf16.msra.mxu0 %v5946
  %6066 = vmatpush.bf16.msra.mxu0 %v5944
  %6067 = vmatpush.bf16.msra.mxu0 %v5942
  %6068 = vmatpush.bf16.msra.mxu0 %v5940
  %6069 = vmatpush.bf16.msra.mxu0 %v5938
  %6070 = vmatmul.bf16.gmra.mxu0 %v5642
  %v6071 = vpop.f32.mrf.mxu0
  %v6072 = vadd.f32 %v6058, %v6071
  %v6073 = vpop.f32.mrf.mxu0
  %v6074 = vadd.f32 %v6060, %v6073
  %6075 = vdwg.mxu0
  %6076 = vmatpush.bf16.msra.mxu0 %v5968
  %6077 = vmatpush.bf16.msra.mxu0 %v5966
  %6078 = vmatpush.bf16.msra.mxu0 %v5964
  %6079 = vmatpush.bf16.msra.mxu0 %v5962
  %6080 = vmatpush.bf16.msra.mxu0 %v5960
  %6081 = vmatpush.bf16.msra.mxu0 %v5958
  %6082 = vmatpush.bf16.msra.mxu0 %v5956
  %6083 = vmatpush.bf16.msra.mxu0 %v5954
  %6084 = vmatmul.bf16.gmra.mxu0 %v5643
  %v6085 = vpop.f32.mrf.mxu0
  %v6086 = vadd.f32 %v6072, %v6085
  %v6087 = vpop.f32.mrf.mxu0
  %v6088 = vadd.f32 %v6074, %v6087
  %6089 = vdwg.mxu0
  %6090 = vmatpush.bf16.msra.mxu0 %v5921
  %6091 = vmatpush.bf16.msra.mxu0 %v5919
  %6092 = vmatpush.bf16.msra.mxu0 %v5917
  %6093 = vmatpush.bf16.msra.mxu0 %v5915
  %6094 = vmatpush.bf16.msra.mxu0 %v5913
  %6095 = vmatpush.bf16.msra.mxu0 %v5911
  %6096 = vmatpush.bf16.msra.mxu0 %v5909
  %6097 = vmatpush.bf16.msra.mxu0 %v5907
  %6098 = vmatmul.bf16.gmra.mxu0 %v5640
  %v6099 = vpop.f32.mrf.mxu0
  %v6100 = vadd.f32 %v5711, %v6099
  %v6101 = vpop.f32.mrf.mxu0
  %v6102 = vadd.f32 %v5711, %v6101
  %6103 = vdwg.mxu0
  %6104 = vmatpush.bf16.msra.mxu0 %v5937
  %6105 = vmatpush.bf16.msra.mxu0 %v5935
  %6106 = vmatpush.bf16.msra.mxu0 %v5933
  %6107 = vmatpush.bf16.msra.mxu0 %v5931
  %6108 = vmatpush.bf16.msra.mxu0 %v5929
  %6109 = vmatpush.bf16.msra.mxu0 %v5927
  %6110 = vmatpush.bf16.msra.mxu0 %v5925
  %6111 = vmatpush.bf16.msra.mxu0 %v5923
  %6112 = vmatmul.bf16.gmra.mxu0 %v5641
  %v6113 = vpop.f32.mrf.mxu0
  %v6114 = vadd.f32 %v6100, %v6113
  %v6115 = vpop.f32.mrf.mxu0
  %v6116 = vadd.f32 %v6102, %v6115
  %6117 = vdwg.mxu0
  %6118 = vmatpush.bf16.msra.mxu0 %v5953
  %6119 = vmatpush.bf16.msra.mxu0 %v5951
  %6120 = vmatpush.bf16.msra.mxu0 %v5949
  %6121 = vmatpush.bf16.msra.mxu0 %v5947
  %6122 = vmatpush.bf16.msra.mxu0 %v5945
  %6123 = vmatpush.bf16.msra.mxu0 %v5943
  %6124 = vmatpush.bf16.msra.mxu0 %v5941
  %6125 = vmatpush.bf16.msra.mxu0 %v5939
  %6126 = vmatmul.bf16.gmra.mxu0 %v5642
  %v6127 = vpop.f32.mrf.mxu0
  %v6128 = vadd.f32 %v6114, %v6127
  %v6129 = vpop.f32.mrf.mxu0
  %v6130 = vadd.f32 %v6116, %v6129
  %6131 = vdwg.mxu0
  %6132 = vmatpush.bf16.msra.mxu0 %v5969
  %6133 = vmatpush.bf16.msra.mxu0 %v5967
  %6134 = vmatpush.bf16.msra.mxu0 %v5965
  %6135 = vmatpush.bf16.msra.mxu0 %v5963
  %6136 = vmatpush.bf16.msra.mxu0 %v5961
  %6137 = vmatpush.bf16.msra.mxu0 %v5959
  %6138 = vmatpush.bf16.msra.mxu0 %v5957
  %6139 = vmatpush.bf16.msra.mxu0 %v5955
  %6140 = vmatmul.bf16.gmra.mxu0 %v5643
  %v6141 = vpop.f32.mrf.mxu0
  %v6142 = vadd.f32 %v6128, %v6141
  %v6143 = vpop.f32.mrf.mxu0
  %v6144 = vadd.f32 %v6130, %v6143
  %6145 = vdwg.mxu0
  %vm6146 = vcmp.gt.f32.partialorder %v6086, 0.0
  %vm6147 = vcmp.gt.f32.partialorder %v6142, 0.0
  %vm6148 = vcmp.gt.f32.partialorder %v6088, 0.0
  %vm6149 = vcmp.gt.f32.partialorder %v6144, 0.0
  %v6150 = vmul.f32 %v6086, 0.2
  %v6151 = vmul.f32 %v6142, 0.2
  %v6152 = vmul.f32 %v6088, 0.2
  %v6153 = vmul.f32 %v6144, 0.2
  %v6154 = vsel %vm6146, %v6086, %v6150
  %v6155 = vsel %vm6147, %v6142, %v6151
  %v6156 = vsel %vm6148, %v6088, %v6152
  %v6157 = vsel %vm6149, %v6144, %v6153
  %v6158 = vpack.c.bf16 %v6156, %v6154
  %v6159 = vpack.c.bf16 %v6157, %v6155
  %v6160 = vld [vmem:[%s7] sm:$0xf]
  %v6161 = vld [vmem:[%s7 + $0x4] sm:$0xf]
  %v6162 = vld [vmem:[%s7 + $0x8] sm:$0xf]
  %v6163 = vld [vmem:[%s7 + $0xc] sm:$0xf]
  %v6164 = vld [vmem:[%s7 + $0x10] sm:$0xf]
  %v6165 = vld [vmem:[%s7 + $0x14] sm:$0xf]
  %v6166 = vld [vmem:[%s7 + $0x18] sm:$0xf]
  %v6167 = vld [vmem:[%s7 + $0x1c] sm:$0xf]
  %v6168 = vld [vmem:[%s7 + $0x20] sm:$0xf]
  %v6169 = vld [vmem:[%s7 + $0x24] sm:$0xf]
  %v6170 = vld [vmem:[%s7 + $0x28] sm:$0xf]
  %v6171 = vld [vmem:[%s7 + $0x2c] sm:$0xf]
  %v6172 = vld [vmem:[%s7 + $0x30] sm:$0xf]
  %v6173 = vld [vmem:[%s7 + $0x34] sm:$0xf]
  %v6174 = vld [vmem:[%s7 + $0x38] sm:$0xf]
  %v6175 = vld [vmem:[%s7 + $0x3c] sm:$0xf]
  %v6176 = vld [vmem:[%s7 + $0x40] sm:$0xf]
  %v6177 = vld [vmem:[%s7 + $0x44] sm:$0xf]
  %v6178 = vld [vmem:[%s7 + $0x48] sm:$0xf]
  %v6179 = vld [vmem:[%s7 + $0x4c] sm:$0xf]
  %v6180 = vld [vmem:[%s7 + $0x50] sm:$0xf]
  %v6181 = vld [vmem:[%s7 + $0x54] sm:$0xf]
  %v6182 = vld [vmem:[%s7 + $0x58] sm:$0xf]
  %v6183 = vld [vmem:[%s7 + $0x5c] sm:$0xf]
  %v6184 = vld [vmem:[%s7 + $0x60] sm:$0xf]
  %v6185 = vld [vmem:[%s7 + $0x64] sm:$0xf]
  %v6186 = vld [vmem:[%s7 + $0x68] sm:$0xf]
  %v6187 = vld [vmem:[%s7 + $0x6c] sm:$0xf]
  %v6188 = vld [vmem:[%s7 + $0x70] sm:$0xf]
  %v6189 = vld [vmem:[%s7 + $0x74] sm:$0xf]
  %v6190 = vld [vmem:[%s7 + $0x78] sm:$0xf]
  %v6191 = vld [vmem:[%s7 + $0x7c] sm:$0xf]
  %v6192 = vld [vmem:[%s8] sm:$0x1]
  %v6194 = vperm.slane %v6192, 0
  %v6228 = vunpack.c.l.b16 %v6160
  %v6229 = vunpack.c.l.b16 %v6161
  %v6230 = vunpack.c.l.b16 %v6162
  %v6231 = vunpack.c.l.b16 %v6163
  %v6232 = vunpack.c.l.b16 %v6164
  %v6233 = vunpack.c.l.b16 %v6165
  %v6234 = vunpack.c.l.b16 %v6166
  %v6235 = vunpack.c.l.b16 %v6167
  %v6236 = vunpack.c.l.b16 %v6168
  %v6237 = vunpack.c.l.b16 %v6169
  %v6238 = vunpack.c.l.b16 %v6170
  %v6239 = vunpack.c.l.b16 %v6171
  %v6240 = vunpack.c.l.b16 %v6172
  %v6241 = vunpack.c.l.b16 %v6173
  %v6242 = vunpack.c.l.b16 %v6174
  %v6243 = vunpack.c.l.b16 %v6175
  %v6244 = vunpack.c.l.b16 %v6176
  %v6245 = vunpack.c.l.b16 %v6177
  %v6246 = vunpack.c.l.b16 %v6178
  %v6247 = vunpack.c.l.b16 %v6179
  %v6248 = vunpack.c.l.b16 %v6180
  %v6249 = vunpack.c.l.b16 %v6181
  %v6250 = vunpack.c.l.b16 %v6182
  %v6251 = vunpack.c.l.b16 %v6183
  %v6252 = vunpack.c.l.b16 %v6184
  %v6253 = vunpack.c.l.b16 %v6185
  %v6254 = vunpack.c.l.b16 %v6186
  %v6255 = vunpack.c.l.b16 %v6187
  %v6256 = vunpack.c.l.b16 %v6188
  %v6257 = vunpack.c.l.b16 %v6189
  %v6258 = vunpack.c.l.b16 %v6190
  %v6259 = vunpack.c.l.b16 %v6191
  %v6260 = vpack.c.b16 %v6229, %v6228
  %v6261 = vpack.c.b16 %v6231, %v6230
  %v6262 = vpack.c.b16 %v6233, %v6232
  %v6263 = vpack.c.b16 %v6235, %v6234
  %v6264 = vpack.c.b16 %v6237, %v6236
  %v6265 = vpack.c.b16 %v6239, %v6238
  %v6266 = vpack.c.b16 %v6241, %v6240
  %v6267 = vpack.c.b16 %v6243, %v6242
  %v6268 = vpack.c.b16 %v6245, %v6244
  %v6269 = vpack.c.b16 %v6247, %v6246
  %v6270 = vpack.c.b16 %v6249, %v6248
  %v6271 = vpack.c.b16 %v6251, %v6250
  %v6272 = vpack.c.b16 %v6253, %v6252
  %v6273 = vpack.c.b16 %v6255, %v6254
  %v6274 = vpack.c.b16 %v6257, %v6256
  %v6275 = vpack.c.b16 %v6259, %v6258
  %6292 = vmatpush.bf16.msra.mxu0 %v6267
  %6293 = vmatpush.bf16.msra.mxu0 %v6266
  %6294 = vmatpush.bf16.msra.mxu0 %v6265
  %6295 = vmatpush.bf16.msra.mxu0 %v6264
  %6296 = vmatpush.bf16.msra.mxu0 %v6263
  %6297 = vmatpush.bf16.msra.mxu0 %v6262
  %6298 = vmatpush.bf16.msra.mxu0 %v6261
  %6299 = vmatpush.bf16.msra.mxu0 %v6260
  %6300 = vmatmul.bf16.gmra.mxu0 %v6158
  %v6301 = vpop.f32.mrf.mxu0
  %v6302 = vadd.f32 %v6194, %v6301
  %v6303 = vpop.f32.mrf.mxu0
  %v6304 = vadd.f32 %v6194, %v6303
  %6305 = vdwg.mxu0
  %6306 = vmatpush.bf16.msra.mxu0 %v6275
  %6307 = vmatpush.bf16.msra.mxu0 %v6274
  %6308 = vmatpush.bf16.msra.mxu0 %v6273
  %6309 = vmatpush.bf16.msra.mxu0 %v6272
  %6310 = vmatpush.bf16.msra.mxu0 %v6271
  %6311 = vmatpush.bf16.msra.mxu0 %v6270
  %6312 = vmatpush.bf16.msra.mxu0 %v6269
  %6313 = vmatpush.bf16.msra.mxu0 %v6268
  %6314 = vmatmul.bf16.gmra.mxu0 %v6159
  %v6315 = vpop.f32.mrf.mxu0
  %v6316 = vadd.f32 %v6302, %v6315
  %v6317 = vpop.f32.mrf.mxu0
  %v6318 = vadd.f32 %v6304, %v6317
  %6319 = vdwg.mxu0
  %v6320 = vpack.c.bf16 %v6316, %v6316
  %v6321 = vpack.c.bf16 %v6318, %v6318
  %6322 = vst [vmem:[%s9] sm:$0xf] %v6320
  %6323 = vst [vmem:[%s9 + $0x4] sm:$0xf] %v6321
  // Predicated region
  $region38: #{discriminator_forward.1} parent=0 // pred_check
    _
  $region39: #{discriminator_forward.1} parent=0 // pred_check_branch
    %6325 = sbr.rel (0) target = $region41
  $region40: #{discriminator_forward.1} parent=0 // pred_region
    _
  $region41: #{discriminator_forward.1} parent=0 // pred_fallthru
    _
  // Predicated region
  $region42: #{discriminator_forward.1} parent=0 // pred_check
    _
  $region43: #{discriminator_forward.1} parent=0 // pred_check_branch
    %6327 = sbr.rel (0) target = $region45
  $region44: #{discriminator_forward.1} parent=0 // pred_region
    _
  $region45: #{discriminator_forward.1} parent=0 // pred_fallthru
    _

</llo_original>
